<compile_context>
chip_gen: v5e
topology: v5e:2x2
jax: 0.10.0
libtpu: 0.0.40
codegen_flags: <defaults>
</compile_context>

<pallas_src>
import functools
import math

import jax
import jax.numpy as jnp
from jax import lax
from jax.experimental import pallas as pl
from jax.experimental.pallas import tpu as pltpu

KERNELS = (5, 7, 9, 11, 25, 55)
STRIDE = 8
KW = max(KERNELS)              # unified im2col window width (55)
PAD = KW // 2                  # 27
N_FILT = 10
FEAT = N_FILT * len(KERNELS)   # 60 GRU input features
LANE = 128
SUBLANE = 8


def _round_up(x, m):
    return ((x + m - 1) // m) * m


def _speech_gru_kernel(patch_ref, wfold_ref, bfold_ref, whh_ref, bhh_ref,
                       w1_ref, b1_ref, w2_ref, b2_ref,
                       out_ref, gi_ref, *, T, BP, HP):
    # ---- Hoisted input projection: conv bank + W_ih for ALL timesteps in one
    #      (T*BP, KWP) x (KWP, 3*HP) MXU matmul (off the serial critical path).
    gi_ref[...] = (jnp.dot(patch_ref[...], wfold_ref[...],
                           preferred_element_type=jnp.float32)
                   + bfold_ref[...])

    whh = whh_ref[...]                                    # (HP, 3*HP)
    bhh = jnp.broadcast_to(bhh_ref[...], (BP, 3 * HP))    # hoisted broadcast

    # ---- Serial GRU recurrence (PyTorch gate order: r, z, n).  Hidden state
    #      is one (8, 128) f32 vreg carried through the loop; each gate slice
    #      below is a full 128-lane-aligned view (HP = 128-padded).
    def step(t, h):
        row = pl.multiple_of(t * BP, BP)
        gi = gi_ref[pl.ds(row, BP), :]                    # (BP, 3*HP)
        gh = jnp.dot(h, whh, preferred_element_type=jnp.float32) + bhh
        r = jax.nn.sigmoid(gi[:, :HP] + gh[:, :HP])
        z = jax.nn.sigmoid(gi[:, HP:2 * HP] + gh[:, HP:2 * HP])
        n = jnp.tanh(gi[:, 2 * HP:] + r * gh[:, 2 * HP:])
        return (1.0 - z) * n + z * h

    h = lax.fori_loop(0, T, step, jnp.zeros((BP, HP), jnp.float32),
                      unroll=bool(T <= 128))

    # ---- Decoder Linear->ReLU->(Dropout: identity at inference)->Linear on
    #      the last hidden state; lane-dense (BP, 128) output store.
    hid = jax.nn.relu(jnp.dot(h, w1_ref[...],
                              preferred_element_type=jnp.float32) + b1_ref[...])
    out_ref[...] = jnp.dot(hid, w2_ref[...],
                           preferred_element_type=jnp.float32) + b2_ref[...]


def pack_params(params, hidden_size, output_size):
    """Fold the conv bank into the GRU input projection and zero-pad all
    weight slabs to MXU/lane friendly shapes."""
    H = hidden_size
    HP = _round_up(H, LANE)                 # per-gate padded width
    D1 = hidden_size // 2
    D1P = _round_up(D1, LANE)
    OUTP = _round_up(output_size, LANE)
    KWP = _round_up(KW, LANE)
    hi = lax.Precision.HIGHEST

    # Pack the 6 conv filters into one (KW, FEAT) slab, each centered in the
    # 55-wide window (offset PAD - k//2).
    wconv = jnp.zeros((KW, FEAT), jnp.float32)
    for g, k in enumerate(KERNELS):
        off = PAD - k // 2
        wconv = wconv.at[off:off + k, g * N_FILT:(g + 1) * N_FILT].set(
            params["conv_ws"][g][:, 0, :].T)
    bconv = jnp.concatenate(params["conv_bs"]).reshape(1, FEAT)

    # Fold conv bank into the GRU input projection (valid: no nonlinearity
    # between the convs and the GRU input matmul).
    WihT = params["Wih"].T                                        # (FEAT, 3H)
    wfold = jnp.dot(wconv, WihT, precision=hi)                    # (KW, 3H)
    bfold = jnp.dot(bconv, WihT, precision=hi) + params["bih"].reshape(1, -1)
    WhhT = params["Whh"].T                                        # (H, 3H)
    bhh = params["bhh"].reshape(1, -1)

    def pad_gates(w, rows, rows_pad):
        out = jnp.zeros((rows_pad, 3 * HP), jnp.float32)
        for g in range(3):
            out = out.at[:rows, g * HP:g * HP + H].set(w[:, g * H:(g + 1) * H])
        return out

    packed = {
        "wfold": pad_gates(wfold, KW, KWP),
        "bfold": pad_gates(bfold, 1, 1),
        "whh": pad_gates(WhhT, H, HP),
        "bhh": pad_gates(bhh, 1, 1),
        "w1": jnp.zeros((HP, D1P), jnp.float32).at[:H, :D1].set(params["W1"].T),
        "b1": jnp.zeros((1, D1P), jnp.float32).at[:, :D1].set(params["b1"]),
        "w2": jnp.zeros((D1P, OUTP), jnp.float32).at[:D1, :output_size].set(
            params["W2"].T),
        "b2": jnp.zeros((1, OUTP), jnp.float32).at[:, :output_size].set(
            params["b2"]),
    }
    dims = {"HP": HP, "D1P": D1P, "OUTP": OUTP, "KWP": KWP}
    return packed, dims


def speech_gru_forward(x, packed, dims, hidden_size, output_size):
    """x: (B, L) float32 -> preds: (B, output_size) float32."""
    B, L = x.shape
    T = (L - 1) // STRIDE + 1
    BP = _round_up(B, SUBLANE)
    HP, OUTP, KWP = dims["HP"], dims["OUTP"], dims["KWP"]

    # im2col glue: strided 55-wide windows centered at t*STRIDE (all conv
    # paddings map into one window since every kernel uses padding = k//2).
    # TODO(synk): for very long signals, stream timestep chunks of patches from
    # HBM with manual double-buffering instead of materializing the full im2col.
    x_pad = jnp.pad(x, ((0, 0), (PAD, PAD)))
    idx = jnp.arange(T)[:, None] * STRIDE + jnp.arange(KW)[None, :]   # (T, KW)
    patches = jnp.transpose(x_pad[:, idx], (1, 0, 2))                 # (T, B, KW)
    patches = jnp.pad(patches, ((0, 0), (0, BP - B), (0, KWP - KW)))
    patches = patches.reshape(T * BP, KWP)                            # time-major

    kern = functools.partial(_speech_gru_kernel, T=T, BP=BP, HP=HP)

    out = pl.pallas_call(
        kern,
        out_shape=jax.ShapeDtypeStruct((BP, OUTP), jnp.float32),
        scratch_shapes=[pltpu.VMEM((T * BP, 3 * HP), jnp.float32)],   # gi_all
    )(patches, packed["wfold"], packed["bfold"], packed["whh"], packed["bhh"],
      packed["w1"], packed["b1"], packed["w2"], packed["b2"])

    return out[:B, :output_size]


def init_params(key, hidden_size, output_size):
    H = hidden_size
    keys = jax.random.split(key, 20)
    ki = iter(range(20))

    def unif(k, shape, bound):
        return jax.random.uniform(k, shape, jnp.float32, -bound, bound)

    conv_ws, conv_bs = [], []
    for k in KERNELS:
        bound = 1.0 / math.sqrt(k)
        conv_ws.append(unif(keys[next(ki)], (N_FILT, 1, k), bound))
        conv_bs.append(unif(keys[next(ki)], (N_FILT,), bound))

    bound = 1.0 / math.sqrt(H)
    Wih = unif(keys[next(ki)], (3 * H, FEAT), bound)
    Whh = unif(keys[next(ki)], (3 * H, H), bound)
    bih = unif(keys[next(ki)], (3 * H,), bound)
    bhh = unif(keys[next(ki)], (3 * H,), bound)

    W1 = unif(keys[next(ki)], (H // 2, H), 1.0 / math.sqrt(H))
    b1 = unif(keys[next(ki)], (H // 2,), 1.0 / math.sqrt(H))
    W2 = unif(keys[next(ki)], (output_size, H // 2), 1.0 / math.sqrt(H // 2))
    b2 = unif(keys[next(ki)], (output_size,), 1.0 / math.sqrt(H // 2))

    return {
        "conv_ws": conv_ws, "conv_bs": conv_bs,
        "Wih": Wih, "Whh": Whh, "bih": bih, "bhh": bhh,
        "W1": W1, "b1": b1, "W2": W2, "b2": b2,
    }


def reference_forward(x, params, hidden_size):
    """Pure-JAX reference following the PyTorch module step by step."""
    H = hidden_size
    B = x.shape[0]
    feats = []
    for g, k in enumerate(KERNELS):
        y = lax.conv_general_dilated(
            x[:, None, :], params["conv_ws"][g], window_strides=(STRIDE,),
            padding=[(k // 2, k // 2)], dimension_numbers=("NCH", "OIH", "NCH"),
            precision=lax.Precision.HIGHEST)
        feats.append(y + params["conv_bs"][g][None, :, None])
    f = jnp.concatenate(feats, axis=1)           # (B, 60, T)
    f = jnp.transpose(f, (2, 0, 1))              # (T, B, 60)

    Wih, Whh, bih, bhh = params["Wih"], params["Whh"], params["bih"], params["bhh"]

    def step(h, xt):
        gi = xt @ Wih.T + bih
        gh = h @ Whh.T + bhh
        r = jax.nn.sigmoid(gi[:, :H] + gh[:, :H])
        z = jax.nn.sigmoid(gi[:, H:2 * H] + gh[:, H:2 * H])
        n = jnp.tanh(gi[:, 2 * H:] + r * gh[:, 2 * H:])
        return (1.0 - z) * n + z * h, None

    h, _ = lax.scan(step, jnp.zeros((B, H), jnp.float32), f)
    hid = jax.nn.relu(h @ params["W1"].T + params["b1"])
    return hid @ params["W2"].T + params["b2"]


if __name__ == "__main__":
    B, L = 2, 128                 # batch, raw signal length
    HIDDEN, OUT = 32, 8           # hidden_size, output_size

    root = jax.random.PRNGKey(0)
    k_x, k_p = jax.random.split(root)
    x = jax.random.normal(k_x, (B, L), jnp.float32)
    params = init_params(k_p, HIDDEN, OUT)
    packed, dims = pack_params(params, HIDDEN, OUT)

    preds = speech_gru_forward(x, packed, dims, HIDDEN, OUT)
    preds = jax.block_until_ready(preds)

    ref = jax.block_until_ready(reference_forward(x, params, HIDDEN))

    assert preds.shape == (B, OUT), preds.shape
    assert bool(jnp.allclose(preds, ref, atol=3e-2, rtol=3e-2)), (
        f"max abs diff {float(jnp.max(jnp.abs(preds - ref)))}")
    print("KERNEL_OK")
</pallas_src>

<mosaic_0001>
module attributes {stable_mosaic.version = 11 : i64} {
  func.func @_speech_gru_kernel(%arg0: memref<128x128xf32, #tpu.memory_space<vmem>>, %arg1: memref<128x384xf32, #tpu.memory_space<vmem>>, %arg2: memref<1x384xf32, #tpu.memory_space<vmem>>, %arg3: memref<128x384xf32, #tpu.memory_space<vmem>>, %arg4: memref<1x384xf32, #tpu.memory_space<vmem>>, %arg5: memref<128x128xf32, #tpu.memory_space<vmem>>, %arg6: memref<1x128xf32, #tpu.memory_space<vmem>>, %arg7: memref<128x128xf32, #tpu.memory_space<vmem>>, %arg8: memref<1x128xf32, #tpu.memory_space<vmem>>, %arg9: memref<8x128xf32, #tpu.memory_space<vmem>>, %arg10: memref<128x384xf32, #tpu.memory_space<vmem>>) attributes {dimension_semantics = [], scalar_prefetch = 0 : i64, scratch_operands = 1 : i64, tpu.core_type = #tpu.core_type<tc>} {
    %c0 = arith.constant 0 : index
    %c0_0 = arith.constant 0 : index
    %0 = vector.load %arg0[%c0, %c0_0] : memref<128x128xf32, #tpu.memory_space<vmem>>, vector<128x128xf32>
    %c0_1 = arith.constant 0 : index
    %c0_2 = arith.constant 0 : index
    %1 = vector.load %arg1[%c0_1, %c0_2] : memref<128x384xf32, #tpu.memory_space<vmem>>, vector<128x384xf32>
    %cst = arith.constant dense<0.000000e+00> : vector<128x384xf32>
    %2 = tpu.matmul %0, %1, %cst {dimension_numbers = #tpu.dot_dimension_numbers<[1], [0], [0], [1], [0, 0, 1, 1], [], []>} : vector<128x128xf32>, vector<128x384xf32>, vector<128x384xf32> -> vector<128x384xf32>
    %c0_3 = arith.constant 0 : index
    %c0_4 = arith.constant 0 : index
    %3 = vector.load %arg2[%c0_3, %c0_4] : memref<1x384xf32, #tpu.memory_space<vmem>>, vector<1x384xf32>
    %4 = vector.broadcast %3 : vector<1x384xf32> to vector<128x384xf32>
    %5 = arith.addf %2, %4 : vector<128x384xf32>
    %c0_5 = arith.constant 0 : index
    %c0_6 = arith.constant 0 : index
    %6 = vector.load %arg10[%c0_5, %c0_6] : memref<128x384xf32, #tpu.memory_space<vmem>>, vector<128x384xf32>
    tpu.vector_store %arg10[%c0_5, %c0_6], %5 {strides = array<i32>} : memref<128x384xf32, #tpu.memory_space<vmem>>, vector<128x384xf32>,
    %c0_7 = arith.constant 0 : index
    %c0_8 = arith.constant 0 : index
    %7 = vector.load %arg3[%c0_7, %c0_8] : memref<128x384xf32, #tpu.memory_space<vmem>>, vector<128x384xf32>
    %c0_9 = arith.constant 0 : index
    %c0_10 = arith.constant 0 : index
    %8 = vector.load %arg4[%c0_9, %c0_10] : memref<1x384xf32, #tpu.memory_space<vmem>>, vector<1x384xf32>
    %9 = vector.shape_cast %8 : vector<1x384xf32> to vector<1x384xf32>
    %10 = vector.broadcast %9 : vector<1x384xf32> to vector<8x384xf32>
    %cst_11 = arith.constant 0.000000e+00 : f32
    %11 = vector.broadcast %cst_11 : f32 to vector<8x128xf32>
    %c0_i32 = arith.constant 0 : i32
    %c8_i32 = arith.constant 8 : i32
    %12 = arith.muli %c0_i32, %c8_i32 : i32
    %13 = tpu.assume_multiple %12, 8 : i32
    %14 = arith.index_cast %13 : i32 to index
    %c0_12 = arith.constant 0 : index
    %15 = vector.load %arg10[%14, %c0_12] : memref<128x384xf32, #tpu.memory_space<vmem>>, vector<8x384xf32>
    %cst_13 = arith.constant dense<0.000000e+00> : vector<8x384xf32>
    %16 = tpu.matmul %11, %7, %cst_13 {dimension_numbers = #tpu.dot_dimension_numbers<[1], [0], [0], [1], [0, 0, 1, 1], [], []>} : vector<8x128xf32>, vector<128x384xf32>, vector<8x384xf32> -> vector<8x384xf32>
    %17 = arith.addf %16, %10 : vector<8x384xf32>
    %18 = vector.extract_strided_slice %15 {offsets = [0, 0], sizes = [8, 128], strides = [1, 1]} : vector<8x384xf32> to vector<8x128xf32>
    %19 = vector.extract_strided_slice %17 {offsets = [0, 0], sizes = [8, 128], strides = [1, 1]} : vector<8x384xf32> to vector<8x128xf32>
    %20 = arith.addf %18, %19 : vector<8x128xf32>
    %21 = arith.negf %20 : vector<8x128xf32>
    %22 = math.exp %21 : vector<8x128xf32>
    %cst_14 = arith.constant 1.000000e+00 : f32
    %23 = vector.broadcast %cst_14 : f32 to vector<8x128xf32>
    %24 = arith.addf %23, %22 : vector<8x128xf32>
    %25 = arith.divf %23, %24 : vector<8x128xf32>
    %26 = vector.extract_strided_slice %15 {offsets = [0, 128], sizes = [8, 128], strides = [1, 1]} : vector<8x384xf32> to vector<8x128xf32>
    %27 = vector.extract_strided_slice %17 {offsets = [0, 128], sizes = [8, 128], strides = [1, 1]} : vector<8x384xf32> to vector<8x128xf32>
    %28 = arith.addf %26, %27 : vector<8x128xf32>
    %29 = arith.negf %28 : vector<8x128xf32>
    %30 = math.exp %29 : vector<8x128xf32>
    %cst_15 = arith.constant 1.000000e+00 : f32
    %31 = vector.broadcast %cst_15 : f32 to vector<8x128xf32>
    %32 = arith.addf %31, %30 : vector<8x128xf32>
    %33 = arith.divf %31, %32 : vector<8x128xf32>
    %34 = vector.extract_strided_slice %15 {offsets = [0, 256], sizes = [8, 128], strides = [1, 1]} : vector<8x384xf32> to vector<8x128xf32>
    %35 = vector.extract_strided_slice %17 {offsets = [0, 256], sizes = [8, 128], strides = [1, 1]} : vector<8x384xf32> to vector<8x128xf32>
    %36 = arith.mulf %25, %35 : vector<8x128xf32>
    %37 = arith.addf %34, %36 : vector<8x128xf32>
    %38 = math.tanh %37 : vector<8x128xf32>
    %cst_16 = arith.constant 1.000000e+00 : f32
    %39 = vector.broadcast %cst_16 : f32 to vector<8x128xf32>
    %40 = arith.subf %39, %33 : vector<8x128xf32>
    %41 = arith.mulf %40, %38 : vector<8x128xf32>
    %42 = arith.mulf %33, %11 : vector<8x128xf32>
    %43 = arith.addf %41, %42 : vector<8x128xf32>
    %c1_i32 = arith.constant 1 : i32
    %c8_i32_17 = arith.constant 8 : i32
    %44 = arith.muli %c1_i32, %c8_i32_17 : i32
    %45 = tpu.assume_multiple %44, 8 : i32
    %46 = arith.index_cast %45 : i32 to index
    %c0_18 = arith.constant 0 : index
    %47 = vector.load %arg10[%46, %c0_18] : memref<128x384xf32, #tpu.memory_space<vmem>>, vector<8x384xf32>
    %cst_19 = arith.constant dense<0.000000e+00> : vector<8x384xf32>
    %48 = tpu.matmul %43, %7, %cst_19 {dimension_numbers = #tpu.dot_dimension_numbers<[1], [0], [0], [1], [0, 0, 1, 1], [], []>} : vector<8x128xf32>, vector<128x384xf32>, vector<8x384xf32> -> vector<8x384xf32>
    %49 = arith.addf %48, %10 : vector<8x384xf32>
    %50 = vector.extract_strided_slice %47 {offsets = [0, 0], sizes = [8, 128], strides = [1, 1]} : vector<8x384xf32> to vector<8x128xf32>
    %51 = vector.extract_strided_slice %49 {offsets = [0, 0], sizes = [8, 128], strides = [1, 1]} : vector<8x384xf32> to vector<8x128xf32>
    %52 = arith.addf %50, %51 : vector<8x128xf32>
    %53 = arith.negf %52 : vector<8x128xf32>
    %54 = math.exp %53 : vector<8x128xf32>
    %cst_20 = arith.constant 1.000000e+00 : f32
    %55 = vector.broadcast %cst_20 : f32 to vector<8x128xf32>
    %56 = arith.addf %55, %54 : vector<8x128xf32>
    %57 = arith.divf %55, %56 : vector<8x128xf32>
    %58 = vector.extract_strided_slice %47 {offsets = [0, 128], sizes = [8, 128], strides = [1, 1]} : vector<8x384xf32> to vector<8x128xf32>
    %59 = vector.extract_strided_slice %49 {offsets = [0, 128], sizes = [8, 128], strides = [1, 1]} : vector<8x384xf32> to vector<8x128xf32>
    %60 = arith.addf %58, %59 : vector<8x128xf32>
    %61 = arith.negf %60 : vector<8x128xf32>
    %62 = math.exp %61 : vector<8x128xf32>
    %cst_21 = arith.constant 1.000000e+00 : f32
    %63 = vector.broadcast %cst_21 : f32 to vector<8x128xf32>
    %64 = arith.addf %63, %62 : vector<8x128xf32>
    %65 = arith.divf %63, %64 : vector<8x128xf32>
    %66 = vector.extract_strided_slice %47 {offsets = [0, 256], sizes = [8, 128], strides = [1, 1]} : vector<8x384xf32> to vector<8x128xf32>
    %67 = vector.extract_strided_slice %49 {offsets = [0, 256], sizes = [8, 128], strides = [1, 1]} : vector<8x384xf32> to vector<8x128xf32>
    %68 = arith.mulf %57, %67 : vector<8x128xf32>
    %69 = arith.addf %66, %68 : vector<8x128xf32>
    %70 = math.tanh %69 : vector<8x128xf32>
    %cst_22 = arith.constant 1.000000e+00 : f32
    %71 = vector.broadcast %cst_22 : f32 to vector<8x128xf32>
    %72 = arith.subf %71, %65 : vector<8x128xf32>
    %73 = arith.mulf %72, %70 : vector<8x128xf32>
    %74 = arith.mulf %65, %43 : vector<8x128xf32>
    %75 = arith.addf %73, %74 : vector<8x128xf32>
    %c2_i32 = arith.constant 2 : i32
    %c8_i32_23 = arith.constant 8 : i32
    %76 = arith.muli %c2_i32, %c8_i32_23 : i32
    %77 = tpu.assume_multiple %76, 8 : i32
    %78 = arith.index_cast %77 : i32 to index
    %c0_24 = arith.constant 0 : index
    %79 = vector.load %arg10[%78, %c0_24] : memref<128x384xf32, #tpu.memory_space<vmem>>, vector<8x384xf32>
    %cst_25 = arith.constant dense<0.000000e+00> : vector<8x384xf32>
    %80 = tpu.matmul %75, %7, %cst_25 {dimension_numbers = #tpu.dot_dimension_numbers<[1], [0], [0], [1], [0, 0, 1, 1], [], []>} : vector<8x128xf32>, vector<128x384xf32>, vector<8x384xf32> -> vector<8x384xf32>
    %81 = arith.addf %80, %10 : vector<8x384xf32>
    %82 = vector.extract_strided_slice %79 {offsets = [0, 0], sizes = [8, 128], strides = [1, 1]} : vector<8x384xf32> to vector<8x128xf32>
    %83 = vector.extract_strided_slice %81 {offsets = [0, 0], sizes = [8, 128], strides = [1, 1]} : vector<8x384xf32> to vector<8x128xf32>
    %84 = arith.addf %82, %83 : vector<8x128xf32>
    %85 = arith.negf %84 : vector<8x128xf32>
    %86 = math.exp %85 : vector<8x128xf32>
    %cst_26 = arith.constant 1.000000e+00 : f32
    %87 = vector.broadcast %cst_26 : f32 to vector<8x128xf32>
    %88 = arith.addf %87, %86 : vector<8x128xf32>
    %89 = arith.divf %87, %88 : vector<8x128xf32>
    %90 = vector.extract_strided_slice %79 {offsets = [0, 128], sizes = [8, 128], strides = [1, 1]} : vector<8x384xf32> to vector<8x128xf32>
    %91 = vector.extract_strided_slice %81 {offsets = [0, 128], sizes = [8, 128], strides = [1, 1]} : vector<8x384xf32> to vector<8x128xf32>
    %92 = arith.addf %90, %91 : vector<8x128xf32>
    %93 = arith.negf %92 : vector<8x128xf32>
    %94 = math.exp %93 : vector<8x128xf32>
    %cst_27 = arith.constant 1.000000e+00 : f32
    %95 = vector.broadcast %cst_27 : f32 to vector<8x128xf32>
    %96 = arith.addf %95, %94 : vector<8x128xf32>
    %97 = arith.divf %95, %96 : vector<8x128xf32>
    %98 = vector.extract_strided_slice %79 {offsets = [0, 256], sizes = [8, 128], strides = [1, 1]} : vector<8x384xf32> to vector<8x128xf32>
    %99 = vector.extract_strided_slice %81 {offsets = [0, 256], sizes = [8, 128], strides = [1, 1]} : vector<8x384xf32> to vector<8x128xf32>
    %100 = arith.mulf %89, %99 : vector<8x128xf32>
    %101 = arith.addf %98, %100 : vector<8x128xf32>
    %102 = math.tanh %101 : vector<8x128xf32>
    %cst_28 = arith.constant 1.000000e+00 : f32
    %103 = vector.broadcast %cst_28 : f32 to vector<8x128xf32>
    %104 = arith.subf %103, %97 : vector<8x128xf32>
    %105 = arith.mulf %104, %102 : vector<8x128xf32>
    %106 = arith.mulf %97, %75 : vector<8x128xf32>
    %107 = arith.addf %105, %106 : vector<8x128xf32>
    %c3_i32 = arith.constant 3 : i32
    %c8_i32_29 = arith.constant 8 : i32
    %108 = arith.muli %c3_i32, %c8_i32_29 : i32
    %109 = tpu.assume_multiple %108, 8 : i32
    %110 = arith.index_cast %109 : i32 to index
    %c0_30 = arith.constant 0 : index
    %111 = vector.load %arg10[%110, %c0_30] : memref<128x384xf32, #tpu.memory_space<vmem>>, vector<8x384xf32>
    %cst_31 = arith.constant dense<0.000000e+00> : vector<8x384xf32>
    %112 = tpu.matmul %107, %7, %cst_31 {dimension_numbers = #tpu.dot_dimension_numbers<[1], [0], [0], [1], [0, 0, 1, 1], [], []>} : vector<8x128xf32>, vector<128x384xf32>, vector<8x384xf32> -> vector<8x384xf32>
    %113 = arith.addf %112, %10 : vector<8x384xf32>
    %114 = vector.extract_strided_slice %111 {offsets = [0, 0], sizes = [8, 128], strides = [1, 1]} : vector<8x384xf32> to vector<8x128xf32>
    %115 = vector.extract_strided_slice %113 {offsets = [0, 0], sizes = [8, 128], strides = [1, 1]} : vector<8x384xf32> to vector<8x128xf32>
    %116 = arith.addf %114, %115 : vector<8x128xf32>
    %117 = arith.negf %116 : vector<8x128xf32>
    %118 = math.exp %117 : vector<8x128xf32>
    %cst_32 = arith.constant 1.000000e+00 : f32
    %119 = vector.broadcast %cst_32 : f32 to vector<8x128xf32>
    %120 = arith.addf %119, %118 : vector<8x128xf32>
    %121 = arith.divf %119, %120 : vector<8x128xf32>
    %122 = vector.extract_strided_slice %111 {offsets = [0, 128], sizes = [8, 128], strides = [1, 1]} : vector<8x384xf32> to vector<8x128xf32>
    %123 = vector.extract_strided_slice %113 {offsets = [0, 128], sizes = [8, 128], strides = [1, 1]} : vector<8x384xf32> to vector<8x128xf32>
    %124 = arith.addf %122, %123 : vector<8x128xf32>
    %125 = arith.negf %124 : vector<8x128xf32>
    %126 = math.exp %125 : vector<8x128xf32>
    %cst_33 = arith.constant 1.000000e+00 : f32
    %127 = vector.broadcast %cst_33 : f32 to vector<8x128xf32>
    %128 = arith.addf %127, %126 : vector<8x128xf32>
    %129 = arith.divf %127, %128 : vector<8x128xf32>
    %130 = vector.extract_strided_slice %111 {offsets = [0, 256], sizes = [8, 128], strides = [1, 1]} : vector<8x384xf32> to vector<8x128xf32>
    %131 = vector.extract_strided_slice %113 {offsets = [0, 256], sizes = [8, 128], strides = [1, 1]} : vector<8x384xf32> to vector<8x128xf32>
    %132 = arith.mulf %121, %131 : vector<8x128xf32>
    %133 = arith.addf %130, %132 : vector<8x128xf32>
    %134 = math.tanh %133 : vector<8x128xf32>
    %cst_34 = arith.constant 1.000000e+00 : f32
    %135 = vector.broadcast %cst_34 : f32 to vector<8x128xf32>
    %136 = arith.subf %135, %129 : vector<8x128xf32>
    %137 = arith.mulf %136, %134 : vector<8x128xf32>
    %138 = arith.mulf %129, %107 : vector<8x128xf32>
    %139 = arith.addf %137, %138 : vector<8x128xf32>
    %c4_i32 = arith.constant 4 : i32
    %c8_i32_35 = arith.constant 8 : i32
    %140 = arith.muli %c4_i32, %c8_i32_35 : i32
    %141 = tpu.assume_multiple %140, 8 : i32
    %142 = arith.index_cast %141 : i32 to index
    %c0_36 = arith.constant 0 : index
    %143 = vector.load %arg10[%142, %c0_36] : memref<128x384xf32, #tpu.memory_space<vmem>>, vector<8x384xf32>
    %cst_37 = arith.constant dense<0.000000e+00> : vector<8x384xf32>
    %144 = tpu.matmul %139, %7, %cst_37 {dimension_numbers = #tpu.dot_dimension_numbers<[1], [0], [0], [1], [0, 0, 1, 1], [], []>} : vector<8x128xf32>, vector<128x384xf32>, vector<8x384xf32> -> vector<8x384xf32>
    %145 = arith.addf %144, %10 : vector<8x384xf32>
    %146 = vector.extract_strided_slice %143 {offsets = [0, 0], sizes = [8, 128], strides = [1, 1]} : vector<8x384xf32> to vector<8x128xf32>
    %147 = vector.extract_strided_slice %145 {offsets = [0, 0], sizes = [8, 128], strides = [1, 1]} : vector<8x384xf32> to vector<8x128xf32>
    %148 = arith.addf %146, %147 : vector<8x128xf32>
    %149 = arith.negf %148 : vector<8x128xf32>
    %150 = math.exp %149 : vector<8x128xf32>
    %cst_38 = arith.constant 1.000000e+00 : f32
    %151 = vector.broadcast %cst_38 : f32 to vector<8x128xf32>
    %152 = arith.addf %151, %150 : vector<8x128xf32>
    %153 = arith.divf %151, %152 : vector<8x128xf32>
    %154 = vector.extract_strided_slice %143 {offsets = [0, 128], sizes = [8, 128], strides = [1, 1]} : vector<8x384xf32> to vector<8x128xf32>
    %155 = vector.extract_strided_slice %145 {offsets = [0, 128], sizes = [8, 128], strides = [1, 1]} : vector<8x384xf32> to vector<8x128xf32>
    %156 = arith.addf %154, %155 : vector<8x128xf32>
    %157 = arith.negf %156 : vector<8x128xf32>
    %158 = math.exp %157 : vector<8x128xf32>
    %cst_39 = arith.constant 1.000000e+00 : f32
    %159 = vector.broadcast %cst_39 : f32 to vector<8x128xf32>
    %160 = arith.addf %159, %158 : vector<8x128xf32>
    %161 = arith.divf %159, %160 : vector<8x128xf32>
    %162 = vector.extract_strided_slice %143 {offsets = [0, 256], sizes = [8, 128], strides = [1, 1]} : vector<8x384xf32> to vector<8x128xf32>
    %163 = vector.extract_strided_slice %145 {offsets = [0, 256], sizes = [8, 128], strides = [1, 1]} : vector<8x384xf32> to vector<8x128xf32>
    %164 = arith.mulf %153, %163 : vector<8x128xf32>
    %165 = arith.addf %162, %164 : vector<8x128xf32>
    %166 = math.tanh %165 : vector<8x128xf32>
    %cst_40 = arith.constant 1.000000e+00 : f32
    %167 = vector.broadcast %cst_40 : f32 to vector<8x128xf32>
    %168 = arith.subf %167, %161 : vector<8x128xf32>
    %169 = arith.mulf %168, %166 : vector<8x128xf32>
    %170 = arith.mulf %161, %139 : vector<8x128xf32>
    %171 = arith.addf %169, %170 : vector<8x128xf32>
    %c5_i32 = arith.constant 5 : i32
    %c8_i32_41 = arith.constant 8 : i32
    %172 = arith.muli %c5_i32, %c8_i32_41 : i32
    %173 = tpu.assume_multiple %172, 8 : i32
    %174 = arith.index_cast %173 : i32 to index
    %c0_42 = arith.constant 0 : index
    %175 = vector.load %arg10[%174, %c0_42] : memref<128x384xf32, #tpu.memory_space<vmem>>, vector<8x384xf32>
    %cst_43 = arith.constant dense<0.000000e+00> : vector<8x384xf32>
    %176 = tpu.matmul %171, %7, %cst_43 {dimension_numbers = #tpu.dot_dimension_numbers<[1], [0], [0], [1], [0, 0, 1, 1], [], []>} : vector<8x128xf32>, vector<128x384xf32>, vector<8x384xf32> -> vector<8x384xf32>
    %177 = arith.addf %176, %10 : vector<8x384xf32>
    %178 = vector.extract_strided_slice %175 {offsets = [0, 0], sizes = [8, 128], strides = [1, 1]} : vector<8x384xf32> to vector<8x128xf32>
    %179 = vector.extract_strided_slice %177 {offsets = [0, 0], sizes = [8, 128], strides = [1, 1]} : vector<8x384xf32> to vector<8x128xf32>
    %180 = arith.addf %178, %179 : vector<8x128xf32>
    %181 = arith.negf %180 : vector<8x128xf32>
    %182 = math.exp %181 : vector<8x128xf32>
    %cst_44 = arith.constant 1.000000e+00 : f32
    %183 = vector.broadcast %cst_44 : f32 to vector<8x128xf32>
    %184 = arith.addf %183, %182 : vector<8x128xf32>
    %185 = arith.divf %183, %184 : vector<8x128xf32>
    %186 = vector.extract_strided_slice %175 {offsets = [0, 128], sizes = [8, 128], strides = [1, 1]} : vector<8x384xf32> to vector<8x128xf32>
    %187 = vector.extract_strided_slice %177 {offsets = [0, 128], sizes = [8, 128], strides = [1, 1]} : vector<8x384xf32> to vector<8x128xf32>
    %188 = arith.addf %186, %187 : vector<8x128xf32>
    %189 = arith.negf %188 : vector<8x128xf32>
    %190 = math.exp %189 : vector<8x128xf32>
    %cst_45 = arith.constant 1.000000e+00 : f32
    %191 = vector.broadcast %cst_45 : f32 to vector<8x128xf32>
    %192 = arith.addf %191, %190 : vector<8x128xf32>
    %193 = arith.divf %191, %192 : vector<8x128xf32>
    %194 = vector.extract_strided_slice %175 {offsets = [0, 256], sizes = [8, 128], strides = [1, 1]} : vector<8x384xf32> to vector<8x128xf32>
    %195 = vector.extract_strided_slice %177 {offsets = [0, 256], sizes = [8, 128], strides = [1, 1]} : vector<8x384xf32> to vector<8x128xf32>
    %196 = arith.mulf %185, %195 : vector<8x128xf32>
    %197 = arith.addf %194, %196 : vector<8x128xf32>
    %198 = math.tanh %197 : vector<8x128xf32>
    %cst_46 = arith.constant 1.000000e+00 : f32
    %199 = vector.broadcast %cst_46 : f32 to vector<8x128xf32>
    %200 = arith.subf %199, %193 : vector<8x128xf32>
    %201 = arith.mulf %200, %198 : vector<8x128xf32>
    %202 = arith.mulf %193, %171 : vector<8x128xf32>
    %203 = arith.addf %201, %202 : vector<8x128xf32>
    %c6_i32 = arith.constant 6 : i32
    %c8_i32_47 = arith.constant 8 : i32
    %204 = arith.muli %c6_i32, %c8_i32_47 : i32
    %205 = tpu.assume_multiple %204, 8 : i32
    %206 = arith.index_cast %205 : i32 to index
    %c0_48 = arith.constant 0 : index
    %207 = vector.load %arg10[%206, %c0_48] : memref<128x384xf32, #tpu.memory_space<vmem>>, vector<8x384xf32>
    %cst_49 = arith.constant dense<0.000000e+00> : vector<8x384xf32>
    %208 = tpu.matmul %203, %7, %cst_49 {dimension_numbers = #tpu.dot_dimension_numbers<[1], [0], [0], [1], [0, 0, 1, 1], [], []>} : vector<8x128xf32>, vector<128x384xf32>, vector<8x384xf32> -> vector<8x384xf32>
    %209 = arith.addf %208, %10 : vector<8x384xf32>
    %210 = vector.extract_strided_slice %207 {offsets = [0, 0], sizes = [8, 128], strides = [1, 1]} : vector<8x384xf32> to vector<8x128xf32>
    %211 = vector.extract_strided_slice %209 {offsets = [0, 0], sizes = [8, 128], strides = [1, 1]} : vector<8x384xf32> to vector<8x128xf32>
    %212 = arith.addf %210, %211 : vector<8x128xf32>
    %213 = arith.negf %212 : vector<8x128xf32>
    %214 = math.exp %213 : vector<8x128xf32>
    %cst_50 = arith.constant 1.000000e+00 : f32
    %215 = vector.broadcast %cst_50 : f32 to vector<8x128xf32>
    %216 = arith.addf %215, %214 : vector<8x128xf32>
    %217 = arith.divf %215, %216 : vector<8x128xf32>
    %218 = vector.extract_strided_slice %207 {offsets = [0, 128], sizes = [8, 128], strides = [1, 1]} : vector<8x384xf32> to vector<8x128xf32>
    %219 = vector.extract_strided_slice %209 {offsets = [0, 128], sizes = [8, 128], strides = [1, 1]} : vector<8x384xf32> to vector<8x128xf32>
    %220 = arith.addf %218, %219 : vector<8x128xf32>
    %221 = arith.negf %220 : vector<8x128xf32>
    %222 = math.exp %221 : vector<8x128xf32>
    %cst_51 = arith.constant 1.000000e+00 : f32
    %223 = vector.broadcast %cst_51 : f32 to vector<8x128xf32>
    %224 = arith.addf %223, %222 : vector<8x128xf32>
    %225 = arith.divf %223, %224 : vector<8x128xf32>
    %226 = vector.extract_strided_slice %207 {offsets = [0, 256], sizes = [8, 128], strides = [1, 1]} : vector<8x384xf32> to vector<8x128xf32>
    %227 = vector.extract_strided_slice %209 {offsets = [0, 256], sizes = [8, 128], strides = [1, 1]} : vector<8x384xf32> to vector<8x128xf32>
    %228 = arith.mulf %217, %227 : vector<8x128xf32>
    %229 = arith.addf %226, %228 : vector<8x128xf32>
    %230 = math.tanh %229 : vector<8x128xf32>
    %cst_52 = arith.constant 1.000000e+00 : f32
    %231 = vector.broadcast %cst_52 : f32 to vector<8x128xf32>
    %232 = arith.subf %231, %225 : vector<8x128xf32>
    %233 = arith.mulf %232, %230 : vector<8x128xf32>
    %234 = arith.mulf %225, %203 : vector<8x128xf32>
    %235 = arith.addf %233, %234 : vector<8x128xf32>
    %c7_i32 = arith.constant 7 : i32
    %c8_i32_53 = arith.constant 8 : i32
    %236 = arith.muli %c7_i32, %c8_i32_53 : i32
    %237 = tpu.assume_multiple %236, 8 : i32
    %238 = arith.index_cast %237 : i32 to index
    %c0_54 = arith.constant 0 : index
    %239 = vector.load %arg10[%238, %c0_54] : memref<128x384xf32, #tpu.memory_space<vmem>>, vector<8x384xf32>
    %cst_55 = arith.constant dense<0.000000e+00> : vector<8x384xf32>
    %240 = tpu.matmul %235, %7, %cst_55 {dimension_numbers = #tpu.dot_dimension_numbers<[1], [0], [0], [1], [0, 0, 1, 1], [], []>} : vector<8x128xf32>, vector<128x384xf32>, vector<8x384xf32> -> vector<8x384xf32>
    %241 = arith.addf %240, %10 : vector<8x384xf32>
    %242 = vector.extract_strided_slice %239 {offsets = [0, 0], sizes = [8, 128], strides = [1, 1]} : vector<8x384xf32> to vector<8x128xf32>
    %243 = vector.extract_strided_slice %241 {offsets = [0, 0], sizes = [8, 128], strides = [1, 1]} : vector<8x384xf32> to vector<8x128xf32>
    %244 = arith.addf %242, %243 : vector<8x128xf32>
    %245 = arith.negf %244 : vector<8x128xf32>
    %246 = math.exp %245 : vector<8x128xf32>
    %cst_56 = arith.constant 1.000000e+00 : f32
    %247 = vector.broadcast %cst_56 : f32 to vector<8x128xf32>
    %248 = arith.addf %247, %246 : vector<8x128xf32>
    %249 = arith.divf %247, %248 : vector<8x128xf32>
    %250 = vector.extract_strided_slice %239 {offsets = [0, 128], sizes = [8, 128], strides = [1, 1]} : vector<8x384xf32> to vector<8x128xf32>
    %251 = vector.extract_strided_slice %241 {offsets = [0, 128], sizes = [8, 128], strides = [1, 1]} : vector<8x384xf32> to vector<8x128xf32>
    %252 = arith.addf %250, %251 : vector<8x128xf32>
    %253 = arith.negf %252 : vector<8x128xf32>
    %254 = math.exp %253 : vector<8x128xf32>
    %cst_57 = arith.constant 1.000000e+00 : f32
    %255 = vector.broadcast %cst_57 : f32 to vector<8x128xf32>
    %256 = arith.addf %255, %254 : vector<8x128xf32>
    %257 = arith.divf %255, %256 : vector<8x128xf32>
    %258 = vector.extract_strided_slice %239 {offsets = [0, 256], sizes = [8, 128], strides = [1, 1]} : vector<8x384xf32> to vector<8x128xf32>
    %259 = vector.extract_strided_slice %241 {offsets = [0, 256], sizes = [8, 128], strides = [1, 1]} : vector<8x384xf32> to vector<8x128xf32>
    %260 = arith.mulf %249, %259 : vector<8x128xf32>
    %261 = arith.addf %258, %260 : vector<8x128xf32>
    %262 = math.tanh %261 : vector<8x128xf32>
    %cst_58 = arith.constant 1.000000e+00 : f32
    %263 = vector.broadcast %cst_58 : f32 to vector<8x128xf32>
    %264 = arith.subf %263, %257 : vector<8x128xf32>
    %265 = arith.mulf %264, %262 : vector<8x128xf32>
    %266 = arith.mulf %257, %235 : vector<8x128xf32>
    %267 = arith.addf %265, %266 : vector<8x128xf32>
    %c8_i32_59 = arith.constant 8 : i32
    %c8_i32_60 = arith.constant 8 : i32
    %268 = arith.muli %c8_i32_59, %c8_i32_60 : i32
    %269 = tpu.assume_multiple %268, 8 : i32
    %270 = arith.index_cast %269 : i32 to index
    %c0_61 = arith.constant 0 : index
    %271 = vector.load %arg10[%270, %c0_61] : memref<128x384xf32, #tpu.memory_space<vmem>>, vector<8x384xf32>
    %cst_62 = arith.constant dense<0.000000e+00> : vector<8x384xf32>
    %272 = tpu.matmul %267, %7, %cst_62 {dimension_numbers = #tpu.dot_dimension_numbers<[1], [0], [0], [1], [0, 0, 1, 1], [], []>} : vector<8x128xf32>, vector<128x384xf32>, vector<8x384xf32> -> vector<8x384xf32>
    %273 = arith.addf %272, %10 : vector<8x384xf32>
    %274 = vector.extract_strided_slice %271 {offsets = [0, 0], sizes = [8, 128], strides = [1, 1]} : vector<8x384xf32> to vector<8x128xf32>
    %275 = vector.extract_strided_slice %273 {offsets = [0, 0], sizes = [8, 128], strides = [1, 1]} : vector<8x384xf32> to vector<8x128xf32>
    %276 = arith.addf %274, %275 : vector<8x128xf32>
    %277 = arith.negf %276 : vector<8x128xf32>
    %278 = math.exp %277 : vector<8x128xf32>
    %cst_63 = arith.constant 1.000000e+00 : f32
    %279 = vector.broadcast %cst_63 : f32 to vector<8x128xf32>
    %280 = arith.addf %279, %278 : vector<8x128xf32>
    %281 = arith.divf %279, %280 : vector<8x128xf32>
    %282 = vector.extract_strided_slice %271 {offsets = [0, 128], sizes = [8, 128], strides = [1, 1]} : vector<8x384xf32> to vector<8x128xf32>
    %283 = vector.extract_strided_slice %273 {offsets = [0, 128], sizes = [8, 128], strides = [1, 1]} : vector<8x384xf32> to vector<8x128xf32>
    %284 = arith.addf %282, %283 : vector<8x128xf32>
    %285 = arith.negf %284 : vector<8x128xf32>
    %286 = math.exp %285 : vector<8x128xf32>
    %cst_64 = arith.constant 1.000000e+00 : f32
    %287 = vector.broadcast %cst_64 : f32 to vector<8x128xf32>
    %288 = arith.addf %287, %286 : vector<8x128xf32>
    %289 = arith.divf %287, %288 : vector<8x128xf32>
    %290 = vector.extract_strided_slice %271 {offsets = [0, 256], sizes = [8, 128], strides = [1, 1]} : vector<8x384xf32> to vector<8x128xf32>
    %291 = vector.extract_strided_slice %273 {offsets = [0, 256], sizes = [8, 128], strides = [1, 1]} : vector<8x384xf32> to vector<8x128xf32>
    %292 = arith.mulf %281, %291 : vector<8x128xf32>
    %293 = arith.addf %290, %292 : vector<8x128xf32>
    %294 = math.tanh %293 : vector<8x128xf32>
    %cst_65 = arith.constant 1.000000e+00 : f32
    %295 = vector.broadcast %cst_65 : f32 to vector<8x128xf32>
    %296 = arith.subf %295, %289 : vector<8x128xf32>
    %297 = arith.mulf %296, %294 : vector<8x128xf32>
    %298 = arith.mulf %289, %267 : vector<8x128xf32>
    %299 = arith.addf %297, %298 : vector<8x128xf32>
    %c9_i32 = arith.constant 9 : i32
    %c8_i32_66 = arith.constant 8 : i32
    %300 = arith.muli %c9_i32, %c8_i32_66 : i32
    %301 = tpu.assume_multiple %300, 8 : i32
    %302 = arith.index_cast %301 : i32 to index
    %c0_67 = arith.constant 0 : index
    %303 = vector.load %arg10[%302, %c0_67] : memref<128x384xf32, #tpu.memory_space<vmem>>, vector<8x384xf32>
    %cst_68 = arith.constant dense<0.000000e+00> : vector<8x384xf32>
    %304 = tpu.matmul %299, %7, %cst_68 {dimension_numbers = #tpu.dot_dimension_numbers<[1], [0], [0], [1], [0, 0, 1, 1], [], []>} : vector<8x128xf32>, vector<128x384xf32>, vector<8x384xf32> -> vector<8x384xf32>
    %305 = arith.addf %304, %10 : vector<8x384xf32>
    %306 = vector.extract_strided_slice %303 {offsets = [0, 0], sizes = [8, 128], strides = [1, 1]} : vector<8x384xf32> to vector<8x128xf32>
    %307 = vector.extract_strided_slice %305 {offsets = [0, 0], sizes = [8, 128], strides = [1, 1]} : vector<8x384xf32> to vector<8x128xf32>
    %308 = arith.addf %306, %307 : vector<8x128xf32>
    %309 = arith.negf %308 : vector<8x128xf32>
    %310 = math.exp %309 : vector<8x128xf32>
    %cst_69 = arith.constant 1.000000e+00 : f32
    %311 = vector.broadcast %cst_69 : f32 to vector<8x128xf32>
    %312 = arith.addf %311, %310 : vector<8x128xf32>
    %313 = arith.divf %311, %312 : vector<8x128xf32>
    %314 = vector.extract_strided_slice %303 {offsets = [0, 128], sizes = [8, 128], strides = [1, 1]} : vector<8x384xf32> to vector<8x128xf32>
    %315 = vector.extract_strided_slice %305 {offsets = [0, 128], sizes = [8, 128], strides = [1, 1]} : vector<8x384xf32> to vector<8x128xf32>
    %316 = arith.addf %314, %315 : vector<8x128xf32>
    %317 = arith.negf %316 : vector<8x128xf32>
    %318 = math.exp %317 : vector<8x128xf32>
    %cst_70 = arith.constant 1.000000e+00 : f32
    %319 = vector.broadcast %cst_70 : f32 to vector<8x128xf32>
    %320 = arith.addf %319, %318 : vector<8x128xf32>
    %321 = arith.divf %319, %320 : vector<8x128xf32>
    %322 = vector.extract_strided_slice %303 {offsets = [0, 256], sizes = [8, 128], strides = [1, 1]} : vector<8x384xf32> to vector<8x128xf32>
    %323 = vector.extract_strided_slice %305 {offsets = [0, 256], sizes = [8, 128], strides = [1, 1]} : vector<8x384xf32> to vector<8x128xf32>
    %324 = arith.mulf %313, %323 : vector<8x128xf32>
    %325 = arith.addf %322, %324 : vector<8x128xf32>
    %326 = math.tanh %325 : vector<8x128xf32>
    %cst_71 = arith.constant 1.000000e+00 : f32
    %327 = vector.broadcast %cst_71 : f32 to vector<8x128xf32>
    %328 = arith.subf %327, %321 : vector<8x128xf32>
    %329 = arith.mulf %328, %326 : vector<8x128xf32>
    %330 = arith.mulf %321, %299 : vector<8x128xf32>
    %331 = arith.addf %329, %330 : vector<8x128xf32>
    %c10_i32 = arith.constant 10 : i32
    %c8_i32_72 = arith.constant 8 : i32
    %332 = arith.muli %c10_i32, %c8_i32_72 : i32
    %333 = tpu.assume_multiple %332, 8 : i32
    %334 = arith.index_cast %333 : i32 to index
    %c0_73 = arith.constant 0 : index
    %335 = vector.load %arg10[%334, %c0_73] : memref<128x384xf32, #tpu.memory_space<vmem>>, vector<8x384xf32>
    %cst_74 = arith.constant dense<0.000000e+00> : vector<8x384xf32>
    %336 = tpu.matmul %331, %7, %cst_74 {dimension_numbers = #tpu.dot_dimension_numbers<[1], [0], [0], [1], [0, 0, 1, 1], [], []>} : vector<8x128xf32>, vector<128x384xf32>, vector<8x384xf32> -> vector<8x384xf32>
    %337 = arith.addf %336, %10 : vector<8x384xf32>
    %338 = vector.extract_strided_slice %335 {offsets = [0, 0], sizes = [8, 128], strides = [1, 1]} : vector<8x384xf32> to vector<8x128xf32>
    %339 = vector.extract_strided_slice %337 {offsets = [0, 0], sizes = [8, 128], strides = [1, 1]} : vector<8x384xf32> to vector<8x128xf32>
    %340 = arith.addf %338, %339 : vector<8x128xf32>
    %341 = arith.negf %340 : vector<8x128xf32>
    %342 = math.exp %341 : vector<8x128xf32>
    %cst_75 = arith.constant 1.000000e+00 : f32
    %343 = vector.broadcast %cst_75 : f32 to vector<8x128xf32>
    %344 = arith.addf %343, %342 : vector<8x128xf32>
    %345 = arith.divf %343, %344 : vector<8x128xf32>
    %346 = vector.extract_strided_slice %335 {offsets = [0, 128], sizes = [8, 128], strides = [1, 1]} : vector<8x384xf32> to vector<8x128xf32>
    %347 = vector.extract_strided_slice %337 {offsets = [0, 128], sizes = [8, 128], strides = [1, 1]} : vector<8x384xf32> to vector<8x128xf32>
    %348 = arith.addf %346, %347 : vector<8x128xf32>
    %349 = arith.negf %348 : vector<8x128xf32>
    %350 = math.exp %349 : vector<8x128xf32>
    %cst_76 = arith.constant 1.000000e+00 : f32
    %351 = vector.broadcast %cst_76 : f32 to vector<8x128xf32>
    %352 = arith.addf %351, %350 : vector<8x128xf32>
    %353 = arith.divf %351, %352 : vector<8x128xf32>
    %354 = vector.extract_strided_slice %335 {offsets = [0, 256], sizes = [8, 128], strides = [1, 1]} : vector<8x384xf32> to vector<8x128xf32>
    %355 = vector.extract_strided_slice %337 {offsets = [0, 256], sizes = [8, 128], strides = [1, 1]} : vector<8x384xf32> to vector<8x128xf32>
    %356 = arith.mulf %345, %355 : vector<8x128xf32>
    %357 = arith.addf %354, %356 : vector<8x128xf32>
    %358 = math.tanh %357 : vector<8x128xf32>
    %cst_77 = arith.constant 1.000000e+00 : f32
    %359 = vector.broadcast %cst_77 : f32 to vector<8x128xf32>
    %360 = arith.subf %359, %353 : vector<8x128xf32>
    %361 = arith.mulf %360, %358 : vector<8x128xf32>
    %362 = arith.mulf %353, %331 : vector<8x128xf32>
    %363 = arith.addf %361, %362 : vector<8x128xf32>
    %c11_i32 = arith.constant 11 : i32
    %c8_i32_78 = arith.constant 8 : i32
    %364 = arith.muli %c11_i32, %c8_i32_78 : i32
    %365 = tpu.assume_multiple %364, 8 : i32
    %366 = arith.index_cast %365 : i32 to index
    %c0_79 = arith.constant 0 : index
    %367 = vector.load %arg10[%366, %c0_79] : memref<128x384xf32, #tpu.memory_space<vmem>>, vector<8x384xf32>
    %cst_80 = arith.constant dense<0.000000e+00> : vector<8x384xf32>
    %368 = tpu.matmul %363, %7, %cst_80 {dimension_numbers = #tpu.dot_dimension_numbers<[1], [0], [0], [1], [0, 0, 1, 1], [], []>} : vector<8x128xf32>, vector<128x384xf32>, vector<8x384xf32> -> vector<8x384xf32>
    %369 = arith.addf %368, %10 : vector<8x384xf32>
    %370 = vector.extract_strided_slice %367 {offsets = [0, 0], sizes = [8, 128], strides = [1, 1]} : vector<8x384xf32> to vector<8x128xf32>
    %371 = vector.extract_strided_slice %369 {offsets = [0, 0], sizes = [8, 128], strides = [1, 1]} : vector<8x384xf32> to vector<8x128xf32>
    %372 = arith.addf %370, %371 : vector<8x128xf32>
    %373 = arith.negf %372 : vector<8x128xf32>
    %374 = math.exp %373 : vector<8x128xf32>
    %cst_81 = arith.constant 1.000000e+00 : f32
    %375 = vector.broadcast %cst_81 : f32 to vector<8x128xf32>
    %376 = arith.addf %375, %374 : vector<8x128xf32>
    %377 = arith.divf %375, %376 : vector<8x128xf32>
    %378 = vector.extract_strided_slice %367 {offsets = [0, 128], sizes = [8, 128], strides = [1, 1]} : vector<8x384xf32> to vector<8x128xf32>
    %379 = vector.extract_strided_slice %369 {offsets = [0, 128], sizes = [8, 128], strides = [1, 1]} : vector<8x384xf32> to vector<8x128xf32>
    %380 = arith.addf %378, %379 : vector<8x128xf32>
    %381 = arith.negf %380 : vector<8x128xf32>
    %382 = math.exp %381 : vector<8x128xf32>
    %cst_82 = arith.constant 1.000000e+00 : f32
    %383 = vector.broadcast %cst_82 : f32 to vector<8x128xf32>
    %384 = arith.addf %383, %382 : vector<8x128xf32>
    %385 = arith.divf %383, %384 : vector<8x128xf32>
    %386 = vector.extract_strided_slice %367 {offsets = [0, 256], sizes = [8, 128], strides = [1, 1]} : vector<8x384xf32> to vector<8x128xf32>
    %387 = vector.extract_strided_slice %369 {offsets = [0, 256], sizes = [8, 128], strides = [1, 1]} : vector<8x384xf32> to vector<8x128xf32>
    %388 = arith.mulf %377, %387 : vector<8x128xf32>
    %389 = arith.addf %386, %388 : vector<8x128xf32>
    %390 = math.tanh %389 : vector<8x128xf32>
    %cst_83 = arith.constant 1.000000e+00 : f32
    %391 = vector.broadcast %cst_83 : f32 to vector<8x128xf32>
    %392 = arith.subf %391, %385 : vector<8x128xf32>
    %393 = arith.mulf %392, %390 : vector<8x128xf32>
    %394 = arith.mulf %385, %363 : vector<8x128xf32>
    %395 = arith.addf %393, %394 : vector<8x128xf32>
    %c12_i32 = arith.constant 12 : i32
    %c8_i32_84 = arith.constant 8 : i32
    %396 = arith.muli %c12_i32, %c8_i32_84 : i32
    %397 = tpu.assume_multiple %396, 8 : i32
    %398 = arith.index_cast %397 : i32 to index
    %c0_85 = arith.constant 0 : index
    %399 = vector.load %arg10[%398, %c0_85] : memref<128x384xf32, #tpu.memory_space<vmem>>, vector<8x384xf32>
    %cst_86 = arith.constant dense<0.000000e+00> : vector<8x384xf32>
    %400 = tpu.matmul %395, %7, %cst_86 {dimension_numbers = #tpu.dot_dimension_numbers<[1], [0], [0], [1], [0, 0, 1, 1], [], []>} : vector<8x128xf32>, vector<128x384xf32>, vector<8x384xf32> -> vector<8x384xf32>
    %401 = arith.addf %400, %10 : vector<8x384xf32>
    %402 = vector.extract_strided_slice %399 {offsets = [0, 0], sizes = [8, 128], strides = [1, 1]} : vector<8x384xf32> to vector<8x128xf32>
    %403 = vector.extract_strided_slice %401 {offsets = [0, 0], sizes = [8, 128], strides = [1, 1]} : vector<8x384xf32> to vector<8x128xf32>
    %404 = arith.addf %402, %403 : vector<8x128xf32>
    %405 = arith.negf %404 : vector<8x128xf32>
    %406 = math.exp %405 : vector<8x128xf32>
    %cst_87 = arith.constant 1.000000e+00 : f32
    %407 = vector.broadcast %cst_87 : f32 to vector<8x128xf32>
    %408 = arith.addf %407, %406 : vector<8x128xf32>
    %409 = arith.divf %407, %408 : vector<8x128xf32>
    %410 = vector.extract_strided_slice %399 {offsets = [0, 128], sizes = [8, 128], strides = [1, 1]} : vector<8x384xf32> to vector<8x128xf32>
    %411 = vector.extract_strided_slice %401 {offsets = [0, 128], sizes = [8, 128], strides = [1, 1]} : vector<8x384xf32> to vector<8x128xf32>
    %412 = arith.addf %410, %411 : vector<8x128xf32>
    %413 = arith.negf %412 : vector<8x128xf32>
    %414 = math.exp %413 : vector<8x128xf32>
    %cst_88 = arith.constant 1.000000e+00 : f32
    %415 = vector.broadcast %cst_88 : f32 to vector<8x128xf32>
    %416 = arith.addf %415, %414 : vector<8x128xf32>
    %417 = arith.divf %415, %416 : vector<8x128xf32>
    %418 = vector.extract_strided_slice %399 {offsets = [0, 256], sizes = [8, 128], strides = [1, 1]} : vector<8x384xf32> to vector<8x128xf32>
    %419 = vector.extract_strided_slice %401 {offsets = [0, 256], sizes = [8, 128], strides = [1, 1]} : vector<8x384xf32> to vector<8x128xf32>
    %420 = arith.mulf %409, %419 : vector<8x128xf32>
    %421 = arith.addf %418, %420 : vector<8x128xf32>
    %422 = math.tanh %421 : vector<8x128xf32>
    %cst_89 = arith.constant 1.000000e+00 : f32
    %423 = vector.broadcast %cst_89 : f32 to vector<8x128xf32>
    %424 = arith.subf %423, %417 : vector<8x128xf32>
    %425 = arith.mulf %424, %422 : vector<8x128xf32>
    %426 = arith.mulf %417, %395 : vector<8x128xf32>
    %427 = arith.addf %425, %426 : vector<8x128xf32>
    %c13_i32 = arith.constant 13 : i32
    %c8_i32_90 = arith.constant 8 : i32
    %428 = arith.muli %c13_i32, %c8_i32_90 : i32
    %429 = tpu.assume_multiple %428, 8 : i32
    %430 = arith.index_cast %429 : i32 to index
    %c0_91 = arith.constant 0 : index
    %431 = vector.load %arg10[%430, %c0_91] : memref<128x384xf32, #tpu.memory_space<vmem>>, vector<8x384xf32>
    %cst_92 = arith.constant dense<0.000000e+00> : vector<8x384xf32>
    %432 = tpu.matmul %427, %7, %cst_92 {dimension_numbers = #tpu.dot_dimension_numbers<[1], [0], [0], [1], [0, 0, 1, 1], [], []>} : vector<8x128xf32>, vector<128x384xf32>, vector<8x384xf32> -> vector<8x384xf32>
    %433 = arith.addf %432, %10 : vector<8x384xf32>
    %434 = vector.extract_strided_slice %431 {offsets = [0, 0], sizes = [8, 128], strides = [1, 1]} : vector<8x384xf32> to vector<8x128xf32>
    %435 = vector.extract_strided_slice %433 {offsets = [0, 0], sizes = [8, 128], strides = [1, 1]} : vector<8x384xf32> to vector<8x128xf32>
    %436 = arith.addf %434, %435 : vector<8x128xf32>
    %437 = arith.negf %436 : vector<8x128xf32>
    %438 = math.exp %437 : vector<8x128xf32>
    %cst_93 = arith.constant 1.000000e+00 : f32
    %439 = vector.broadcast %cst_93 : f32 to vector<8x128xf32>
    %440 = arith.addf %439, %438 : vector<8x128xf32>
    %441 = arith.divf %439, %440 : vector<8x128xf32>
    %442 = vector.extract_strided_slice %431 {offsets = [0, 128], sizes = [8, 128], strides = [1, 1]} : vector<8x384xf32> to vector<8x128xf32>
    %443 = vector.extract_strided_slice %433 {offsets = [0, 128], sizes = [8, 128], strides = [1, 1]} : vector<8x384xf32> to vector<8x128xf32>
    %444 = arith.addf %442, %443 : vector<8x128xf32>
    %445 = arith.negf %444 : vector<8x128xf32>
    %446 = math.exp %445 : vector<8x128xf32>
    %cst_94 = arith.constant 1.000000e+00 : f32
    %447 = vector.broadcast %cst_94 : f32 to vector<8x128xf32>
    %448 = arith.addf %447, %446 : vector<8x128xf32>
    %449 = arith.divf %447, %448 : vector<8x128xf32>
    %450 = vector.extract_strided_slice %431 {offsets = [0, 256], sizes = [8, 128], strides = [1, 1]} : vector<8x384xf32> to vector<8x128xf32>
    %451 = vector.extract_strided_slice %433 {offsets = [0, 256], sizes = [8, 128], strides = [1, 1]} : vector<8x384xf32> to vector<8x128xf32>
    %452 = arith.mulf %441, %451 : vector<8x128xf32>
    %453 = arith.addf %450, %452 : vector<8x128xf32>
    %454 = math.tanh %453 : vector<8x128xf32>
    %cst_95 = arith.constant 1.000000e+00 : f32
    %455 = vector.broadcast %cst_95 : f32 to vector<8x128xf32>
    %456 = arith.subf %455, %449 : vector<8x128xf32>
    %457 = arith.mulf %456, %454 : vector<8x128xf32>
    %458 = arith.mulf %449, %427 : vector<8x128xf32>
    %459 = arith.addf %457, %458 : vector<8x128xf32>
    %c14_i32 = arith.constant 14 : i32
    %c8_i32_96 = arith.constant 8 : i32
    %460 = arith.muli %c14_i32, %c8_i32_96 : i32
    %461 = tpu.assume_multiple %460, 8 : i32
    %462 = arith.index_cast %461 : i32 to index
    %c0_97 = arith.constant 0 : index
    %463 = vector.load %arg10[%462, %c0_97] : memref<128x384xf32, #tpu.memory_space<vmem>>, vector<8x384xf32>
    %cst_98 = arith.constant dense<0.000000e+00> : vector<8x384xf32>
    %464 = tpu.matmul %459, %7, %cst_98 {dimension_numbers = #tpu.dot_dimension_numbers<[1], [0], [0], [1], [0, 0, 1, 1], [], []>} : vector<8x128xf32>, vector<128x384xf32>, vector<8x384xf32> -> vector<8x384xf32>
    %465 = arith.addf %464, %10 : vector<8x384xf32>
    %466 = vector.extract_strided_slice %463 {offsets = [0, 0], sizes = [8, 128], strides = [1, 1]} : vector<8x384xf32> to vector<8x128xf32>
    %467 = vector.extract_strided_slice %465 {offsets = [0, 0], sizes = [8, 128], strides = [1, 1]} : vector<8x384xf32> to vector<8x128xf32>
    %468 = arith.addf %466, %467 : vector<8x128xf32>
    %469 = arith.negf %468 : vector<8x128xf32>
    %470 = math.exp %469 : vector<8x128xf32>
    %cst_99 = arith.constant 1.000000e+00 : f32
    %471 = vector.broadcast %cst_99 : f32 to vector<8x128xf32>
    %472 = arith.addf %471, %470 : vector<8x128xf32>
    %473 = arith.divf %471, %472 : vector<8x128xf32>
    %474 = vector.extract_strided_slice %463 {offsets = [0, 128], sizes = [8, 128], strides = [1, 1]} : vector<8x384xf32> to vector<8x128xf32>
    %475 = vector.extract_strided_slice %465 {offsets = [0, 128], sizes = [8, 128], strides = [1, 1]} : vector<8x384xf32> to vector<8x128xf32>
    %476 = arith.addf %474, %475 : vector<8x128xf32>
    %477 = arith.negf %476 : vector<8x128xf32>
    %478 = math.exp %477 : vector<8x128xf32>
    %cst_100 = arith.constant 1.000000e+00 : f32
    %479 = vector.broadcast %cst_100 : f32 to vector<8x128xf32>
    %480 = arith.addf %479, %478 : vector<8x128xf32>
    %481 = arith.divf %479, %480 : vector<8x128xf32>
    %482 = vector.extract_strided_slice %463 {offsets = [0, 256], sizes = [8, 128], strides = [1, 1]} : vector<8x384xf32> to vector<8x128xf32>
    %483 = vector.extract_strided_slice %465 {offsets = [0, 256], sizes = [8, 128], strides = [1, 1]} : vector<8x384xf32> to vector<8x128xf32>
    %484 = arith.mulf %473, %483 : vector<8x128xf32>
    %485 = arith.addf %482, %484 : vector<8x128xf32>
    %486 = math.tanh %485 : vector<8x128xf32>
    %cst_101 = arith.constant 1.000000e+00 : f32
    %487 = vector.broadcast %cst_101 : f32 to vector<8x128xf32>
    %488 = arith.subf %487, %481 : vector<8x128xf32>
    %489 = arith.mulf %488, %486 : vector<8x128xf32>
    %490 = arith.mulf %481, %459 : vector<8x128xf32>
    %491 = arith.addf %489, %490 : vector<8x128xf32>
    %c15_i32 = arith.constant 15 : i32
    %c8_i32_102 = arith.constant 8 : i32
    %492 = arith.muli %c15_i32, %c8_i32_102 : i32
    %493 = tpu.assume_multiple %492, 8 : i32
    %494 = arith.index_cast %493 : i32 to index
    %c0_103 = arith.constant 0 : index
    %495 = vector.load %arg10[%494, %c0_103] : memref<128x384xf32, #tpu.memory_space<vmem>>, vector<8x384xf32>
    %cst_104 = arith.constant dense<0.000000e+00> : vector<8x384xf32>
    %496 = tpu.matmul %491, %7, %cst_104 {dimension_numbers = #tpu.dot_dimension_numbers<[1], [0], [0], [1], [0, 0, 1, 1], [], []>} : vector<8x128xf32>, vector<128x384xf32>, vector<8x384xf32> -> vector<8x384xf32>
    %497 = arith.addf %496, %10 : vector<8x384xf32>
    %498 = vector.extract_strided_slice %495 {offsets = [0, 0], sizes = [8, 128], strides = [1, 1]} : vector<8x384xf32> to vector<8x128xf32>
    %499 = vector.extract_strided_slice %497 {offsets = [0, 0], sizes = [8, 128], strides = [1, 1]} : vector<8x384xf32> to vector<8x128xf32>
    %500 = arith.addf %498, %499 : vector<8x128xf32>
    %501 = arith.negf %500 : vector<8x128xf32>
    %502 = math.exp %501 : vector<8x128xf32>
    %cst_105 = arith.constant 1.000000e+00 : f32
    %503 = vector.broadcast %cst_105 : f32 to vector<8x128xf32>
    %504 = arith.addf %503, %502 : vector<8x128xf32>
    %505 = arith.divf %503, %504 : vector<8x128xf32>
    %506 = vector.extract_strided_slice %495 {offsets = [0, 128], sizes = [8, 128], strides = [1, 1]} : vector<8x384xf32> to vector<8x128xf32>
    %507 = vector.extract_strided_slice %497 {offsets = [0, 128], sizes = [8, 128], strides = [1, 1]} : vector<8x384xf32> to vector<8x128xf32>
    %508 = arith.addf %506, %507 : vector<8x128xf32>
    %509 = arith.negf %508 : vector<8x128xf32>
    %510 = math.exp %509 : vector<8x128xf32>
    %cst_106 = arith.constant 1.000000e+00 : f32
    %511 = vector.broadcast %cst_106 : f32 to vector<8x128xf32>
    %512 = arith.addf %511, %510 : vector<8x128xf32>
    %513 = arith.divf %511, %512 : vector<8x128xf32>
    %514 = vector.extract_strided_slice %495 {offsets = [0, 256], sizes = [8, 128], strides = [1, 1]} : vector<8x384xf32> to vector<8x128xf32>
    %515 = vector.extract_strided_slice %497 {offsets = [0, 256], sizes = [8, 128], strides = [1, 1]} : vector<8x384xf32> to vector<8x128xf32>
    %516 = arith.mulf %505, %515 : vector<8x128xf32>
    %517 = arith.addf %514, %516 : vector<8x128xf32>
    %518 = math.tanh %517 : vector<8x128xf32>
    %cst_107 = arith.constant 1.000000e+00 : f32
    %519 = vector.broadcast %cst_107 : f32 to vector<8x128xf32>
    %520 = arith.subf %519, %513 : vector<8x128xf32>
    %521 = arith.mulf %520, %518 : vector<8x128xf32>
    %522 = arith.mulf %513, %491 : vector<8x128xf32>
    %523 = arith.addf %521, %522 : vector<8x128xf32>
    %c16_i32 = arith.constant 16 : i32
    %c0_108 = arith.constant 0 : index
    %c0_109 = arith.constant 0 : index
    %524 = vector.load %arg5[%c0_108, %c0_109] : memref<128x128xf32, #tpu.memory_space<vmem>>, vector<128x128xf32>
    %cst_110 = arith.constant dense<0.000000e+00> : vector<8x128xf32>
    %525 = tpu.matmul %523, %524, %cst_110 {dimension_numbers = #tpu.dot_dimension_numbers<[1], [0], [0], [1], [0, 0, 1, 1], [], []>} : vector<8x128xf32>, vector<128x128xf32>, vector<8x128xf32> -> vector<8x128xf32>
    %c0_111 = arith.constant 0 : index
    %c0_112 = arith.constant 0 : index
    %526 = vector.load %arg6[%c0_111, %c0_112] : memref<1x128xf32, #tpu.memory_space<vmem>>, vector<1x128xf32>
    %527 = vector.broadcast %526 : vector<1x128xf32> to vector<8x128xf32>
    %528 = arith.addf %525, %527 : vector<8x128xf32>
    %cst_113 = arith.constant 0.000000e+00 : f32
    %529 = vector.broadcast %cst_113 : f32 to vector<8x128xf32>
    %530 = arith.maximumf %528, %529 : vector<8x128xf32>
    %c0_114 = arith.constant 0 : index
    %c0_115 = arith.constant 0 : index
    %531 = vector.load %arg7[%c0_114, %c0_115] : memref<128x128xf32, #tpu.memory_space<vmem>>, vector<128x128xf32>
    %cst_116 = arith.constant dense<0.000000e+00> : vector<8x128xf32>
    %532 = tpu.matmul %530, %531, %cst_116 {dimension_numbers = #tpu.dot_dimension_numbers<[1], [0], [0], [1], [0, 0, 1, 1], [], []>} : vector<8x128xf32>, vector<128x128xf32>, vector<8x128xf32> -> vector<8x128xf32>
    %c0_117 = arith.constant 0 : index
    %c0_118 = arith.constant 0 : index
    %533 = vector.load %arg8[%c0_117, %c0_118] : memref<1x128xf32, #tpu.memory_space<vmem>>, vector<1x128xf32>
    %534 = vector.broadcast %533 : vector<1x128xf32> to vector<8x128xf32>
    %535 = arith.addf %532, %534 : vector<8x128xf32>
    %c0_119 = arith.constant 0 : index
    %c0_120 = arith.constant 0 : index
    %536 = vector.load %arg9[%c0_119, %c0_120] : memref<8x128xf32, #tpu.memory_space<vmem>>, vector<8x128xf32>
    tpu.vector_store %arg9[%c0_119, %c0_120], %535 {strides = array<i32>} : memref<8x128xf32, #tpu.memory_space<vmem>>, vector<8x128xf32>,
    return
  }
}

</mosaic_0001>

<llo_original>
// kernel: tpu_custom_call.1
$region0: #{tpu_custom_call.1}
  #allocation0 [shape = 'u32[]', space=smem, size = 0x4, offset = 0x4, fixed_abs, tag = 'smem constant byte address 0x4 - core index']
  #allocation1 [shape = 'u32[72,128]{1,0:T(1,128)}', space=vmem, size = 0x9000, scoped, tag = 'internal scratch']
  #allocation2 [shape = 'f32[128,384]{1,0:T(8,128)}', space=vmem, size = 0x30000, scoped, tag = 'scratch operand']
  %s0 = inlined_call_operand.hbm [shape: f32[128,128], index: 0, kind: input, shape index: {}]
  %s1 = inlined_call_operand.hbm [shape: f32[128,384], index: 1, kind: input, shape index: {}]
  %s2 = inlined_call_operand.hbm [shape: f32[1,384], index: 2, kind: input, shape index: {}]
  %s3 = inlined_call_operand.hbm [shape: f32[128,384], index: 3, kind: input, shape index: {}]
  %s4 = inlined_call_operand.vmem [shape: f32[1,384], index: 4, kind: input, shape index: {}]
  %s5 = inlined_call_operand.hbm [shape: f32[128,128], index: 5, kind: input, shape index: {}]
  %s6 = inlined_call_operand.vmem [shape: f32[1,128], index: 6, kind: input, shape index: {}]
  %s7 = inlined_call_operand.hbm [shape: f32[128,128], index: 7, kind: input, shape index: {}]
  %s8 = inlined_call_operand.vmem [shape: f32[1,128], index: 8, kind: input, shape index: {}]
  %s9 = inlined_call_operand.hbm [shape: f32[8,128], index: 9, kind: output, shape index: {}]
  %s10 = sld [smem:[#allocation0]]
  $region70: #{tpu_custom_call.1} parent=0
    _
  %s12 = ssub.s32 1, %s10
  %s13 = scalar_select 0, %s12, %s10
  $region1: #{tpu_custom_call.1} parent=0
    #allocation3 [shape = 'u8[65536]{0}', space=vmem, size = 0x10000, scoped, tag = 'input window, operand 0, single buffered']
    #allocation4 [shape = 's32[1]{0}', space=sflag, size = 0x4, scoped, tag = 'scoped memory for tpu_custom_call.1']
    #allocation5 [shape = 's32[1]{0}', space=sflag, size = 0x4, scoped, tag = 'scoped memory for tpu_custom_call.1']
    #allocation6 [shape = 'u8[196608]{0}', space=vmem, size = 0x30000, scoped, tag = 'input window, operand 1, single buffered']
    #allocation7 [shape = 's32[1]{0}', space=sflag, size = 0x4, scoped, tag = 'scoped memory for tpu_custom_call.1']
    #allocation8 [shape = 'u8[1536]{0}', space=vmem, size = 0x800, scoped, tag = 'input window, operand 2, single buffered']
    #allocation9 [shape = 'u8[196608]{0}', space=vmem, size = 0x30000, scoped, tag = 'input window, operand 3, single buffered']
    #allocation10 [shape = 's32[1]{0}', space=sflag, size = 0x4, scoped, tag = 'scoped memory for tpu_custom_call.1']
    #allocation11 [shape = 'u8[65536]{0}', space=vmem, size = 0x10000, scoped, tag = 'input window, operand 5, single buffered']
    #allocation12 [shape = 'u8[65536]{0}', space=vmem, size = 0x10000, scoped, tag = 'input window, operand 7, single buffered']
    #allocation13 [shape = 's32[1]{0}', space=sflag, size = 0x4, scoped, tag = 'scoped memory for tpu_custom_call.1']
    #allocation14 [shape = 'u8[4096]{0}', space=vmem, size = 0x1000, scoped, tag = 'output window, operand 0, single buffered']
    %14 = vsyncpa [#allocation4], 0
    %15 = vsyncpa [#allocation7], 0
    %16 = vsyncpa [#allocation10], 0
    %17 = vsyncpa [#allocation13], 0
    %18 = vsyncpa [#allocation5], 0
    // Predicated region
    $region2: #{tpu_custom_call.1} parent=1 // pred_check
      _
    $region3: #{tpu_custom_call.1} parent=1 // pred_check_branch
      %20 = sbr.rel (0) target = $region5
    $region4: #{tpu_custom_call.1} parent=1 // pred_region
      %22 = vsyncadd [#allocation4], 0
      %s23 = sshll.u32 %s0, 4
      %s24 = int_to_ptr.hbm [resolvable:$true] %s23
      %s25 = sshll.u32 [#allocation3], 4
      %s26 = int_to_ptr.vmem [resolvable:$true] %s25
      %31 = dma.hbm_to_vmem [thread:$0]  %s24, 2048, %s26, [#allocation4], 128, 128, 8
    $region5: #{tpu_custom_call.1} parent=1 // pred_fallthru
      _
    // Predicated region
    $region6: #{tpu_custom_call.1} parent=1 // pred_check
      _
    $region7: #{tpu_custom_call.1} parent=1 // pred_check_branch
      %33 = sbr.rel (0) target = $region9
    $region8: #{tpu_custom_call.1} parent=1 // pred_region
      %35 = vsyncadd [#allocation7], 0
      %s36 = sshll.u32 %s1, 4
      %s37 = int_to_ptr.hbm [resolvable:$true] %s36
      %s38 = sshll.u32 [#allocation6], 4
      %s39 = int_to_ptr.vmem [resolvable:$true] %s38
      %44 = dma.hbm_to_vmem [thread:$0]  %s37, 6144, %s39, [#allocation7], 384, 384, 24
    $region9: #{tpu_custom_call.1} parent=1 // pred_fallthru
      _
    // Predicated region
    $region10: #{tpu_custom_call.1} parent=1 // pred_check
      _
    $region11: #{tpu_custom_call.1} parent=1 // pred_check_branch
      %46 = sbr.rel (0) target = $region13
    $region12: #{tpu_custom_call.1} parent=1 // pred_region
      %48 = vsyncadd [#allocation7], 0
      %s50 = sshll.u32 %s2, 4
      %s51 = int_to_ptr.hbm [resolvable:$true] %s50
      %s52 = sshll.u32 [#allocation8], 4
      %s53 = int_to_ptr.vmem [resolvable:$true] %s52
      %55 = dma.hbm_to_vmem [thread:$0]  %s51, 48, %s53, [#allocation7]
    $region13: #{tpu_custom_call.1} parent=1 // pred_fallthru
      _
    // Predicated region
    $region14: #{tpu_custom_call.1} parent=1 // pred_check
      _
    $region15: #{tpu_custom_call.1} parent=1 // pred_check_branch
      %57 = sbr.rel (0) target = $region17
    $region16: #{tpu_custom_call.1} parent=1 // pred_region
      %59 = vsyncadd [#allocation10], 0
      %s60 = sshll.u32 %s3, 4
      %s61 = int_to_ptr.hbm [resolvable:$true] %s60
      %s62 = sshll.u32 [#allocation9], 4
      %s63 = int_to_ptr.vmem [resolvable:$true] %s62
      %68 = dma.hbm_to_vmem [thread:$0]  %s61, 6144, %s63, [#allocation10], 384, 384, 24
    $region17: #{tpu_custom_call.1} parent=1 // pred_fallthru
      _
    // Predicated region
    $region18: #{tpu_custom_call.1} parent=1 // pred_check
      _
    $region19: #{tpu_custom_call.1} parent=1 // pred_check_branch
      %70 = sbr.rel (0) target = $region21
    $region20: #{tpu_custom_call.1} parent=1 // pred_region
      _
    $region21: #{tpu_custom_call.1} parent=1 // pred_fallthru
      _
    // Predicated region
    $region22: #{tpu_custom_call.1} parent=1 // pred_check
      _
    $region23: #{tpu_custom_call.1} parent=1 // pred_check_branch
      %72 = sbr.rel (0) target = $region25
    $region24: #{tpu_custom_call.1} parent=1 // pred_region
      %74 = vsyncadd [#allocation10], 0
      %s75 = sshll.u32 %s5, 4
      %s76 = int_to_ptr.hbm [resolvable:$true] %s75
      %s77 = sshll.u32 [#allocation11], 4
      %s78 = int_to_ptr.vmem [resolvable:$true] %s77
      %83 = dma.hbm_to_vmem [thread:$0]  %s76, 2048, %s78, [#allocation10], 128, 128, 8
    $region25: #{tpu_custom_call.1} parent=1 // pred_fallthru
      _
    // Predicated region
    $region26: #{tpu_custom_call.1} parent=1 // pred_check
      _
    $region27: #{tpu_custom_call.1} parent=1 // pred_check_branch
      %85 = sbr.rel (0) target = $region29
    $region28: #{tpu_custom_call.1} parent=1 // pred_region
      _
    $region29: #{tpu_custom_call.1} parent=1 // pred_fallthru
      _
    // Predicated region
    $region30: #{tpu_custom_call.1} parent=1 // pred_check
      _
    $region31: #{tpu_custom_call.1} parent=1 // pred_check_branch
      %87 = sbr.rel (0) target = $region33
    $region32: #{tpu_custom_call.1} parent=1 // pred_region
      %89 = vsyncadd [#allocation13], 0
      %s90 = sshll.u32 %s7, 4
      %s91 = int_to_ptr.hbm [resolvable:$true] %s90
      %s92 = sshll.u32 [#allocation12], 4
      %s93 = int_to_ptr.vmem [resolvable:$true] %s92
      %98 = dma.hbm_to_vmem [thread:$0]  %s91, 2048, %s93, [#allocation13], 128, 128, 8
    $region33: #{tpu_custom_call.1} parent=1 // pred_fallthru
      _
    // Predicated region
    $region34: #{tpu_custom_call.1} parent=1 // pred_check
      _
    $region35: #{tpu_custom_call.1} parent=1 // pred_check_branch
      %100 = sbr.rel (0) target = $region37
    $region36: #{tpu_custom_call.1} parent=1 // pred_region
      _
    $region37: #{tpu_custom_call.1} parent=1 // pred_fallthru
      _
    // Predicated region
    $region38: #{tpu_custom_call.1} parent=1 // pred_check
      _
    $region39: #{tpu_custom_call.1} parent=1 // pred_check_branch
      %102 = sbr.rel (0) target = $region41
    $region40: #{tpu_custom_call.1} parent=1 // pred_region
      %104 = dma.done [#allocation4], 2048
    $region41: #{tpu_custom_call.1} parent=1 // pred_fallthru
      _
    // Predicated region
    $region42: #{tpu_custom_call.1} parent=1 // pred_check
      _
    $region43: #{tpu_custom_call.1} parent=1 // pred_check_branch
      %106 = sbr.rel (0) target = $region45
    $region44: #{tpu_custom_call.1} parent=1 // pred_region
      %108 = dma.done [#allocation7], 6144
    $region45: #{tpu_custom_call.1} parent=1 // pred_fallthru
      _
    // Predicated region
    $region46: #{tpu_custom_call.1} parent=1 // pred_check
      _
    $region47: #{tpu_custom_call.1} parent=1 // pred_check_branch
      %110 = sbr.rel (0) target = $region49
    $region48: #{tpu_custom_call.1} parent=1 // pred_region
      %112 = dma.done [#allocation7], 48
    $region49: #{tpu_custom_call.1} parent=1 // pred_fallthru
      _
    // Predicated region
    $region50: #{tpu_custom_call.1} parent=1 // pred_check
      _
    $region51: #{tpu_custom_call.1} parent=1 // pred_check_branch
      %114 = sbr.rel (0) target = $region53
    $region52: #{tpu_custom_call.1} parent=1 // pred_region
      %116 = dma.done [#allocation10], 6144
    $region53: #{tpu_custom_call.1} parent=1 // pred_fallthru
      _
    // Predicated region
    $region54: #{tpu_custom_call.1} parent=1 // pred_check
      _
    $region55: #{tpu_custom_call.1} parent=1 // pred_check_branch
      %118 = sbr.rel (0) target = $region57
    $region56: #{tpu_custom_call.1} parent=1 // pred_region
      %120 = dma.done [#allocation10], 2048
    $region57: #{tpu_custom_call.1} parent=1 // pred_fallthru
      _
    // Predicated region
    $region58: #{tpu_custom_call.1} parent=1 // pred_check
      _
    $region59: #{tpu_custom_call.1} parent=1 // pred_check_branch
      %122 = sbr.rel (0) target = $region61
    $region60: #{tpu_custom_call.1} parent=1 // pred_region
      %124 = dma.done [#allocation13], 2048
    $region61: #{tpu_custom_call.1} parent=1 // pred_fallthru
      _
    %v125 = vld [vmem:[#allocation3] sm:$0xff]
    %v126 = vld [vmem:[#allocation3 + $0x8] sm:$0xff]
    %v127 = vld [vmem:[#allocation3 + $0x10] sm:$0xff]
    %v128 = vld [vmem:[#allocation3 + $0x18] sm:$0xff]
    %v129 = vld [vmem:[#allocation3 + $0x20] sm:$0xff]
    %v130 = vld [vmem:[#allocation3 + $0x28] sm:$0xff]
    %v131 = vld [vmem:[#allocation3 + $0x30] sm:$0xff]
    %v132 = vld [vmem:[#allocation3 + $0x38] sm:$0xff]
    %v133 = vld [vmem:[#allocation3 + $0x40] sm:$0xff]
    %v134 = vld [vmem:[#allocation3 + $0x48] sm:$0xff]
    %v135 = vld [vmem:[#allocation3 + $0x50] sm:$0xff]
    %v136 = vld [vmem:[#allocation3 + $0x58] sm:$0xff]
    %v137 = vld [vmem:[#allocation3 + $0x60] sm:$0xff]
    %v138 = vld [vmem:[#allocation3 + $0x68] sm:$0xff]
    %v139 = vld [vmem:[#allocation3 + $0x70] sm:$0xff]
    %v140 = vld [vmem:[#allocation3 + $0x78] sm:$0xff]
    %v141 = vld [vmem:[#allocation6] sm:$0xff]
    %v142 = vld [vmem:[#allocation6 + $0x8] sm:$0xff]
    %v143 = vld [vmem:[#allocation6 + $0x10] sm:$0xff]
    %v144 = vld [vmem:[#allocation6 + $0x18] sm:$0xff]
    %v145 = vld [vmem:[#allocation6 + $0x20] sm:$0xff]
    %v146 = vld [vmem:[#allocation6 + $0x28] sm:$0xff]
    %v147 = vld [vmem:[#allocation6 + $0x30] sm:$0xff]
    %v148 = vld [vmem:[#allocation6 + $0x38] sm:$0xff]
    %v149 = vld [vmem:[#allocation6 + $0x40] sm:$0xff]
    %v150 = vld [vmem:[#allocation6 + $0x48] sm:$0xff]
    %v151 = vld [vmem:[#allocation6 + $0x50] sm:$0xff]
    %v152 = vld [vmem:[#allocation6 + $0x58] sm:$0xff]
    %v153 = vld [vmem:[#allocation6 + $0x60] sm:$0xff]
    %v154 = vld [vmem:[#allocation6 + $0x68] sm:$0xff]
    %v155 = vld [vmem:[#allocation6 + $0x70] sm:$0xff]
    %v156 = vld [vmem:[#allocation6 + $0x78] sm:$0xff]
    %v157 = vld [vmem:[#allocation6 + $0x80] sm:$0xff]
    %v158 = vld [vmem:[#allocation6 + $0x88] sm:$0xff]
    %v159 = vld [vmem:[#allocation6 + $0x90] sm:$0xff]
    %v160 = vld [vmem:[#allocation6 + $0x98] sm:$0xff]
    %v161 = vld [vmem:[#allocation6 + $0xa0] sm:$0xff]
    %v162 = vld [vmem:[#allocation6 + $0xa8] sm:$0xff]
    %v163 = vld [vmem:[#allocation6 + $0xb0] sm:$0xff]
    %v164 = vld [vmem:[#allocation6 + $0xb8] sm:$0xff]
    %v165 = vld [vmem:[#allocation6 + $0xc0] sm:$0xff]
    %v166 = vld [vmem:[#allocation6 + $0xc8] sm:$0xff]
    %v167 = vld [vmem:[#allocation6 + $0xd0] sm:$0xff]
    %v168 = vld [vmem:[#allocation6 + $0xd8] sm:$0xff]
    %v169 = vld [vmem:[#allocation6 + $0xe0] sm:$0xff]
    %v170 = vld [vmem:[#allocation6 + $0xe8] sm:$0xff]
    %v171 = vld [vmem:[#allocation6 + $0xf0] sm:$0xff]
    %v172 = vld [vmem:[#allocation6 + $0xf8] sm:$0xff]
    %v173 = vld [vmem:[#allocation6 + $0x100] sm:$0xff]
    %v174 = vld [vmem:[#allocation6 + $0x108] sm:$0xff]
    %v175 = vld [vmem:[#allocation6 + $0x110] sm:$0xff]
    %v176 = vld [vmem:[#allocation6 + $0x118] sm:$0xff]
    %v177 = vld [vmem:[#allocation6 + $0x120] sm:$0xff]
    %v178 = vld [vmem:[#allocation6 + $0x128] sm:$0xff]
    %v179 = vld [vmem:[#allocation6 + $0x130] sm:$0xff]
    %v180 = vld [vmem:[#allocation6 + $0x138] sm:$0xff]
    %v181 = vld [vmem:[#allocation6 + $0x140] sm:$0xff]
    %v182 = vld [vmem:[#allocation6 + $0x148] sm:$0xff]
    %v183 = vld [vmem:[#allocation6 + $0x150] sm:$0xff]
    %v184 = vld [vmem:[#allocation6 + $0x158] sm:$0xff]
    %v185 = vld [vmem:[#allocation6 + $0x160] sm:$0xff]
    %v186 = vld [vmem:[#allocation6 + $0x168] sm:$0xff]
    %v187 = vld [vmem:[#allocation6 + $0x170] sm:$0xff]
    %v188 = vld [vmem:[#allocation6 + $0x178] sm:$0xff]
    %v189 = vld [vmem:[#allocation8] sm:$0x7]
    %v191 = vperm.slane %v189, 0
    %v192 = vperm.slane %v189, 1
    %v193 = vperm.slane %v189, 2
    %197 = vmatpush.msra.mxu0 %v186
    %198 = vmatpush.msra.mxu0 %v183
    %199 = vmatpush.msra.mxu0 %v180
    %200 = vmatpush.msra.mxu0 %v177
    %201 = vmatpush.msra.mxu0 %v174
    %202 = vmatpush.msra.mxu0 %v171
    %203 = vmatpush.msra.mxu0 %v168
    %204 = vmatpush.msra.mxu0 %v165
    %205 = vmatpush.msra.mxu0 %v162
    %206 = vmatpush.msra.mxu0 %v159
    %207 = vmatpush.msra.mxu0 %v156
    %208 = vmatpush.msra.mxu0 %v153
    %209 = vmatpush.msra.mxu0 %v150
    %210 = vmatpush.msra.mxu0 %v147
    %211 = vmatpush.msra.mxu0 %v144
    %212 = vmatpush.msra.mxu0 %v141
    %213 = vmatmul.f32.gmra.mxu0 %v125
    %v214 = vpop.f32.mrf.mxu0
    %v215 = vadd.f32 %v191, %v214
    %216 = vmatmul.f32.gmra.mxu0 %v126
    %v217 = vpop.f32.mrf.mxu0
    %v218 = vadd.f32 %v191, %v217
    %219 = vmatmul.f32.gmra.mxu0 %v127
    %v220 = vpop.f32.mrf.mxu0
    %v221 = vadd.f32 %v191, %v220
    %222 = vmatmul.f32.gmra.mxu0 %v128
    %v223 = vpop.f32.mrf.mxu0
    %v224 = vadd.f32 %v191, %v223
    %225 = vmatmul.f32.gmra.mxu0 %v129
    %v226 = vpop.f32.mrf.mxu0
    %v227 = vadd.f32 %v191, %v226
    %228 = vmatmul.f32.gmra.mxu0 %v130
    %v229 = vpop.f32.mrf.mxu0
    %v230 = vadd.f32 %v191, %v229
    %231 = vmatmul.f32.gmra.mxu0 %v131
    %v232 = vpop.f32.mrf.mxu0
    %v233 = vadd.f32 %v191, %v232
    %234 = vmatmul.f32.gmra.mxu0 %v132
    %v235 = vpop.f32.mrf.mxu0
    %v236 = vadd.f32 %v191, %v235
    %237 = vmatmul.f32.gmra.mxu0 %v133
    %v238 = vpop.f32.mrf.mxu0
    %v239 = vadd.f32 %v191, %v238
    %240 = vmatmul.f32.gmra.mxu0 %v134
    %v241 = vpop.f32.mrf.mxu0
    %v242 = vadd.f32 %v191, %v241
    %243 = vmatmul.f32.gmra.mxu0 %v135
    %v244 = vpop.f32.mrf.mxu0
    %v245 = vadd.f32 %v191, %v244
    %246 = vmatmul.f32.gmra.mxu0 %v136
    %v247 = vpop.f32.mrf.mxu0
    %v248 = vadd.f32 %v191, %v247
    %249 = vmatmul.f32.gmra.mxu0 %v137
    %v250 = vpop.f32.mrf.mxu0
    %v251 = vadd.f32 %v191, %v250
    %252 = vmatmul.f32.gmra.mxu0 %v138
    %v253 = vpop.f32.mrf.mxu0
    %v254 = vadd.f32 %v191, %v253
    %255 = vmatmul.f32.gmra.mxu0 %v139
    %v256 = vpop.f32.mrf.mxu0
    %v257 = vadd.f32 %v191, %v256
    %258 = vmatmul.f32.gmra.mxu0 %v140
    %v259 = vpop.f32.mrf.mxu0
    %v260 = vadd.f32 %v191, %v259
    %261 = vdwg.mxu0
    %262 = vmatpush.msra.mxu0 %v187
    %263 = vmatpush.msra.mxu0 %v184
    %264 = vmatpush.msra.mxu0 %v181
    %265 = vmatpush.msra.mxu0 %v178
    %266 = vmatpush.msra.mxu0 %v175
    %267 = vmatpush.msra.mxu0 %v172
    %268 = vmatpush.msra.mxu0 %v169
    %269 = vmatpush.msra.mxu0 %v166
    %270 = vmatpush.msra.mxu0 %v163
    %271 = vmatpush.msra.mxu0 %v160
    %272 = vmatpush.msra.mxu0 %v157
    %273 = vmatpush.msra.mxu0 %v154
    %274 = vmatpush.msra.mxu0 %v151
    %275 = vmatpush.msra.mxu0 %v148
    %276 = vmatpush.msra.mxu0 %v145
    %277 = vmatpush.msra.mxu0 %v142
    %278 = vmatmul.f32.gmra.mxu0 %v125
    %v279 = vpop.f32.mrf.mxu0
    %v280 = vadd.f32 %v192, %v279
    %281 = vmatmul.f32.gmra.mxu0 %v126
    %v282 = vpop.f32.mrf.mxu0
    %v283 = vadd.f32 %v192, %v282
    %284 = vmatmul.f32.gmra.mxu0 %v127
    %v285 = vpop.f32.mrf.mxu0
    %v286 = vadd.f32 %v192, %v285
    %287 = vmatmul.f32.gmra.mxu0 %v128
    %v288 = vpop.f32.mrf.mxu0
    %v289 = vadd.f32 %v192, %v288
    %290 = vmatmul.f32.gmra.mxu0 %v129
    %v291 = vpop.f32.mrf.mxu0
    %v292 = vadd.f32 %v192, %v291
    %293 = vmatmul.f32.gmra.mxu0 %v130
    %v294 = vpop.f32.mrf.mxu0
    %v295 = vadd.f32 %v192, %v294
    %296 = vmatmul.f32.gmra.mxu0 %v131
    %v297 = vpop.f32.mrf.mxu0
    %v298 = vadd.f32 %v192, %v297
    %299 = vmatmul.f32.gmra.mxu0 %v132
    %v300 = vpop.f32.mrf.mxu0
    %v301 = vadd.f32 %v192, %v300
    %302 = vmatmul.f32.gmra.mxu0 %v133
    %v303 = vpop.f32.mrf.mxu0
    %v304 = vadd.f32 %v192, %v303
    %305 = vmatmul.f32.gmra.mxu0 %v134
    %v306 = vpop.f32.mrf.mxu0
    %v307 = vadd.f32 %v192, %v306
    %308 = vmatmul.f32.gmra.mxu0 %v135
    %v309 = vpop.f32.mrf.mxu0
    %v310 = vadd.f32 %v192, %v309
    %311 = vmatmul.f32.gmra.mxu0 %v136
    %v312 = vpop.f32.mrf.mxu0
    %v313 = vadd.f32 %v192, %v312
    %314 = vmatmul.f32.gmra.mxu0 %v137
    %v315 = vpop.f32.mrf.mxu0
    %v316 = vadd.f32 %v192, %v315
    %317 = vmatmul.f32.gmra.mxu0 %v138
    %v318 = vpop.f32.mrf.mxu0
    %v319 = vadd.f32 %v192, %v318
    %320 = vmatmul.f32.gmra.mxu0 %v139
    %v321 = vpop.f32.mrf.mxu0
    %v322 = vadd.f32 %v192, %v321
    %323 = vmatmul.f32.gmra.mxu0 %v140
    %v324 = vpop.f32.mrf.mxu0
    %v325 = vadd.f32 %v192, %v324
    %326 = vdwg.mxu0
    %327 = vmatpush.msra.mxu0 %v188
    %328 = vmatpush.msra.mxu0 %v185
    %329 = vmatpush.msra.mxu0 %v182
    %330 = vmatpush.msra.mxu0 %v179
    %331 = vmatpush.msra.mxu0 %v176
    %332 = vmatpush.msra.mxu0 %v173
    %333 = vmatpush.msra.mxu0 %v170
    %334 = vmatpush.msra.mxu0 %v167
    %335 = vmatpush.msra.mxu0 %v164
    %336 = vmatpush.msra.mxu0 %v161
    %337 = vmatpush.msra.mxu0 %v158
    %338 = vmatpush.msra.mxu0 %v155
    %339 = vmatpush.msra.mxu0 %v152
    %340 = vmatpush.msra.mxu0 %v149
    %341 = vmatpush.msra.mxu0 %v146
    %342 = vmatpush.msra.mxu0 %v143
    %343 = vmatmul.f32.gmra.mxu0 %v125
    %v344 = vpop.f32.mrf.mxu0
    %v345 = vadd.f32 %v193, %v344
    %346 = vmatmul.f32.gmra.mxu0 %v126
    %v347 = vpop.f32.mrf.mxu0
    %v348 = vadd.f32 %v193, %v347
    %349 = vmatmul.f32.gmra.mxu0 %v127
    %v350 = vpop.f32.mrf.mxu0
    %v351 = vadd.f32 %v193, %v350
    %352 = vmatmul.f32.gmra.mxu0 %v128
    %v353 = vpop.f32.mrf.mxu0
    %v354 = vadd.f32 %v193, %v353
    %355 = vmatmul.f32.gmra.mxu0 %v129
    %v356 = vpop.f32.mrf.mxu0
    %v357 = vadd.f32 %v193, %v356
    %358 = vmatmul.f32.gmra.mxu0 %v130
    %v359 = vpop.f32.mrf.mxu0
    %v360 = vadd.f32 %v193, %v359
    %361 = vmatmul.f32.gmra.mxu0 %v131
    %v362 = vpop.f32.mrf.mxu0
    %v363 = vadd.f32 %v193, %v362
    %364 = vmatmul.f32.gmra.mxu0 %v132
    %v365 = vpop.f32.mrf.mxu0
    %v366 = vadd.f32 %v193, %v365
    %367 = vmatmul.f32.gmra.mxu0 %v133
    %v368 = vpop.f32.mrf.mxu0
    %v369 = vadd.f32 %v193, %v368
    %370 = vmatmul.f32.gmra.mxu0 %v134
    %v371 = vpop.f32.mrf.mxu0
    %v372 = vadd.f32 %v193, %v371
    %373 = vmatmul.f32.gmra.mxu0 %v135
    %v374 = vpop.f32.mrf.mxu0
    %v375 = vadd.f32 %v193, %v374
    %376 = vmatmul.f32.gmra.mxu0 %v136
    %v377 = vpop.f32.mrf.mxu0
    %v378 = vadd.f32 %v193, %v377
    %379 = vmatmul.f32.gmra.mxu0 %v137
    %v380 = vpop.f32.mrf.mxu0
    %v381 = vadd.f32 %v193, %v380
    %382 = vmatmul.f32.gmra.mxu0 %v138
    %v383 = vpop.f32.mrf.mxu0
    %v384 = vadd.f32 %v193, %v383
    %385 = vmatmul.f32.gmra.mxu0 %v139
    %v386 = vpop.f32.mrf.mxu0
    %v387 = vadd.f32 %v193, %v386
    %388 = vmatmul.f32.gmra.mxu0 %v140
    %v389 = vpop.f32.mrf.mxu0
    %v390 = vadd.f32 %v193, %v389
    %391 = vdwg.mxu0
    %392 = vst [vmem:[#allocation2] sm:$0xff] %v215
    %393 = vst [vmem:[#allocation2 + $0x8] sm:$0xff] %v280
    %394 = vst [vmem:[#allocation2 + $0x10] sm:$0xff] %v345
    %395 = vst [vmem:[#allocation2 + $0x18] sm:$0xff] %v218
    %396 = vst [vmem:[#allocation2 + $0x20] sm:$0xff] %v283
    %397 = vst [vmem:[#allocation2 + $0x28] sm:$0xff] %v348
    %398 = vst [vmem:[#allocation2 + $0x30] sm:$0xff] %v221
    %399 = vst [vmem:[#allocation2 + $0x38] sm:$0xff] %v286
    %400 = vst [vmem:[#allocation2 + $0x40] sm:$0xff] %v351
    %401 = vst [vmem:[#allocation2 + $0x48] sm:$0xff] %v224
    %402 = vst [vmem:[#allocation2 + $0x50] sm:$0xff] %v289
    %403 = vst [vmem:[#allocation2 + $0x58] sm:$0xff] %v354
    %404 = vst [vmem:[#allocation2 + $0x60] sm:$0xff] %v227
    %405 = vst [vmem:[#allocation2 + $0x68] sm:$0xff] %v292
    %406 = vst [vmem:[#allocation2 + $0x70] sm:$0xff] %v357
    %407 = vst [vmem:[#allocation2 + $0x78] sm:$0xff] %v230
    %408 = vst [vmem:[#allocation2 + $0x80] sm:$0xff] %v295
    %409 = vst [vmem:[#allocation2 + $0x88] sm:$0xff] %v360
    %410 = vst [vmem:[#allocation2 + $0x90] sm:$0xff] %v233
    %411 = vst [vmem:[#allocation2 + $0x98] sm:$0xff] %v298
    %412 = vst [vmem:[#allocation2 + $0xa0] sm:$0xff] %v363
    %413 = vst [vmem:[#allocation2 + $0xa8] sm:$0xff] %v236
    %414 = vst [vmem:[#allocation2 + $0xb0] sm:$0xff] %v301
    %415 = vst [vmem:[#allocation2 + $0xb8] sm:$0xff] %v366
    %416 = vst [vmem:[#allocation2 + $0xc0] sm:$0xff] %v239
    %417 = vst [vmem:[#allocation2 + $0xc8] sm:$0xff] %v304
    %418 = vst [vmem:[#allocation2 + $0xd0] sm:$0xff] %v369
    %419 = vst [vmem:[#allocation2 + $0xd8] sm:$0xff] %v242
    %420 = vst [vmem:[#allocation2 + $0xe0] sm:$0xff] %v307
    %421 = vst [vmem:[#allocation2 + $0xe8] sm:$0xff] %v372
    %422 = vst [vmem:[#allocation2 + $0xf0] sm:$0xff] %v245
    %423 = vst [vmem:[#allocation2 + $0xf8] sm:$0xff] %v310
    %424 = vst [vmem:[#allocation2 + $0x100] sm:$0xff] %v375
    %425 = vst [vmem:[#allocation2 + $0x108] sm:$0xff] %v248
    %426 = vst [vmem:[#allocation2 + $0x110] sm:$0xff] %v313
    %427 = vst [vmem:[#allocation2 + $0x118] sm:$0xff] %v378
    %428 = vst [vmem:[#allocation2 + $0x120] sm:$0xff] %v251
    %429 = vst [vmem:[#allocation2 + $0x128] sm:$0xff] %v316
    %430 = vst [vmem:[#allocation2 + $0x130] sm:$0xff] %v381
    %431 = vst [vmem:[#allocation2 + $0x138] sm:$0xff] %v254
    %432 = vst [vmem:[#allocation2 + $0x140] sm:$0xff] %v319
    %433 = vst [vmem:[#allocation2 + $0x148] sm:$0xff] %v384
    %434 = vst [vmem:[#allocation2 + $0x150] sm:$0xff] %v257
    %435 = vst [vmem:[#allocation2 + $0x158] sm:$0xff] %v322
    %436 = vst [vmem:[#allocation2 + $0x160] sm:$0xff] %v387
    %437 = vst [vmem:[#allocation2 + $0x168] sm:$0xff] %v260
    %438 = vst [vmem:[#allocation2 + $0x170] sm:$0xff] %v325
    %439 = vst [vmem:[#allocation2 + $0x178] sm:$0xff] %v390
    %v440 = vld [vmem:[#allocation9] sm:$0xff]
    %v441 = vld [vmem:[#allocation9 + $0x8] sm:$0xff]
    %v442 = vld [vmem:[#allocation9 + $0x10] sm:$0xff]
    %v443 = vld [vmem:[#allocation9 + $0x18] sm:$0xff]
    %v444 = vld [vmem:[#allocation9 + $0x20] sm:$0xff]
    %v445 = vld [vmem:[#allocation9 + $0x28] sm:$0xff]
    %v446 = vld [vmem:[#allocation9 + $0x30] sm:$0xff]
    %v447 = vld [vmem:[#allocation9 + $0x38] sm:$0xff]
    %v448 = vld [vmem:[#allocation9 + $0x40] sm:$0xff]
    %v449 = vld [vmem:[#allocation9 + $0x48] sm:$0xff]
    %v450 = vld [vmem:[#allocation9 + $0x50] sm:$0xff]
    %v451 = vld [vmem:[#allocation9 + $0x58] sm:$0xff]
    %v452 = vld [vmem:[#allocation9 + $0x60] sm:$0xff]
    %v453 = vld [vmem:[#allocation9 + $0x68] sm:$0xff]
    %v454 = vld [vmem:[#allocation9 + $0x70] sm:$0xff]
    %v455 = vld [vmem:[#allocation9 + $0x78] sm:$0xff]
    %v456 = vld [vmem:[#allocation9 + $0x80] sm:$0xff]
    %v457 = vld [vmem:[#allocation9 + $0x88] sm:$0xff]
    %v458 = vld [vmem:[#allocation9 + $0x90] sm:$0xff]
    %v459 = vld [vmem:[#allocation9 + $0x98] sm:$0xff]
    %v460 = vld [vmem:[#allocation9 + $0xa0] sm:$0xff]
    %v461 = vld [vmem:[#allocation9 + $0xa8] sm:$0xff]
    %v462 = vld [vmem:[#allocation9 + $0xb0] sm:$0xff]
    %v463 = vld [vmem:[#allocation9 + $0xb8] sm:$0xff]
    %v464 = vld [vmem:[#allocation9 + $0xc0] sm:$0xff]
    %v465 = vld [vmem:[#allocation9 + $0xc8] sm:$0xff]
    %v466 = vld [vmem:[#allocation9 + $0xd0] sm:$0xff]
    %v467 = vld [vmem:[#allocation9 + $0xd8] sm:$0xff]
    %v468 = vld [vmem:[#allocation9 + $0xe0] sm:$0xff]
    %v469 = vld [vmem:[#allocation9 + $0xe8] sm:$0xff]
    %v470 = vld [vmem:[#allocation9 + $0xf0] sm:$0xff]
    %v471 = vld [vmem:[#allocation9 + $0xf8] sm:$0xff]
    %v472 = vld [vmem:[#allocation9 + $0x100] sm:$0xff]
    %v473 = vld [vmem:[#allocation9 + $0x108] sm:$0xff]
    %v474 = vld [vmem:[#allocation9 + $0x110] sm:$0xff]
    %v475 = vld [vmem:[#allocation9 + $0x118] sm:$0xff]
    %v476 = vld [vmem:[#allocation9 + $0x120] sm:$0xff]
    %v477 = vld [vmem:[#allocation9 + $0x128] sm:$0xff]
    %v478 = vld [vmem:[#allocation9 + $0x130] sm:$0xff]
    %v479 = vld [vmem:[#allocation9 + $0x138] sm:$0xff]
    %v480 = vld [vmem:[#allocation9 + $0x140] sm:$0xff]
    %v481 = vld [vmem:[#allocation9 + $0x148] sm:$0xff]
    %v482 = vld [vmem:[#allocation9 + $0x150] sm:$0xff]
    %v483 = vld [vmem:[#allocation9 + $0x158] sm:$0xff]
    %v484 = vld [vmem:[#allocation9 + $0x160] sm:$0xff]
    %v485 = vld [vmem:[#allocation9 + $0x168] sm:$0xff]
    %v486 = vld [vmem:[#allocation9 + $0x170] sm:$0xff]
    %v487 = vld [vmem:[#allocation9 + $0x178] sm:$0xff]
    %v488 = vld [vmem:[%s4] sm:$0x7]
    %v490 = vperm.slane %v488, 0
    %v491 = vperm.slane %v488, 1
    %v492 = vperm.slane %v488, 2
    %s496 = smul.u32 0, 3
    %s497 = smul.addr %s496, 8
    %s498 = scalar_lea.vmem [#allocation2], %s497
    %v499 = vld [vmem:[%s498] sm:$0xff]
    %v500 = vld [vmem:[%s498 + $0x8] sm:$0xff]
    %v501 = vld [vmem:[%s498 + $0x10] sm:$0xff]
    %502 = vmatpush.msra.mxu0 %v485
    %503 = vmatpush.msra.mxu0 %v482
    %504 = vmatpush.msra.mxu0 %v479
    %505 = vmatpush.msra.mxu0 %v476
    %506 = vmatpush.msra.mxu0 %v473
    %507 = vmatpush.msra.mxu0 %v470
    %508 = vmatpush.msra.mxu0 %v467
    %509 = vmatpush.msra.mxu0 %v464
    %510 = vmatpush.msra.mxu0 %v461
    %511 = vmatpush.msra.mxu0 %v458
    %512 = vmatpush.msra.mxu0 %v455
    %513 = vmatpush.msra.mxu0 %v452
    %514 = vmatpush.msra.mxu0 %v449
    %515 = vmatpush.msra.mxu0 %v446
    %516 = vmatpush.msra.mxu0 %v443
    %517 = vmatpush.msra.mxu0 %v440
    %518 = vmatmul.f32.gmra.mxu0 0.0
    %v519 = vpop.f32.mrf.mxu0
    %v520 = vadd.f32 %v490, %v519
    %521 = vdwg.mxu0
    %522 = vmatpush.msra.mxu0 %v486
    %523 = vmatpush.msra.mxu0 %v483
    %524 = vmatpush.msra.mxu0 %v480
    %525 = vmatpush.msra.mxu0 %v477
    %526 = vmatpush.msra.mxu0 %v474
    %527 = vmatpush.msra.mxu0 %v471
    %528 = vmatpush.msra.mxu0 %v468
    %529 = vmatpush.msra.mxu0 %v465
    %530 = vmatpush.msra.mxu0 %v462
    %531 = vmatpush.msra.mxu0 %v459
    %532 = vmatpush.msra.mxu0 %v456
    %533 = vmatpush.msra.mxu0 %v453
    %534 = vmatpush.msra.mxu0 %v450
    %535 = vmatpush.msra.mxu0 %v447
    %536 = vmatpush.msra.mxu0 %v444
    %537 = vmatpush.msra.mxu0 %v441
    %538 = vmatmul.f32.gmra.mxu0 0.0
    %v539 = vpop.f32.mrf.mxu0
    %v540 = vadd.f32 %v491, %v539
    %541 = vdwg.mxu0
    %542 = vmatpush.msra.mxu0 %v487
    %543 = vmatpush.msra.mxu0 %v484
    %544 = vmatpush.msra.mxu0 %v481
    %545 = vmatpush.msra.mxu0 %v478
    %546 = vmatpush.msra.mxu0 %v475
    %547 = vmatpush.msra.mxu0 %v472
    %548 = vmatpush.msra.mxu0 %v469
    %549 = vmatpush.msra.mxu0 %v466
    %550 = vmatpush.msra.mxu0 %v463
    %551 = vmatpush.msra.mxu0 %v460
    %552 = vmatpush.msra.mxu0 %v457
    %553 = vmatpush.msra.mxu0 %v454
    %554 = vmatpush.msra.mxu0 %v451
    %555 = vmatpush.msra.mxu0 %v448
    %556 = vmatpush.msra.mxu0 %v445
    %557 = vmatpush.msra.mxu0 %v442
    %558 = vmatmul.f32.gmra.mxu0 0.0
    %v559 = vpop.f32.mrf.mxu0
    %v560 = vadd.f32 %v492, %v559
    %561 = vdwg.mxu0
    %v562 = vadd.f32 %v499, %v520
    %v563 = vxor.u32 %v562, 2147483648
    %v564 = vmul.f32 %v563, 1.442695
    %v565 = vpow.pop %v564
    %v566 = vadd.f32 %v565, 1.0
    %v567 = vrcp.pop %v566
    %v568 = vmul.f32 %v566, %v567
    %v569 = vsub.f32 1.0, %v568
    %v570 = vmul.f32 %v567, %v569
    %v571 = vadd.f32 %v567, %v570
    %vm572 = vweird.f32 %v566
    %vm573 = vweird.f32 %v567
    %vm574 = vmor %vm572, %vm573
    %v575 = vsel %vm574, %v567, %v571
    %v576 = vand.u32 2147483647, %v566
    %vm577 = vcmp.eq.f32.partialorder %v576, 8.507059e+37
    %v578 = vand.u32 %v566, 2147483648
    %v579 = vor.u32 1.1754944e-38, %v578
    %v580 = vsel %vm577, %v579, %v575
    %v581 = vmul.f32 1.0, %v580
    %v582 = vadd.f32 %v500, %v540
    %v583 = vxor.u32 %v582, 2147483648
    %v584 = vmul.f32 %v583, 1.442695
    %v585 = vpow.pop %v584
    %v586 = vadd.f32 %v585, 1.0
    %v587 = vrcp.pop %v586
    %v588 = vmul.f32 %v586, %v587
    %v589 = vsub.f32 1.0, %v588
    %v590 = vmul.f32 %v587, %v589
    %v591 = vadd.f32 %v587, %v590
    %vm592 = vweird.f32 %v586
    %vm593 = vweird.f32 %v587
    %vm594 = vmor %vm592, %vm593
    %v595 = vsel %vm594, %v587, %v591
    %v596 = vand.u32 2147483647, %v586
    %vm597 = vcmp.eq.f32.partialorder %v596, 8.507059e+37
    %v598 = vand.u32 %v586, 2147483648
    %v599 = vor.u32 1.1754944e-38, %v598
    %v600 = vsel %vm597, %v599, %v595
    %v601 = vmul.f32 1.0, %v600
    %v602 = vmul.f32 %v581, %v560
    %v603 = vadd.f32 %v501, %v602
    %v604 = vtanh.pop %v603
    %v605 = vsub.f32 1.0, %v601
    %v606 = vmul.f32 %v605, %v604
    %v607 = vmul.f32 %v601, 0.0
    %v608 = vadd.f32 %v606, %v607
    %s609 = smul.u32 1, 3
    %s610 = smul.addr %s609, 8
    %s611 = scalar_lea.vmem [#allocation2], %s610
    %v612 = vld [vmem:[%s611] sm:$0xff]
    %v613 = vld [vmem:[%s611 + $0x8] sm:$0xff]
    %v614 = vld [vmem:[%s611 + $0x10] sm:$0xff]
    %615 = vmatpush.msra.mxu0 %v485
    %616 = vmatpush.msra.mxu0 %v482
    %617 = vmatpush.msra.mxu0 %v479
    %618 = vmatpush.msra.mxu0 %v476
    %619 = vmatpush.msra.mxu0 %v473
    %620 = vmatpush.msra.mxu0 %v470
    %621 = vmatpush.msra.mxu0 %v467
    %622 = vmatpush.msra.mxu0 %v464
    %623 = vmatpush.msra.mxu0 %v461
    %624 = vmatpush.msra.mxu0 %v458
    %625 = vmatpush.msra.mxu0 %v455
    %626 = vmatpush.msra.mxu0 %v452
    %627 = vmatpush.msra.mxu0 %v449
    %628 = vmatpush.msra.mxu0 %v446
    %629 = vmatpush.msra.mxu0 %v443
    %630 = vmatpush.msra.mxu0 %v440
    %631 = vmatmul.f32.gmra.mxu0 %v608
    %v632 = vpop.f32.mrf.mxu0
    %v633 = vadd.f32 %v490, %v632
    %634 = vdwg.mxu0
    %635 = vmatpush.msra.mxu0 %v486
    %636 = vmatpush.msra.mxu0 %v483
    %637 = vmatpush.msra.mxu0 %v480
    %638 = vmatpush.msra.mxu0 %v477
    %639 = vmatpush.msra.mxu0 %v474
    %640 = vmatpush.msra.mxu0 %v471
    %641 = vmatpush.msra.mxu0 %v468
    %642 = vmatpush.msra.mxu0 %v465
    %643 = vmatpush.msra.mxu0 %v462
    %644 = vmatpush.msra.mxu0 %v459
    %645 = vmatpush.msra.mxu0 %v456
    %646 = vmatpush.msra.mxu0 %v453
    %647 = vmatpush.msra.mxu0 %v450
    %648 = vmatpush.msra.mxu0 %v447
    %649 = vmatpush.msra.mxu0 %v444
    %650 = vmatpush.msra.mxu0 %v441
    %651 = vmatmul.f32.gmra.mxu0 %v608
    %v652 = vpop.f32.mrf.mxu0
    %v653 = vadd.f32 %v491, %v652
    %654 = vdwg.mxu0
    %655 = vmatpush.msra.mxu0 %v487
    %656 = vmatpush.msra.mxu0 %v484
    %657 = vmatpush.msra.mxu0 %v481
    %658 = vmatpush.msra.mxu0 %v478
    %659 = vmatpush.msra.mxu0 %v475
    %660 = vmatpush.msra.mxu0 %v472
    %661 = vmatpush.msra.mxu0 %v469
    %662 = vmatpush.msra.mxu0 %v466
    %663 = vmatpush.msra.mxu0 %v463
    %664 = vmatpush.msra.mxu0 %v460
    %665 = vmatpush.msra.mxu0 %v457
    %666 = vmatpush.msra.mxu0 %v454
    %667 = vmatpush.msra.mxu0 %v451
    %668 = vmatpush.msra.mxu0 %v448
    %669 = vmatpush.msra.mxu0 %v445
    %670 = vmatpush.msra.mxu0 %v442
    %671 = vmatmul.f32.gmra.mxu0 %v608
    %v672 = vpop.f32.mrf.mxu0
    %v673 = vadd.f32 %v492, %v672
    %674 = vdwg.mxu0
    %v675 = vadd.f32 %v612, %v633
    %v676 = vxor.u32 %v675, 2147483648
    %v677 = vmul.f32 %v676, 1.442695
    %v678 = vpow.pop %v677
    %v679 = vadd.f32 %v678, 1.0
    %v680 = vrcp.pop %v679
    %v681 = vmul.f32 %v679, %v680
    %v682 = vsub.f32 1.0, %v681
    %v683 = vmul.f32 %v680, %v682
    %v684 = vadd.f32 %v680, %v683
    %vm685 = vweird.f32 %v679
    %vm686 = vweird.f32 %v680
    %vm687 = vmor %vm685, %vm686
    %v688 = vsel %vm687, %v680, %v684
    %v689 = vand.u32 2147483647, %v679
    %vm690 = vcmp.eq.f32.partialorder %v689, 8.507059e+37
    %v691 = vand.u32 %v679, 2147483648
    %v692 = vor.u32 1.1754944e-38, %v691
    %v693 = vsel %vm690, %v692, %v688
    %v694 = vmul.f32 1.0, %v693
    %v695 = vadd.f32 %v613, %v653
    %v696 = vxor.u32 %v695, 2147483648
    %v697 = vmul.f32 %v696, 1.442695
    %v698 = vpow.pop %v697
    %v699 = vadd.f32 %v698, 1.0
    %v700 = vrcp.pop %v699
    %v701 = vmul.f32 %v699, %v700
    %v702 = vsub.f32 1.0, %v701
    %v703 = vmul.f32 %v700, %v702
    %v704 = vadd.f32 %v700, %v703
    %vm705 = vweird.f32 %v699
    %vm706 = vweird.f32 %v700
    %vm707 = vmor %vm705, %vm706
    %v708 = vsel %vm707, %v700, %v704
    %v709 = vand.u32 2147483647, %v699
    %vm710 = vcmp.eq.f32.partialorder %v709, 8.507059e+37
    %v711 = vand.u32 %v699, 2147483648
    %v712 = vor.u32 1.1754944e-38, %v711
    %v713 = vsel %vm710, %v712, %v708
    %v714 = vmul.f32 1.0, %v713
    %v715 = vmul.f32 %v694, %v673
    %v716 = vadd.f32 %v614, %v715
    %v717 = vtanh.pop %v716
    %v718 = vsub.f32 1.0, %v714
    %v719 = vmul.f32 %v718, %v717
    %v720 = vmul.f32 %v714, %v608
    %v721 = vadd.f32 %v719, %v720
    %s722 = smul.u32 2, 3
    %s723 = smul.addr %s722, 8
    %s724 = scalar_lea.vmem [#allocation2], %s723
    %v725 = vld [vmem:[%s724] sm:$0xff]
    %v726 = vld [vmem:[%s724 + $0x8] sm:$0xff]
    %v727 = vld [vmem:[%s724 + $0x10] sm:$0xff]
    %728 = vmatpush.msra.mxu0 %v485
    %729 = vmatpush.msra.mxu0 %v482
    %730 = vmatpush.msra.mxu0 %v479
    %731 = vmatpush.msra.mxu0 %v476
    %732 = vmatpush.msra.mxu0 %v473
    %733 = vmatpush.msra.mxu0 %v470
    %734 = vmatpush.msra.mxu0 %v467
    %735 = vmatpush.msra.mxu0 %v464
    %736 = vmatpush.msra.mxu0 %v461
    %737 = vmatpush.msra.mxu0 %v458
    %738 = vmatpush.msra.mxu0 %v455
    %739 = vmatpush.msra.mxu0 %v452
    %740 = vmatpush.msra.mxu0 %v449
    %741 = vmatpush.msra.mxu0 %v446
    %742 = vmatpush.msra.mxu0 %v443
    %743 = vmatpush.msra.mxu0 %v440
    %744 = vmatmul.f32.gmra.mxu0 %v721
    %v745 = vpop.f32.mrf.mxu0
    %v746 = vadd.f32 %v490, %v745
    %747 = vdwg.mxu0
    %748 = vmatpush.msra.mxu0 %v486
    %749 = vmatpush.msra.mxu0 %v483
    %750 = vmatpush.msra.mxu0 %v480
    %751 = vmatpush.msra.mxu0 %v477
    %752 = vmatpush.msra.mxu0 %v474
    %753 = vmatpush.msra.mxu0 %v471
    %754 = vmatpush.msra.mxu0 %v468
    %755 = vmatpush.msra.mxu0 %v465
    %756 = vmatpush.msra.mxu0 %v462
    %757 = vmatpush.msra.mxu0 %v459
    %758 = vmatpush.msra.mxu0 %v456
    %759 = vmatpush.msra.mxu0 %v453
    %760 = vmatpush.msra.mxu0 %v450
    %761 = vmatpush.msra.mxu0 %v447
    %762 = vmatpush.msra.mxu0 %v444
    %763 = vmatpush.msra.mxu0 %v441
    %764 = vmatmul.f32.gmra.mxu0 %v721
    %v765 = vpop.f32.mrf.mxu0
    %v766 = vadd.f32 %v491, %v765
    %767 = vdwg.mxu0
    %768 = vmatpush.msra.mxu0 %v487
    %769 = vmatpush.msra.mxu0 %v484
    %770 = vmatpush.msra.mxu0 %v481
    %771 = vmatpush.msra.mxu0 %v478
    %772 = vmatpush.msra.mxu0 %v475
    %773 = vmatpush.msra.mxu0 %v472
    %774 = vmatpush.msra.mxu0 %v469
    %775 = vmatpush.msra.mxu0 %v466
    %776 = vmatpush.msra.mxu0 %v463
    %777 = vmatpush.msra.mxu0 %v460
    %778 = vmatpush.msra.mxu0 %v457
    %779 = vmatpush.msra.mxu0 %v454
    %780 = vmatpush.msra.mxu0 %v451
    %781 = vmatpush.msra.mxu0 %v448
    %782 = vmatpush.msra.mxu0 %v445
    %783 = vmatpush.msra.mxu0 %v442
    %784 = vmatmul.f32.gmra.mxu0 %v721
    %v785 = vpop.f32.mrf.mxu0
    %v786 = vadd.f32 %v492, %v785
    %787 = vdwg.mxu0
    %v788 = vadd.f32 %v725, %v746
    %v789 = vxor.u32 %v788, 2147483648
    %v790 = vmul.f32 %v789, 1.442695
    %v791 = vpow.pop %v790
    %v792 = vadd.f32 %v791, 1.0
    %v793 = vrcp.pop %v792
    %v794 = vmul.f32 %v792, %v793
    %v795 = vsub.f32 1.0, %v794
    %v796 = vmul.f32 %v793, %v795
    %v797 = vadd.f32 %v793, %v796
    %vm798 = vweird.f32 %v792
    %vm799 = vweird.f32 %v793
    %vm800 = vmor %vm798, %vm799
    %v801 = vsel %vm800, %v793, %v797
    %v802 = vand.u32 2147483647, %v792
    %vm803 = vcmp.eq.f32.partialorder %v802, 8.507059e+37
    %v804 = vand.u32 %v792, 2147483648
    %v805 = vor.u32 1.1754944e-38, %v804
    %v806 = vsel %vm803, %v805, %v801
    %v807 = vmul.f32 1.0, %v806
    %v808 = vadd.f32 %v726, %v766
    %v809 = vxor.u32 %v808, 2147483648
    %v810 = vmul.f32 %v809, 1.442695
    %v811 = vpow.pop %v810
    %v812 = vadd.f32 %v811, 1.0
    %v813 = vrcp.pop %v812
    %v814 = vmul.f32 %v812, %v813
    %v815 = vsub.f32 1.0, %v814
    %v816 = vmul.f32 %v813, %v815
    %v817 = vadd.f32 %v813, %v816
    %vm818 = vweird.f32 %v812
    %vm819 = vweird.f32 %v813
    %vm820 = vmor %vm818, %vm819
    %v821 = vsel %vm820, %v813, %v817
    %v822 = vand.u32 2147483647, %v812
    %vm823 = vcmp.eq.f32.partialorder %v822, 8.507059e+37
    %v824 = vand.u32 %v812, 2147483648
    %v825 = vor.u32 1.1754944e-38, %v824
    %v826 = vsel %vm823, %v825, %v821
    %v827 = vmul.f32 1.0, %v826
    %v828 = vmul.f32 %v807, %v786
    %v829 = vadd.f32 %v727, %v828
    %v830 = vtanh.pop %v829
    %v831 = vsub.f32 1.0, %v827
    %v832 = vmul.f32 %v831, %v830
    %v833 = vmul.f32 %v827, %v721
    %v834 = vadd.f32 %v832, %v833
    %s835 = smul.u32 3, 3
    %s836 = smul.addr %s835, 8
    %s837 = scalar_lea.vmem [#allocation2], %s836
    %v838 = vld [vmem:[%s837] sm:$0xff]
    %v839 = vld [vmem:[%s837 + $0x8] sm:$0xff]
    %v840 = vld [vmem:[%s837 + $0x10] sm:$0xff]
    %841 = vmatpush.msra.mxu0 %v485
    %842 = vmatpush.msra.mxu0 %v482
    %843 = vmatpush.msra.mxu0 %v479
    %844 = vmatpush.msra.mxu0 %v476
    %845 = vmatpush.msra.mxu0 %v473
    %846 = vmatpush.msra.mxu0 %v470
    %847 = vmatpush.msra.mxu0 %v467
    %848 = vmatpush.msra.mxu0 %v464
    %849 = vmatpush.msra.mxu0 %v461
    %850 = vmatpush.msra.mxu0 %v458
    %851 = vmatpush.msra.mxu0 %v455
    %852 = vmatpush.msra.mxu0 %v452
    %853 = vmatpush.msra.mxu0 %v449
    %854 = vmatpush.msra.mxu0 %v446
    %855 = vmatpush.msra.mxu0 %v443
    %856 = vmatpush.msra.mxu0 %v440
    %857 = vmatmul.f32.gmra.mxu0 %v834
    %v858 = vpop.f32.mrf.mxu0
    %v859 = vadd.f32 %v490, %v858
    %860 = vdwg.mxu0
    %861 = vmatpush.msra.mxu0 %v486
    %862 = vmatpush.msra.mxu0 %v483
    %863 = vmatpush.msra.mxu0 %v480
    %864 = vmatpush.msra.mxu0 %v477
    %865 = vmatpush.msra.mxu0 %v474
    %866 = vmatpush.msra.mxu0 %v471
    %867 = vmatpush.msra.mxu0 %v468
    %868 = vmatpush.msra.mxu0 %v465
    %869 = vmatpush.msra.mxu0 %v462
    %870 = vmatpush.msra.mxu0 %v459
    %871 = vmatpush.msra.mxu0 %v456
    %872 = vmatpush.msra.mxu0 %v453
    %873 = vmatpush.msra.mxu0 %v450
    %874 = vmatpush.msra.mxu0 %v447
    %875 = vmatpush.msra.mxu0 %v444
    %876 = vmatpush.msra.mxu0 %v441
    %877 = vmatmul.f32.gmra.mxu0 %v834
    %v878 = vpop.f32.mrf.mxu0
    %v879 = vadd.f32 %v491, %v878
    %880 = vdwg.mxu0
    %881 = vmatpush.msra.mxu0 %v487
    %882 = vmatpush.msra.mxu0 %v484
    %883 = vmatpush.msra.mxu0 %v481
    %884 = vmatpush.msra.mxu0 %v478
    %885 = vmatpush.msra.mxu0 %v475
    %886 = vmatpush.msra.mxu0 %v472
    %887 = vmatpush.msra.mxu0 %v469
    %888 = vmatpush.msra.mxu0 %v466
    %889 = vmatpush.msra.mxu0 %v463
    %890 = vmatpush.msra.mxu0 %v460
    %891 = vmatpush.msra.mxu0 %v457
    %892 = vmatpush.msra.mxu0 %v454
    %893 = vmatpush.msra.mxu0 %v451
    %894 = vmatpush.msra.mxu0 %v448
    %895 = vmatpush.msra.mxu0 %v445
    %896 = vmatpush.msra.mxu0 %v442
    %897 = vmatmul.f32.gmra.mxu0 %v834
    %v898 = vpop.f32.mrf.mxu0
    %v899 = vadd.f32 %v492, %v898
    %900 = vdwg.mxu0
    %v901 = vadd.f32 %v838, %v859
    %v902 = vxor.u32 %v901, 2147483648
    %v903 = vmul.f32 %v902, 1.442695
    %v904 = vpow.pop %v903
    %v905 = vadd.f32 %v904, 1.0
    %v906 = vrcp.pop %v905
    %v907 = vmul.f32 %v905, %v906
    %v908 = vsub.f32 1.0, %v907
    %v909 = vmul.f32 %v906, %v908
    %v910 = vadd.f32 %v906, %v909
    %vm911 = vweird.f32 %v905
    %vm912 = vweird.f32 %v906
    %vm913 = vmor %vm911, %vm912
    %v914 = vsel %vm913, %v906, %v910
    %v915 = vand.u32 2147483647, %v905
    %vm916 = vcmp.eq.f32.partialorder %v915, 8.507059e+37
    %v917 = vand.u32 %v905, 2147483648
    %v918 = vor.u32 1.1754944e-38, %v917
    %v919 = vsel %vm916, %v918, %v914
    %v920 = vmul.f32 1.0, %v919
    %v921 = vadd.f32 %v839, %v879
    %v922 = vxor.u32 %v921, 2147483648
    %v923 = vmul.f32 %v922, 1.442695
    %v924 = vpow.pop %v923
    %v925 = vadd.f32 %v924, 1.0
    %v926 = vrcp.pop %v925
    %v927 = vmul.f32 %v925, %v926
    %v928 = vsub.f32 1.0, %v927
    %v929 = vmul.f32 %v926, %v928
    %v930 = vadd.f32 %v926, %v929
    %vm931 = vweird.f32 %v925
    %vm932 = vweird.f32 %v926
    %vm933 = vmor %vm931, %vm932
    %v934 = vsel %vm933, %v926, %v930
    %v935 = vand.u32 2147483647, %v925
    %vm936 = vcmp.eq.f32.partialorder %v935, 8.507059e+37
    %v937 = vand.u32 %v925, 2147483648
    %v938 = vor.u32 1.1754944e-38, %v937
    %v939 = vsel %vm936, %v938, %v934
    %v940 = vmul.f32 1.0, %v939
    %v941 = vmul.f32 %v920, %v899
    %v942 = vadd.f32 %v840, %v941
    %v943 = vtanh.pop %v942
    %v944 = vsub.f32 1.0, %v940
    %v945 = vmul.f32 %v944, %v943
    %v946 = vmul.f32 %v940, %v834
    %v947 = vadd.f32 %v945, %v946
    %s948 = smul.u32 4, 3
    %s949 = smul.addr %s948, 8
    %s950 = scalar_lea.vmem [#allocation2], %s949
    %v951 = vld [vmem:[%s950] sm:$0xff]
    %v952 = vld [vmem:[%s950 + $0x8] sm:$0xff]
    %v953 = vld [vmem:[%s950 + $0x10] sm:$0xff]
    %954 = vmatpush.msra.mxu0 %v485
    %955 = vmatpush.msra.mxu0 %v482
    %956 = vmatpush.msra.mxu0 %v479
    %957 = vmatpush.msra.mxu0 %v476
    %958 = vmatpush.msra.mxu0 %v473
    %959 = vmatpush.msra.mxu0 %v470
    %960 = vmatpush.msra.mxu0 %v467
    %961 = vmatpush.msra.mxu0 %v464
    %962 = vmatpush.msra.mxu0 %v461
    %963 = vmatpush.msra.mxu0 %v458
    %964 = vmatpush.msra.mxu0 %v455
    %965 = vmatpush.msra.mxu0 %v452
    %966 = vmatpush.msra.mxu0 %v449
    %967 = vmatpush.msra.mxu0 %v446
    %968 = vmatpush.msra.mxu0 %v443
    %969 = vmatpush.msra.mxu0 %v440
    %970 = vmatmul.f32.gmra.mxu0 %v947
    %v971 = vpop.f32.mrf.mxu0
    %v972 = vadd.f32 %v490, %v971
    %973 = vdwg.mxu0
    %974 = vmatpush.msra.mxu0 %v486
    %975 = vmatpush.msra.mxu0 %v483
    %976 = vmatpush.msra.mxu0 %v480
    %977 = vmatpush.msra.mxu0 %v477
    %978 = vmatpush.msra.mxu0 %v474
    %979 = vmatpush.msra.mxu0 %v471
    %980 = vmatpush.msra.mxu0 %v468
    %981 = vmatpush.msra.mxu0 %v465
    %982 = vmatpush.msra.mxu0 %v462
    %983 = vmatpush.msra.mxu0 %v459
    %984 = vmatpush.msra.mxu0 %v456
    %985 = vmatpush.msra.mxu0 %v453
    %986 = vmatpush.msra.mxu0 %v450
    %987 = vmatpush.msra.mxu0 %v447
    %988 = vmatpush.msra.mxu0 %v444
    %989 = vmatpush.msra.mxu0 %v441
    %990 = vmatmul.f32.gmra.mxu0 %v947
    %v991 = vpop.f32.mrf.mxu0
    %v992 = vadd.f32 %v491, %v991
    %993 = vdwg.mxu0
    %994 = vmatpush.msra.mxu0 %v487
    %995 = vmatpush.msra.mxu0 %v484
    %996 = vmatpush.msra.mxu0 %v481
    %997 = vmatpush.msra.mxu0 %v478
    %998 = vmatpush.msra.mxu0 %v475
    %999 = vmatpush.msra.mxu0 %v472
    %1000 = vmatpush.msra.mxu0 %v469
    %1001 = vmatpush.msra.mxu0 %v466
    %1002 = vmatpush.msra.mxu0 %v463
    %1003 = vmatpush.msra.mxu0 %v460
    %1004 = vmatpush.msra.mxu0 %v457
    %1005 = vmatpush.msra.mxu0 %v454
    %1006 = vmatpush.msra.mxu0 %v451
    %1007 = vmatpush.msra.mxu0 %v448
    %1008 = vmatpush.msra.mxu0 %v445
    %1009 = vmatpush.msra.mxu0 %v442
    %1010 = vmatmul.f32.gmra.mxu0 %v947
    %v1011 = vpop.f32.mrf.mxu0
    %v1012 = vadd.f32 %v492, %v1011
    %1013 = vdwg.mxu0
    %v1014 = vadd.f32 %v951, %v972
    %v1015 = vxor.u32 %v1014, 2147483648
    %v1016 = vmul.f32 %v1015, 1.442695
    %v1017 = vpow.pop %v1016
    %v1018 = vadd.f32 %v1017, 1.0
    %v1019 = vrcp.pop %v1018
    %v1020 = vmul.f32 %v1018, %v1019
    %v1021 = vsub.f32 1.0, %v1020
    %v1022 = vmul.f32 %v1019, %v1021
    %v1023 = vadd.f32 %v1019, %v1022
    %vm1024 = vweird.f32 %v1018
    %vm1025 = vweird.f32 %v1019
    %vm1026 = vmor %vm1024, %vm1025
    %v1027 = vsel %vm1026, %v1019, %v1023
    %v1028 = vand.u32 2147483647, %v1018
    %vm1029 = vcmp.eq.f32.partialorder %v1028, 8.507059e+37
    %v1030 = vand.u32 %v1018, 2147483648
    %v1031 = vor.u32 1.1754944e-38, %v1030
    %v1032 = vsel %vm1029, %v1031, %v1027
    %v1033 = vmul.f32 1.0, %v1032
    %v1034 = vadd.f32 %v952, %v992
    %v1035 = vxor.u32 %v1034, 2147483648
    %v1036 = vmul.f32 %v1035, 1.442695
    %v1037 = vpow.pop %v1036
    %v1038 = vadd.f32 %v1037, 1.0
    %v1039 = vrcp.pop %v1038
    %v1040 = vmul.f32 %v1038, %v1039
    %v1041 = vsub.f32 1.0, %v1040
    %v1042 = vmul.f32 %v1039, %v1041
    %v1043 = vadd.f32 %v1039, %v1042
    %vm1044 = vweird.f32 %v1038
    %vm1045 = vweird.f32 %v1039
    %vm1046 = vmor %vm1044, %vm1045
    %v1047 = vsel %vm1046, %v1039, %v1043
    %v1048 = vand.u32 2147483647, %v1038
    %vm1049 = vcmp.eq.f32.partialorder %v1048, 8.507059e+37
    %v1050 = vand.u32 %v1038, 2147483648
    %v1051 = vor.u32 1.1754944e-38, %v1050
    %v1052 = vsel %vm1049, %v1051, %v1047
    %v1053 = vmul.f32 1.0, %v1052
    %v1054 = vmul.f32 %v1033, %v1012
    %v1055 = vadd.f32 %v953, %v1054
    %v1056 = vtanh.pop %v1055
    %v1057 = vsub.f32 1.0, %v1053
    %v1058 = vmul.f32 %v1057, %v1056
    %v1059 = vmul.f32 %v1053, %v947
    %v1060 = vadd.f32 %v1058, %v1059
    %s1061 = smul.u32 5, 3
    %s1062 = smul.addr %s1061, 8
    %s1063 = scalar_lea.vmem [#allocation2], %s1062
    %v1064 = vld [vmem:[%s1063] sm:$0xff]
    %v1065 = vld [vmem:[%s1063 + $0x8] sm:$0xff]
    %v1066 = vld [vmem:[%s1063 + $0x10] sm:$0xff]
    %1067 = vmatpush.msra.mxu0 %v485
    %1068 = vmatpush.msra.mxu0 %v482
    %1069 = vmatpush.msra.mxu0 %v479
    %1070 = vmatpush.msra.mxu0 %v476
    %1071 = vmatpush.msra.mxu0 %v473
    %1072 = vmatpush.msra.mxu0 %v470
    %1073 = vmatpush.msra.mxu0 %v467
    %1074 = vmatpush.msra.mxu0 %v464
    %1075 = vmatpush.msra.mxu0 %v461
    %1076 = vmatpush.msra.mxu0 %v458
    %1077 = vmatpush.msra.mxu0 %v455
    %1078 = vmatpush.msra.mxu0 %v452
    %1079 = vmatpush.msra.mxu0 %v449
    %1080 = vmatpush.msra.mxu0 %v446
    %1081 = vmatpush.msra.mxu0 %v443
    %1082 = vmatpush.msra.mxu0 %v440
    %1083 = vmatmul.f32.gmra.mxu0 %v1060
    %v1084 = vpop.f32.mrf.mxu0
    %v1085 = vadd.f32 %v490, %v1084
    %1086 = vdwg.mxu0
    %1087 = vmatpush.msra.mxu0 %v486
    %1088 = vmatpush.msra.mxu0 %v483
    %1089 = vmatpush.msra.mxu0 %v480
    %1090 = vmatpush.msra.mxu0 %v477
    %1091 = vmatpush.msra.mxu0 %v474
    %1092 = vmatpush.msra.mxu0 %v471
    %1093 = vmatpush.msra.mxu0 %v468
    %1094 = vmatpush.msra.mxu0 %v465
    %1095 = vmatpush.msra.mxu0 %v462
    %1096 = vmatpush.msra.mxu0 %v459
    %1097 = vmatpush.msra.mxu0 %v456
    %1098 = vmatpush.msra.mxu0 %v453
    %1099 = vmatpush.msra.mxu0 %v450
    %1100 = vmatpush.msra.mxu0 %v447
    %1101 = vmatpush.msra.mxu0 %v444
    %1102 = vmatpush.msra.mxu0 %v441
    %1103 = vmatmul.f32.gmra.mxu0 %v1060
    %v1104 = vpop.f32.mrf.mxu0
    %v1105 = vadd.f32 %v491, %v1104
    %1106 = vdwg.mxu0
    %1107 = vmatpush.msra.mxu0 %v487
    %1108 = vmatpush.msra.mxu0 %v484
    %1109 = vmatpush.msra.mxu0 %v481
    %1110 = vmatpush.msra.mxu0 %v478
    %1111 = vmatpush.msra.mxu0 %v475
    %1112 = vmatpush.msra.mxu0 %v472
    %1113 = vmatpush.msra.mxu0 %v469
    %1114 = vmatpush.msra.mxu0 %v466
    %1115 = vmatpush.msra.mxu0 %v463
    %1116 = vmatpush.msra.mxu0 %v460
    %1117 = vmatpush.msra.mxu0 %v457
    %1118 = vmatpush.msra.mxu0 %v454
    %1119 = vmatpush.msra.mxu0 %v451
    %1120 = vmatpush.msra.mxu0 %v448
    %1121 = vmatpush.msra.mxu0 %v445
    %1122 = vmatpush.msra.mxu0 %v442
    %1123 = vmatmul.f32.gmra.mxu0 %v1060
    %v1124 = vpop.f32.mrf.mxu0
    %v1125 = vadd.f32 %v492, %v1124
    %1126 = vdwg.mxu0
    %v1127 = vadd.f32 %v1064, %v1085
    %v1128 = vxor.u32 %v1127, 2147483648
    %v1129 = vmul.f32 %v1128, 1.442695
    %v1130 = vpow.pop %v1129
    %v1131 = vadd.f32 %v1130, 1.0
    %v1132 = vrcp.pop %v1131
    %v1133 = vmul.f32 %v1131, %v1132
    %v1134 = vsub.f32 1.0, %v1133
    %v1135 = vmul.f32 %v1132, %v1134
    %v1136 = vadd.f32 %v1132, %v1135
    %vm1137 = vweird.f32 %v1131
    %vm1138 = vweird.f32 %v1132
    %vm1139 = vmor %vm1137, %vm1138
    %v1140 = vsel %vm1139, %v1132, %v1136
    %v1141 = vand.u32 2147483647, %v1131
    %vm1142 = vcmp.eq.f32.partialorder %v1141, 8.507059e+37
    %v1143 = vand.u32 %v1131, 2147483648
    %v1144 = vor.u32 1.1754944e-38, %v1143
    %v1145 = vsel %vm1142, %v1144, %v1140
    %v1146 = vmul.f32 1.0, %v1145
    %v1147 = vadd.f32 %v1065, %v1105
    %v1148 = vxor.u32 %v1147, 2147483648
    %v1149 = vmul.f32 %v1148, 1.442695
    %v1150 = vpow.pop %v1149
    %v1151 = vadd.f32 %v1150, 1.0
    %v1152 = vrcp.pop %v1151
    %v1153 = vmul.f32 %v1151, %v1152
    %v1154 = vsub.f32 1.0, %v1153
    %v1155 = vmul.f32 %v1152, %v1154
    %v1156 = vadd.f32 %v1152, %v1155
    %vm1157 = vweird.f32 %v1151
    %vm1158 = vweird.f32 %v1152
    %vm1159 = vmor %vm1157, %vm1158
    %v1160 = vsel %vm1159, %v1152, %v1156
    %v1161 = vand.u32 2147483647, %v1151
    %vm1162 = vcmp.eq.f32.partialorder %v1161, 8.507059e+37
    %v1163 = vand.u32 %v1151, 2147483648
    %v1164 = vor.u32 1.1754944e-38, %v1163
    %v1165 = vsel %vm1162, %v1164, %v1160
    %v1166 = vmul.f32 1.0, %v1165
    %v1167 = vmul.f32 %v1146, %v1125
    %v1168 = vadd.f32 %v1066, %v1167
    %v1169 = vtanh.pop %v1168
    %v1170 = vsub.f32 1.0, %v1166
    %v1171 = vmul.f32 %v1170, %v1169
    %v1172 = vmul.f32 %v1166, %v1060
    %v1173 = vadd.f32 %v1171, %v1172
    %s1174 = smul.u32 6, 3
    %s1175 = smul.addr %s1174, 8
    %s1176 = scalar_lea.vmem [#allocation2], %s1175
    %v1177 = vld [vmem:[%s1176] sm:$0xff]
    %v1178 = vld [vmem:[%s1176 + $0x8] sm:$0xff]
    %v1179 = vld [vmem:[%s1176 + $0x10] sm:$0xff]
    %1180 = vmatpush.msra.mxu0 %v485
    %1181 = vmatpush.msra.mxu0 %v482
    %1182 = vmatpush.msra.mxu0 %v479
    %1183 = vmatpush.msra.mxu0 %v476
    %1184 = vmatpush.msra.mxu0 %v473
    %1185 = vmatpush.msra.mxu0 %v470
    %1186 = vmatpush.msra.mxu0 %v467
    %1187 = vmatpush.msra.mxu0 %v464
    %1188 = vmatpush.msra.mxu0 %v461
    %1189 = vmatpush.msra.mxu0 %v458
    %1190 = vmatpush.msra.mxu0 %v455
    %1191 = vmatpush.msra.mxu0 %v452
    %1192 = vmatpush.msra.mxu0 %v449
    %1193 = vmatpush.msra.mxu0 %v446
    %1194 = vmatpush.msra.mxu0 %v443
    %1195 = vmatpush.msra.mxu0 %v440
    %1196 = vmatmul.f32.gmra.mxu0 %v1173
    %v1197 = vpop.f32.mrf.mxu0
    %v1198 = vadd.f32 %v490, %v1197
    %1199 = vdwg.mxu0
    %1200 = vmatpush.msra.mxu0 %v486
    %1201 = vmatpush.msra.mxu0 %v483
    %1202 = vmatpush.msra.mxu0 %v480
    %1203 = vmatpush.msra.mxu0 %v477
    %1204 = vmatpush.msra.mxu0 %v474
    %1205 = vmatpush.msra.mxu0 %v471
    %1206 = vmatpush.msra.mxu0 %v468
    %1207 = vmatpush.msra.mxu0 %v465
    %1208 = vmatpush.msra.mxu0 %v462
    %1209 = vmatpush.msra.mxu0 %v459
    %1210 = vmatpush.msra.mxu0 %v456
    %1211 = vmatpush.msra.mxu0 %v453
    %1212 = vmatpush.msra.mxu0 %v450
    %1213 = vmatpush.msra.mxu0 %v447
    %1214 = vmatpush.msra.mxu0 %v444
    %1215 = vmatpush.msra.mxu0 %v441
    %1216 = vmatmul.f32.gmra.mxu0 %v1173
    %v1217 = vpop.f32.mrf.mxu0
    %v1218 = vadd.f32 %v491, %v1217
    %1219 = vdwg.mxu0
    %1220 = vmatpush.msra.mxu0 %v487
    %1221 = vmatpush.msra.mxu0 %v484
    %1222 = vmatpush.msra.mxu0 %v481
    %1223 = vmatpush.msra.mxu0 %v478
    %1224 = vmatpush.msra.mxu0 %v475
    %1225 = vmatpush.msra.mxu0 %v472
    %1226 = vmatpush.msra.mxu0 %v469
    %1227 = vmatpush.msra.mxu0 %v466
    %1228 = vmatpush.msra.mxu0 %v463
    %1229 = vmatpush.msra.mxu0 %v460
    %1230 = vmatpush.msra.mxu0 %v457
    %1231 = vmatpush.msra.mxu0 %v454
    %1232 = vmatpush.msra.mxu0 %v451
    %1233 = vmatpush.msra.mxu0 %v448
    %1234 = vmatpush.msra.mxu0 %v445
    %1235 = vmatpush.msra.mxu0 %v442
    %1236 = vmatmul.f32.gmra.mxu0 %v1173
    %v1237 = vpop.f32.mrf.mxu0
    %v1238 = vadd.f32 %v492, %v1237
    %1239 = vdwg.mxu0
    %v1240 = vadd.f32 %v1177, %v1198
    %v1241 = vxor.u32 %v1240, 2147483648
    %v1242 = vmul.f32 %v1241, 1.442695
    %v1243 = vpow.pop %v1242
    %v1244 = vadd.f32 %v1243, 1.0
    %v1245 = vrcp.pop %v1244
    %v1246 = vmul.f32 %v1244, %v1245
    %v1247 = vsub.f32 1.0, %v1246
    %v1248 = vmul.f32 %v1245, %v1247
    %v1249 = vadd.f32 %v1245, %v1248
    %vm1250 = vweird.f32 %v1244
    %vm1251 = vweird.f32 %v1245
    %vm1252 = vmor %vm1250, %vm1251
    %v1253 = vsel %vm1252, %v1245, %v1249
    %v1254 = vand.u32 2147483647, %v1244
    %vm1255 = vcmp.eq.f32.partialorder %v1254, 8.507059e+37
    %v1256 = vand.u32 %v1244, 2147483648
    %v1257 = vor.u32 1.1754944e-38, %v1256
    %v1258 = vsel %vm1255, %v1257, %v1253
    %v1259 = vmul.f32 1.0, %v1258
    %v1260 = vadd.f32 %v1178, %v1218
    %v1261 = vxor.u32 %v1260, 2147483648
    %v1262 = vmul.f32 %v1261, 1.442695
    %v1263 = vpow.pop %v1262
    %v1264 = vadd.f32 %v1263, 1.0
    %v1265 = vrcp.pop %v1264
    %v1266 = vmul.f32 %v1264, %v1265
    %v1267 = vsub.f32 1.0, %v1266
    %v1268 = vmul.f32 %v1265, %v1267
    %v1269 = vadd.f32 %v1265, %v1268
    %vm1270 = vweird.f32 %v1264
    %vm1271 = vweird.f32 %v1265
    %vm1272 = vmor %vm1270, %vm1271
    %v1273 = vsel %vm1272, %v1265, %v1269
    %v1274 = vand.u32 2147483647, %v1264
    %vm1275 = vcmp.eq.f32.partialorder %v1274, 8.507059e+37
    %v1276 = vand.u32 %v1264, 2147483648
    %v1277 = vor.u32 1.1754944e-38, %v1276
    %v1278 = vsel %vm1275, %v1277, %v1273
    %v1279 = vmul.f32 1.0, %v1278
    %v1280 = vmul.f32 %v1259, %v1238
    %v1281 = vadd.f32 %v1179, %v1280
    %v1282 = vtanh.pop %v1281
    %v1283 = vsub.f32 1.0, %v1279
    %v1284 = vmul.f32 %v1283, %v1282
    %v1285 = vmul.f32 %v1279, %v1173
    %v1286 = vadd.f32 %v1284, %v1285
    %s1287 = smul.u32 7, 3
    %s1288 = smul.addr %s1287, 8
    %s1289 = scalar_lea.vmem [#allocation2], %s1288
    %v1290 = vld [vmem:[%s1289] sm:$0xff]
    %v1291 = vld [vmem:[%s1289 + $0x8] sm:$0xff]
    %v1292 = vld [vmem:[%s1289 + $0x10] sm:$0xff]
    %1293 = vmatpush.msra.mxu0 %v485
    %1294 = vmatpush.msra.mxu0 %v482
    %1295 = vmatpush.msra.mxu0 %v479
    %1296 = vmatpush.msra.mxu0 %v476
    %1297 = vmatpush.msra.mxu0 %v473
    %1298 = vmatpush.msra.mxu0 %v470
    %1299 = vmatpush.msra.mxu0 %v467
    %1300 = vmatpush.msra.mxu0 %v464
    %1301 = vmatpush.msra.mxu0 %v461
    %1302 = vmatpush.msra.mxu0 %v458
    %1303 = vmatpush.msra.mxu0 %v455
    %1304 = vmatpush.msra.mxu0 %v452
    %1305 = vmatpush.msra.mxu0 %v449
    %1306 = vmatpush.msra.mxu0 %v446
    %1307 = vmatpush.msra.mxu0 %v443
    %1308 = vmatpush.msra.mxu0 %v440
    %1309 = vmatmul.f32.gmra.mxu0 %v1286
    %v1310 = vpop.f32.mrf.mxu0
    %v1311 = vadd.f32 %v490, %v1310
    %1312 = vdwg.mxu0
    %1313 = vmatpush.msra.mxu0 %v486
    %1314 = vmatpush.msra.mxu0 %v483
    %1315 = vmatpush.msra.mxu0 %v480
    %1316 = vmatpush.msra.mxu0 %v477
    %1317 = vmatpush.msra.mxu0 %v474
    %1318 = vmatpush.msra.mxu0 %v471
    %1319 = vmatpush.msra.mxu0 %v468
    %1320 = vmatpush.msra.mxu0 %v465
    %1321 = vmatpush.msra.mxu0 %v462
    %1322 = vmatpush.msra.mxu0 %v459
    %1323 = vmatpush.msra.mxu0 %v456
    %1324 = vmatpush.msra.mxu0 %v453
    %1325 = vmatpush.msra.mxu0 %v450
    %1326 = vmatpush.msra.mxu0 %v447
    %1327 = vmatpush.msra.mxu0 %v444
    %1328 = vmatpush.msra.mxu0 %v441
    %1329 = vmatmul.f32.gmra.mxu0 %v1286
    %v1330 = vpop.f32.mrf.mxu0
    %v1331 = vadd.f32 %v491, %v1330
    %1332 = vdwg.mxu0
    %1333 = vmatpush.msra.mxu0 %v487
    %1334 = vmatpush.msra.mxu0 %v484
    %1335 = vmatpush.msra.mxu0 %v481
    %1336 = vmatpush.msra.mxu0 %v478
    %1337 = vmatpush.msra.mxu0 %v475
    %1338 = vmatpush.msra.mxu0 %v472
    %1339 = vmatpush.msra.mxu0 %v469
    %1340 = vmatpush.msra.mxu0 %v466
    %1341 = vmatpush.msra.mxu0 %v463
    %1342 = vmatpush.msra.mxu0 %v460
    %1343 = vmatpush.msra.mxu0 %v457
    %1344 = vmatpush.msra.mxu0 %v454
    %1345 = vmatpush.msra.mxu0 %v451
    %1346 = vmatpush.msra.mxu0 %v448
    %1347 = vmatpush.msra.mxu0 %v445
    %1348 = vmatpush.msra.mxu0 %v442
    %1349 = vmatmul.f32.gmra.mxu0 %v1286
    %v1350 = vpop.f32.mrf.mxu0
    %v1351 = vadd.f32 %v492, %v1350
    %1352 = vdwg.mxu0
    %v1353 = vadd.f32 %v1290, %v1311
    %v1354 = vxor.u32 %v1353, 2147483648
    %v1355 = vmul.f32 %v1354, 1.442695
    %v1356 = vpow.pop %v1355
    %v1357 = vadd.f32 %v1356, 1.0
    %v1358 = vrcp.pop %v1357
    %v1359 = vmul.f32 %v1357, %v1358
    %v1360 = vsub.f32 1.0, %v1359
    %v1361 = vmul.f32 %v1358, %v1360
    %v1362 = vadd.f32 %v1358, %v1361
    %vm1363 = vweird.f32 %v1357
    %vm1364 = vweird.f32 %v1358
    %vm1365 = vmor %vm1363, %vm1364
    %v1366 = vsel %vm1365, %v1358, %v1362
    %v1367 = vand.u32 2147483647, %v1357
    %vm1368 = vcmp.eq.f32.partialorder %v1367, 8.507059e+37
    %v1369 = vand.u32 %v1357, 2147483648
    %v1370 = vor.u32 1.1754944e-38, %v1369
    %v1371 = vsel %vm1368, %v1370, %v1366
    %v1372 = vmul.f32 1.0, %v1371
    %v1373 = vadd.f32 %v1291, %v1331
    %v1374 = vxor.u32 %v1373, 2147483648
    %v1375 = vmul.f32 %v1374, 1.442695
    %v1376 = vpow.pop %v1375
    %v1377 = vadd.f32 %v1376, 1.0
    %v1378 = vrcp.pop %v1377
    %v1379 = vmul.f32 %v1377, %v1378
    %v1380 = vsub.f32 1.0, %v1379
    %v1381 = vmul.f32 %v1378, %v1380
    %v1382 = vadd.f32 %v1378, %v1381
    %vm1383 = vweird.f32 %v1377
    %vm1384 = vweird.f32 %v1378
    %vm1385 = vmor %vm1383, %vm1384
    %v1386 = vsel %vm1385, %v1378, %v1382
    %v1387 = vand.u32 2147483647, %v1377
    %vm1388 = vcmp.eq.f32.partialorder %v1387, 8.507059e+37
    %v1389 = vand.u32 %v1377, 2147483648
    %v1390 = vor.u32 1.1754944e-38, %v1389
    %v1391 = vsel %vm1388, %v1390, %v1386
    %v1392 = vmul.f32 1.0, %v1391
    %v1393 = vmul.f32 %v1372, %v1351
    %v1394 = vadd.f32 %v1292, %v1393
    %v1395 = vtanh.pop %v1394
    %v1396 = vsub.f32 1.0, %v1392
    %v1397 = vmul.f32 %v1396, %v1395
    %v1398 = vmul.f32 %v1392, %v1286
    %v1399 = vadd.f32 %v1397, %v1398
    %s1400 = smul.u32 8, 3
    %s1401 = smul.addr %s1400, 8
    %s1402 = scalar_lea.vmem [#allocation2], %s1401
    %v1403 = vld [vmem:[%s1402] sm:$0xff]
    %v1404 = vld [vmem:[%s1402 + $0x8] sm:$0xff]
    %v1405 = vld [vmem:[%s1402 + $0x10] sm:$0xff]
    %1406 = vmatpush.msra.mxu0 %v485
    %1407 = vmatpush.msra.mxu0 %v482
    %1408 = vmatpush.msra.mxu0 %v479
    %1409 = vmatpush.msra.mxu0 %v476
    %1410 = vmatpush.msra.mxu0 %v473
    %1411 = vmatpush.msra.mxu0 %v470
    %1412 = vmatpush.msra.mxu0 %v467
    %1413 = vmatpush.msra.mxu0 %v464
    %1414 = vmatpush.msra.mxu0 %v461
    %1415 = vmatpush.msra.mxu0 %v458
    %1416 = vmatpush.msra.mxu0 %v455
    %1417 = vmatpush.msra.mxu0 %v452
    %1418 = vmatpush.msra.mxu0 %v449
    %1419 = vmatpush.msra.mxu0 %v446
    %1420 = vmatpush.msra.mxu0 %v443
    %1421 = vmatpush.msra.mxu0 %v440
    %1422 = vmatmul.f32.gmra.mxu0 %v1399
    %v1423 = vpop.f32.mrf.mxu0
    %v1424 = vadd.f32 %v490, %v1423
    %1425 = vdwg.mxu0
    %1426 = vmatpush.msra.mxu0 %v486
    %1427 = vmatpush.msra.mxu0 %v483
    %1428 = vmatpush.msra.mxu0 %v480
    %1429 = vmatpush.msra.mxu0 %v477
    %1430 = vmatpush.msra.mxu0 %v474
    %1431 = vmatpush.msra.mxu0 %v471
    %1432 = vmatpush.msra.mxu0 %v468
    %1433 = vmatpush.msra.mxu0 %v465
    %1434 = vmatpush.msra.mxu0 %v462
    %1435 = vmatpush.msra.mxu0 %v459
    %1436 = vmatpush.msra.mxu0 %v456
    %1437 = vmatpush.msra.mxu0 %v453
    %1438 = vmatpush.msra.mxu0 %v450
    %1439 = vmatpush.msra.mxu0 %v447
    %1440 = vmatpush.msra.mxu0 %v444
    %1441 = vmatpush.msra.mxu0 %v441
    %1442 = vmatmul.f32.gmra.mxu0 %v1399
    %v1443 = vpop.f32.mrf.mxu0
    %v1444 = vadd.f32 %v491, %v1443
    %1445 = vdwg.mxu0
    %1446 = vmatpush.msra.mxu0 %v487
    %1447 = vmatpush.msra.mxu0 %v484
    %1448 = vmatpush.msra.mxu0 %v481
    %1449 = vmatpush.msra.mxu0 %v478
    %1450 = vmatpush.msra.mxu0 %v475
    %1451 = vmatpush.msra.mxu0 %v472
    %1452 = vmatpush.msra.mxu0 %v469
    %1453 = vmatpush.msra.mxu0 %v466
    %1454 = vmatpush.msra.mxu0 %v463
    %1455 = vmatpush.msra.mxu0 %v460
    %1456 = vmatpush.msra.mxu0 %v457
    %1457 = vmatpush.msra.mxu0 %v454
    %1458 = vmatpush.msra.mxu0 %v451
    %1459 = vmatpush.msra.mxu0 %v448
    %1460 = vmatpush.msra.mxu0 %v445
    %1461 = vmatpush.msra.mxu0 %v442
    %1462 = vmatmul.f32.gmra.mxu0 %v1399
    %v1463 = vpop.f32.mrf.mxu0
    %v1464 = vadd.f32 %v492, %v1463
    %1465 = vdwg.mxu0
    %v1466 = vadd.f32 %v1403, %v1424
    %v1467 = vxor.u32 %v1466, 2147483648
    %v1468 = vmul.f32 %v1467, 1.442695
    %v1469 = vpow.pop %v1468
    %v1470 = vadd.f32 %v1469, 1.0
    %v1471 = vrcp.pop %v1470
    %v1472 = vmul.f32 %v1470, %v1471
    %v1473 = vsub.f32 1.0, %v1472
    %v1474 = vmul.f32 %v1471, %v1473
    %v1475 = vadd.f32 %v1471, %v1474
    %vm1476 = vweird.f32 %v1470
    %vm1477 = vweird.f32 %v1471
    %vm1478 = vmor %vm1476, %vm1477
    %v1479 = vsel %vm1478, %v1471, %v1475
    %v1480 = vand.u32 2147483647, %v1470
    %vm1481 = vcmp.eq.f32.partialorder %v1480, 8.507059e+37
    %v1482 = vand.u32 %v1470, 2147483648
    %v1483 = vor.u32 1.1754944e-38, %v1482
    %v1484 = vsel %vm1481, %v1483, %v1479
    %v1485 = vmul.f32 1.0, %v1484
    %v1486 = vadd.f32 %v1404, %v1444
    %v1487 = vxor.u32 %v1486, 2147483648
    %v1488 = vmul.f32 %v1487, 1.442695
    %v1489 = vpow.pop %v1488
    %v1490 = vadd.f32 %v1489, 1.0
    %v1491 = vrcp.pop %v1490
    %v1492 = vmul.f32 %v1490, %v1491
    %v1493 = vsub.f32 1.0, %v1492
    %v1494 = vmul.f32 %v1491, %v1493
    %v1495 = vadd.f32 %v1491, %v1494
    %vm1496 = vweird.f32 %v1490
    %vm1497 = vweird.f32 %v1491
    %vm1498 = vmor %vm1496, %vm1497
    %v1499 = vsel %vm1498, %v1491, %v1495
    %v1500 = vand.u32 2147483647, %v1490
    %vm1501 = vcmp.eq.f32.partialorder %v1500, 8.507059e+37
    %v1502 = vand.u32 %v1490, 2147483648
    %v1503 = vor.u32 1.1754944e-38, %v1502
    %v1504 = vsel %vm1501, %v1503, %v1499
    %v1505 = vmul.f32 1.0, %v1504
    %v1506 = vmul.f32 %v1485, %v1464
    %v1507 = vadd.f32 %v1405, %v1506
    %v1508 = vtanh.pop %v1507
    %v1509 = vsub.f32 1.0, %v1505
    %v1510 = vmul.f32 %v1509, %v1508
    %v1511 = vmul.f32 %v1505, %v1399
    %v1512 = vadd.f32 %v1510, %v1511
    %s1513 = smul.u32 9, 3
    %s1514 = smul.addr %s1513, 8
    %s1515 = scalar_lea.vmem [#allocation2], %s1514
    %v1516 = vld [vmem:[%s1515] sm:$0xff]
    %v1517 = vld [vmem:[%s1515 + $0x8] sm:$0xff]
    %v1518 = vld [vmem:[%s1515 + $0x10] sm:$0xff]
    %1519 = vmatpush.msra.mxu0 %v485
    %1520 = vmatpush.msra.mxu0 %v482
    %1521 = vmatpush.msra.mxu0 %v479
    %1522 = vmatpush.msra.mxu0 %v476
    %1523 = vmatpush.msra.mxu0 %v473
    %1524 = vmatpush.msra.mxu0 %v470
    %1525 = vmatpush.msra.mxu0 %v467
    %1526 = vmatpush.msra.mxu0 %v464
    %1527 = vmatpush.msra.mxu0 %v461
    %1528 = vmatpush.msra.mxu0 %v458
    %1529 = vmatpush.msra.mxu0 %v455
    %1530 = vmatpush.msra.mxu0 %v452
    %1531 = vmatpush.msra.mxu0 %v449
    %1532 = vmatpush.msra.mxu0 %v446
    %1533 = vmatpush.msra.mxu0 %v443
    %1534 = vmatpush.msra.mxu0 %v440
    %1535 = vmatmul.f32.gmra.mxu0 %v1512
    %v1536 = vpop.f32.mrf.mxu0
    %v1537 = vadd.f32 %v490, %v1536
    %1538 = vdwg.mxu0
    %1539 = vmatpush.msra.mxu0 %v486
    %1540 = vmatpush.msra.mxu0 %v483
    %1541 = vmatpush.msra.mxu0 %v480
    %1542 = vmatpush.msra.mxu0 %v477
    %1543 = vmatpush.msra.mxu0 %v474
    %1544 = vmatpush.msra.mxu0 %v471
    %1545 = vmatpush.msra.mxu0 %v468
    %1546 = vmatpush.msra.mxu0 %v465
    %1547 = vmatpush.msra.mxu0 %v462
    %1548 = vmatpush.msra.mxu0 %v459
    %1549 = vmatpush.msra.mxu0 %v456
    %1550 = vmatpush.msra.mxu0 %v453
    %1551 = vmatpush.msra.mxu0 %v450
    %1552 = vmatpush.msra.mxu0 %v447
    %1553 = vmatpush.msra.mxu0 %v444
    %1554 = vmatpush.msra.mxu0 %v441
    %1555 = vmatmul.f32.gmra.mxu0 %v1512
    %v1556 = vpop.f32.mrf.mxu0
    %v1557 = vadd.f32 %v491, %v1556
    %1558 = vdwg.mxu0
    %1559 = vmatpush.msra.mxu0 %v487
    %1560 = vmatpush.msra.mxu0 %v484
    %1561 = vmatpush.msra.mxu0 %v481
    %1562 = vmatpush.msra.mxu0 %v478
    %1563 = vmatpush.msra.mxu0 %v475
    %1564 = vmatpush.msra.mxu0 %v472
    %1565 = vmatpush.msra.mxu0 %v469
    %1566 = vmatpush.msra.mxu0 %v466
    %1567 = vmatpush.msra.mxu0 %v463
    %1568 = vmatpush.msra.mxu0 %v460
    %1569 = vmatpush.msra.mxu0 %v457
    %1570 = vmatpush.msra.mxu0 %v454
    %1571 = vmatpush.msra.mxu0 %v451
    %1572 = vmatpush.msra.mxu0 %v448
    %1573 = vmatpush.msra.mxu0 %v445
    %1574 = vmatpush.msra.mxu0 %v442
    %1575 = vmatmul.f32.gmra.mxu0 %v1512
    %v1576 = vpop.f32.mrf.mxu0
    %v1577 = vadd.f32 %v492, %v1576
    %1578 = vdwg.mxu0
    %v1579 = vadd.f32 %v1516, %v1537
    %v1580 = vxor.u32 %v1579, 2147483648
    %v1581 = vmul.f32 %v1580, 1.442695
    %v1582 = vpow.pop %v1581
    %v1583 = vadd.f32 %v1582, 1.0
    %v1584 = vrcp.pop %v1583
    %v1585 = vmul.f32 %v1583, %v1584
    %v1586 = vsub.f32 1.0, %v1585
    %v1587 = vmul.f32 %v1584, %v1586
    %v1588 = vadd.f32 %v1584, %v1587
    %vm1589 = vweird.f32 %v1583
    %vm1590 = vweird.f32 %v1584
    %vm1591 = vmor %vm1589, %vm1590
    %v1592 = vsel %vm1591, %v1584, %v1588
    %v1593 = vand.u32 2147483647, %v1583
    %vm1594 = vcmp.eq.f32.partialorder %v1593, 8.507059e+37
    %v1595 = vand.u32 %v1583, 2147483648
    %v1596 = vor.u32 1.1754944e-38, %v1595
    %v1597 = vsel %vm1594, %v1596, %v1592
    %v1598 = vmul.f32 1.0, %v1597
    %v1599 = vadd.f32 %v1517, %v1557
    %v1600 = vxor.u32 %v1599, 2147483648
    %v1601 = vmul.f32 %v1600, 1.442695
    %v1602 = vpow.pop %v1601
    %v1603 = vadd.f32 %v1602, 1.0
    %v1604 = vrcp.pop %v1603
    %v1605 = vmul.f32 %v1603, %v1604
    %v1606 = vsub.f32 1.0, %v1605
    %v1607 = vmul.f32 %v1604, %v1606
    %v1608 = vadd.f32 %v1604, %v1607
    %vm1609 = vweird.f32 %v1603
    %vm1610 = vweird.f32 %v1604
    %vm1611 = vmor %vm1609, %vm1610
    %v1612 = vsel %vm1611, %v1604, %v1608
    %v1613 = vand.u32 2147483647, %v1603
    %vm1614 = vcmp.eq.f32.partialorder %v1613, 8.507059e+37
    %v1615 = vand.u32 %v1603, 2147483648
    %v1616 = vor.u32 1.1754944e-38, %v1615
    %v1617 = vsel %vm1614, %v1616, %v1612
    %v1618 = vmul.f32 1.0, %v1617
    %v1619 = vmul.f32 %v1598, %v1577
    %v1620 = vadd.f32 %v1518, %v1619
    %v1621 = vtanh.pop %v1620
    %v1622 = vsub.f32 1.0, %v1618
    %v1623 = vmul.f32 %v1622, %v1621
    %v1624 = vmul.f32 %v1618, %v1512
    %v1625 = vadd.f32 %v1623, %v1624
    %s1626 = smul.u32 10, 3
    %s1627 = smul.addr %s1626, 8
    %s1628 = scalar_lea.vmem [#allocation2], %s1627
    %v1629 = vld [vmem:[%s1628] sm:$0xff]
    %v1630 = vld [vmem:[%s1628 + $0x8] sm:$0xff]
    %v1631 = vld [vmem:[%s1628 + $0x10] sm:$0xff]
    %1632 = vmatpush.msra.mxu0 %v485
    %1633 = vmatpush.msra.mxu0 %v482
    %1634 = vmatpush.msra.mxu0 %v479
    %1635 = vmatpush.msra.mxu0 %v476
    %1636 = vmatpush.msra.mxu0 %v473
    %1637 = vmatpush.msra.mxu0 %v470
    %1638 = vmatpush.msra.mxu0 %v467
    %1639 = vmatpush.msra.mxu0 %v464
    %1640 = vmatpush.msra.mxu0 %v461
    %1641 = vmatpush.msra.mxu0 %v458
    %1642 = vmatpush.msra.mxu0 %v455
    %1643 = vmatpush.msra.mxu0 %v452
    %1644 = vmatpush.msra.mxu0 %v449
    %1645 = vmatpush.msra.mxu0 %v446
    %1646 = vmatpush.msra.mxu0 %v443
    %1647 = vmatpush.msra.mxu0 %v440
    %1648 = vmatmul.f32.gmra.mxu0 %v1625
    %v1649 = vpop.f32.mrf.mxu0
    %v1650 = vadd.f32 %v490, %v1649
    %1651 = vdwg.mxu0
    %1652 = vmatpush.msra.mxu0 %v486
    %1653 = vmatpush.msra.mxu0 %v483
    %1654 = vmatpush.msra.mxu0 %v480
    %1655 = vmatpush.msra.mxu0 %v477
    %1656 = vmatpush.msra.mxu0 %v474
    %1657 = vmatpush.msra.mxu0 %v471
    %1658 = vmatpush.msra.mxu0 %v468
    %1659 = vmatpush.msra.mxu0 %v465
    %1660 = vmatpush.msra.mxu0 %v462
    %1661 = vmatpush.msra.mxu0 %v459
    %1662 = vmatpush.msra.mxu0 %v456
    %1663 = vmatpush.msra.mxu0 %v453
    %1664 = vmatpush.msra.mxu0 %v450
    %1665 = vmatpush.msra.mxu0 %v447
    %1666 = vmatpush.msra.mxu0 %v444
    %1667 = vmatpush.msra.mxu0 %v441
    %1668 = vmatmul.f32.gmra.mxu0 %v1625
    %v1669 = vpop.f32.mrf.mxu0
    %v1670 = vadd.f32 %v491, %v1669
    %1671 = vdwg.mxu0
    %1672 = vmatpush.msra.mxu0 %v487
    %1673 = vmatpush.msra.mxu0 %v484
    %1674 = vmatpush.msra.mxu0 %v481
    %1675 = vmatpush.msra.mxu0 %v478
    %1676 = vmatpush.msra.mxu0 %v475
    %1677 = vmatpush.msra.mxu0 %v472
    %1678 = vmatpush.msra.mxu0 %v469
    %1679 = vmatpush.msra.mxu0 %v466
    %1680 = vmatpush.msra.mxu0 %v463
    %1681 = vmatpush.msra.mxu0 %v460
    %1682 = vmatpush.msra.mxu0 %v457
    %1683 = vmatpush.msra.mxu0 %v454
    %1684 = vmatpush.msra.mxu0 %v451
    %1685 = vmatpush.msra.mxu0 %v448
    %1686 = vmatpush.msra.mxu0 %v445
    %1687 = vmatpush.msra.mxu0 %v442
    %1688 = vmatmul.f32.gmra.mxu0 %v1625
    %v1689 = vpop.f32.mrf.mxu0
    %v1690 = vadd.f32 %v492, %v1689
    %1691 = vdwg.mxu0
    %v1692 = vadd.f32 %v1629, %v1650
    %v1693 = vxor.u32 %v1692, 2147483648
    %v1694 = vmul.f32 %v1693, 1.442695
    %v1695 = vpow.pop %v1694
    %v1696 = vadd.f32 %v1695, 1.0
    %v1697 = vrcp.pop %v1696
    %v1698 = vmul.f32 %v1696, %v1697
    %v1699 = vsub.f32 1.0, %v1698
    %v1700 = vmul.f32 %v1697, %v1699
    %v1701 = vadd.f32 %v1697, %v1700
    %vm1702 = vweird.f32 %v1696
    %vm1703 = vweird.f32 %v1697
    %vm1704 = vmor %vm1702, %vm1703
    %v1705 = vsel %vm1704, %v1697, %v1701
    %v1706 = vand.u32 2147483647, %v1696
    %vm1707 = vcmp.eq.f32.partialorder %v1706, 8.507059e+37
    %v1708 = vand.u32 %v1696, 2147483648
    %v1709 = vor.u32 1.1754944e-38, %v1708
    %v1710 = vsel %vm1707, %v1709, %v1705
    %v1711 = vmul.f32 1.0, %v1710
    %v1712 = vadd.f32 %v1630, %v1670
    %v1713 = vxor.u32 %v1712, 2147483648
    %v1714 = vmul.f32 %v1713, 1.442695
    %v1715 = vpow.pop %v1714
    %v1716 = vadd.f32 %v1715, 1.0
    %v1717 = vrcp.pop %v1716
    %v1718 = vmul.f32 %v1716, %v1717
    %v1719 = vsub.f32 1.0, %v1718
    %v1720 = vmul.f32 %v1717, %v1719
    %v1721 = vadd.f32 %v1717, %v1720
    %vm1722 = vweird.f32 %v1716
    %vm1723 = vweird.f32 %v1717
    %vm1724 = vmor %vm1722, %vm1723
    %v1725 = vsel %vm1724, %v1717, %v1721
    %v1726 = vand.u32 2147483647, %v1716
    %vm1727 = vcmp.eq.f32.partialorder %v1726, 8.507059e+37
    %v1728 = vand.u32 %v1716, 2147483648
    %v1729 = vor.u32 1.1754944e-38, %v1728
    %v1730 = vsel %vm1727, %v1729, %v1725
    %v1731 = vmul.f32 1.0, %v1730
    %v1732 = vmul.f32 %v1711, %v1690
    %v1733 = vadd.f32 %v1631, %v1732
    %v1734 = vtanh.pop %v1733
    %v1735 = vsub.f32 1.0, %v1731
    %v1736 = vmul.f32 %v1735, %v1734
    %v1737 = vmul.f32 %v1731, %v1625
    %v1738 = vadd.f32 %v1736, %v1737
    %s1739 = smul.u32 11, 3
    %s1740 = smul.addr %s1739, 8
    %s1741 = scalar_lea.vmem [#allocation2], %s1740
    %v1742 = vld [vmem:[%s1741] sm:$0xff]
    %v1743 = vld [vmem:[%s1741 + $0x8] sm:$0xff]
    %v1744 = vld [vmem:[%s1741 + $0x10] sm:$0xff]
    %1745 = vmatpush.msra.mxu0 %v485
    %1746 = vmatpush.msra.mxu0 %v482
    %1747 = vmatpush.msra.mxu0 %v479
    %1748 = vmatpush.msra.mxu0 %v476
    %1749 = vmatpush.msra.mxu0 %v473
    %1750 = vmatpush.msra.mxu0 %v470
    %1751 = vmatpush.msra.mxu0 %v467
    %1752 = vmatpush.msra.mxu0 %v464
    %1753 = vmatpush.msra.mxu0 %v461
    %1754 = vmatpush.msra.mxu0 %v458
    %1755 = vmatpush.msra.mxu0 %v455
    %1756 = vmatpush.msra.mxu0 %v452
    %1757 = vmatpush.msra.mxu0 %v449
    %1758 = vmatpush.msra.mxu0 %v446
    %1759 = vmatpush.msra.mxu0 %v443
    %1760 = vmatpush.msra.mxu0 %v440
    %1761 = vmatmul.f32.gmra.mxu0 %v1738
    %v1762 = vpop.f32.mrf.mxu0
    %v1763 = vadd.f32 %v490, %v1762
    %1764 = vdwg.mxu0
    %1765 = vmatpush.msra.mxu0 %v486
    %1766 = vmatpush.msra.mxu0 %v483
    %1767 = vmatpush.msra.mxu0 %v480
    %1768 = vmatpush.msra.mxu0 %v477
    %1769 = vmatpush.msra.mxu0 %v474
    %1770 = vmatpush.msra.mxu0 %v471
    %1771 = vmatpush.msra.mxu0 %v468
    %1772 = vmatpush.msra.mxu0 %v465
    %1773 = vmatpush.msra.mxu0 %v462
    %1774 = vmatpush.msra.mxu0 %v459
    %1775 = vmatpush.msra.mxu0 %v456
    %1776 = vmatpush.msra.mxu0 %v453
    %1777 = vmatpush.msra.mxu0 %v450
    %1778 = vmatpush.msra.mxu0 %v447
    %1779 = vmatpush.msra.mxu0 %v444
    %1780 = vmatpush.msra.mxu0 %v441
    %1781 = vmatmul.f32.gmra.mxu0 %v1738
    %v1782 = vpop.f32.mrf.mxu0
    %v1783 = vadd.f32 %v491, %v1782
    %1784 = vdwg.mxu0
    %1785 = vmatpush.msra.mxu0 %v487
    %1786 = vmatpush.msra.mxu0 %v484
    %1787 = vmatpush.msra.mxu0 %v481
    %1788 = vmatpush.msra.mxu0 %v478
    %1789 = vmatpush.msra.mxu0 %v475
    %1790 = vmatpush.msra.mxu0 %v472
    %1791 = vmatpush.msra.mxu0 %v469
    %1792 = vmatpush.msra.mxu0 %v466
    %1793 = vmatpush.msra.mxu0 %v463
    %1794 = vmatpush.msra.mxu0 %v460
    %1795 = vmatpush.msra.mxu0 %v457
    %1796 = vmatpush.msra.mxu0 %v454
    %1797 = vmatpush.msra.mxu0 %v451
    %1798 = vmatpush.msra.mxu0 %v448
    %1799 = vmatpush.msra.mxu0 %v445
    %1800 = vmatpush.msra.mxu0 %v442
    %1801 = vmatmul.f32.gmra.mxu0 %v1738
    %v1802 = vpop.f32.mrf.mxu0
    %v1803 = vadd.f32 %v492, %v1802
    %1804 = vdwg.mxu0
    %v1805 = vadd.f32 %v1742, %v1763
    %v1806 = vxor.u32 %v1805, 2147483648
    %v1807 = vmul.f32 %v1806, 1.442695
    %v1808 = vpow.pop %v1807
    %v1809 = vadd.f32 %v1808, 1.0
    %v1810 = vrcp.pop %v1809
    %v1811 = vmul.f32 %v1809, %v1810
    %v1812 = vsub.f32 1.0, %v1811
    %v1813 = vmul.f32 %v1810, %v1812
    %v1814 = vadd.f32 %v1810, %v1813
    %vm1815 = vweird.f32 %v1809
    %vm1816 = vweird.f32 %v1810
    %vm1817 = vmor %vm1815, %vm1816
    %v1818 = vsel %vm1817, %v1810, %v1814
    %v1819 = vand.u32 2147483647, %v1809
    %vm1820 = vcmp.eq.f32.partialorder %v1819, 8.507059e+37
    %v1821 = vand.u32 %v1809, 2147483648
    %v1822 = vor.u32 1.1754944e-38, %v1821
    %v1823 = vsel %vm1820, %v1822, %v1818
    %v1824 = vmul.f32 1.0, %v1823
    %v1825 = vadd.f32 %v1743, %v1783
    %v1826 = vxor.u32 %v1825, 2147483648
    %v1827 = vmul.f32 %v1826, 1.442695
    %v1828 = vpow.pop %v1827
    %v1829 = vadd.f32 %v1828, 1.0
    %v1830 = vrcp.pop %v1829
    %v1831 = vmul.f32 %v1829, %v1830
    %v1832 = vsub.f32 1.0, %v1831
    %v1833 = vmul.f32 %v1830, %v1832
    %v1834 = vadd.f32 %v1830, %v1833
    %vm1835 = vweird.f32 %v1829
    %vm1836 = vweird.f32 %v1830
    %vm1837 = vmor %vm1835, %vm1836
    %v1838 = vsel %vm1837, %v1830, %v1834
    %v1839 = vand.u32 2147483647, %v1829
    %vm1840 = vcmp.eq.f32.partialorder %v1839, 8.507059e+37
    %v1841 = vand.u32 %v1829, 2147483648
    %v1842 = vor.u32 1.1754944e-38, %v1841
    %v1843 = vsel %vm1840, %v1842, %v1838
    %v1844 = vmul.f32 1.0, %v1843
    %v1845 = vmul.f32 %v1824, %v1803
    %v1846 = vadd.f32 %v1744, %v1845
    %v1847 = vtanh.pop %v1846
    %v1848 = vsub.f32 1.0, %v1844
    %v1849 = vmul.f32 %v1848, %v1847
    %v1850 = vmul.f32 %v1844, %v1738
    %v1851 = vadd.f32 %v1849, %v1850
    %s1852 = smul.u32 12, 3
    %s1853 = smul.addr %s1852, 8
    %s1854 = scalar_lea.vmem [#allocation2], %s1853
    %v1855 = vld [vmem:[%s1854] sm:$0xff]
    %v1856 = vld [vmem:[%s1854 + $0x8] sm:$0xff]
    %v1857 = vld [vmem:[%s1854 + $0x10] sm:$0xff]
    %1858 = vmatpush.msra.mxu0 %v485
    %1859 = vmatpush.msra.mxu0 %v482
    %1860 = vmatpush.msra.mxu0 %v479
    %1861 = vmatpush.msra.mxu0 %v476
    %1862 = vmatpush.msra.mxu0 %v473
    %1863 = vmatpush.msra.mxu0 %v470
    %1864 = vmatpush.msra.mxu0 %v467
    %1865 = vmatpush.msra.mxu0 %v464
    %1866 = vmatpush.msra.mxu0 %v461
    %1867 = vmatpush.msra.mxu0 %v458
    %1868 = vmatpush.msra.mxu0 %v455
    %1869 = vmatpush.msra.mxu0 %v452
    %1870 = vmatpush.msra.mxu0 %v449
    %1871 = vmatpush.msra.mxu0 %v446
    %1872 = vmatpush.msra.mxu0 %v443
    %1873 = vmatpush.msra.mxu0 %v440
    %1874 = vmatmul.f32.gmra.mxu0 %v1851
    %v1875 = vpop.f32.mrf.mxu0
    %v1876 = vadd.f32 %v490, %v1875
    %1877 = vdwg.mxu0
    %1878 = vmatpush.msra.mxu0 %v486
    %1879 = vmatpush.msra.mxu0 %v483
    %1880 = vmatpush.msra.mxu0 %v480
    %1881 = vmatpush.msra.mxu0 %v477
    %1882 = vmatpush.msra.mxu0 %v474
    %1883 = vmatpush.msra.mxu0 %v471
    %1884 = vmatpush.msra.mxu0 %v468
    %1885 = vmatpush.msra.mxu0 %v465
    %1886 = vmatpush.msra.mxu0 %v462
    %1887 = vmatpush.msra.mxu0 %v459
    %1888 = vmatpush.msra.mxu0 %v456
    %1889 = vmatpush.msra.mxu0 %v453
    %1890 = vmatpush.msra.mxu0 %v450
    %1891 = vmatpush.msra.mxu0 %v447
    %1892 = vmatpush.msra.mxu0 %v444
    %1893 = vmatpush.msra.mxu0 %v441
    %1894 = vmatmul.f32.gmra.mxu0 %v1851
    %v1895 = vpop.f32.mrf.mxu0
    %v1896 = vadd.f32 %v491, %v1895
    %1897 = vdwg.mxu0
    %1898 = vmatpush.msra.mxu0 %v487
    %1899 = vmatpush.msra.mxu0 %v484
    %1900 = vmatpush.msra.mxu0 %v481
    %1901 = vmatpush.msra.mxu0 %v478
    %1902 = vmatpush.msra.mxu0 %v475
    %1903 = vmatpush.msra.mxu0 %v472
    %1904 = vmatpush.msra.mxu0 %v469
    %1905 = vmatpush.msra.mxu0 %v466
    %1906 = vmatpush.msra.mxu0 %v463
    %1907 = vmatpush.msra.mxu0 %v460
    %1908 = vmatpush.msra.mxu0 %v457
    %1909 = vmatpush.msra.mxu0 %v454
    %1910 = vmatpush.msra.mxu0 %v451
    %1911 = vmatpush.msra.mxu0 %v448
    %1912 = vmatpush.msra.mxu0 %v445
    %1913 = vmatpush.msra.mxu0 %v442
    %1914 = vmatmul.f32.gmra.mxu0 %v1851
    %v1915 = vpop.f32.mrf.mxu0
    %v1916 = vadd.f32 %v492, %v1915
    %1917 = vdwg.mxu0
    %v1918 = vadd.f32 %v1855, %v1876
    %v1919 = vxor.u32 %v1918, 2147483648
    %v1920 = vmul.f32 %v1919, 1.442695
    %v1921 = vpow.pop %v1920
    %v1922 = vadd.f32 %v1921, 1.0
    %v1923 = vrcp.pop %v1922
    %v1924 = vmul.f32 %v1922, %v1923
    %v1925 = vsub.f32 1.0, %v1924
    %v1926 = vmul.f32 %v1923, %v1925
    %v1927 = vadd.f32 %v1923, %v1926
    %vm1928 = vweird.f32 %v1922
    %vm1929 = vweird.f32 %v1923
    %vm1930 = vmor %vm1928, %vm1929
    %v1931 = vsel %vm1930, %v1923, %v1927
    %v1932 = vand.u32 2147483647, %v1922
    %vm1933 = vcmp.eq.f32.partialorder %v1932, 8.507059e+37
    %v1934 = vand.u32 %v1922, 2147483648
    %v1935 = vor.u32 1.1754944e-38, %v1934
    %v1936 = vsel %vm1933, %v1935, %v1931
    %v1937 = vmul.f32 1.0, %v1936
    %v1938 = vadd.f32 %v1856, %v1896
    %v1939 = vxor.u32 %v1938, 2147483648
    %v1940 = vmul.f32 %v1939, 1.442695
    %v1941 = vpow.pop %v1940
    %v1942 = vadd.f32 %v1941, 1.0
    %v1943 = vrcp.pop %v1942
    %v1944 = vmul.f32 %v1942, %v1943
    %v1945 = vsub.f32 1.0, %v1944
    %v1946 = vmul.f32 %v1943, %v1945
    %v1947 = vadd.f32 %v1943, %v1946
    %vm1948 = vweird.f32 %v1942
    %vm1949 = vweird.f32 %v1943
    %vm1950 = vmor %vm1948, %vm1949
    %v1951 = vsel %vm1950, %v1943, %v1947
    %v1952 = vand.u32 2147483647, %v1942
    %vm1953 = vcmp.eq.f32.partialorder %v1952, 8.507059e+37
    %v1954 = vand.u32 %v1942, 2147483648
    %v1955 = vor.u32 1.1754944e-38, %v1954
    %v1956 = vsel %vm1953, %v1955, %v1951
    %v1957 = vmul.f32 1.0, %v1956
    %v1958 = vmul.f32 %v1937, %v1916
    %v1959 = vadd.f32 %v1857, %v1958
    %v1960 = vtanh.pop %v1959
    %v1961 = vsub.f32 1.0, %v1957
    %v1962 = vmul.f32 %v1961, %v1960
    %v1963 = vmul.f32 %v1957, %v1851
    %v1964 = vadd.f32 %v1962, %v1963
    %s1965 = smul.u32 13, 3
    %s1966 = smul.addr %s1965, 8
    %s1967 = scalar_lea.vmem [#allocation2], %s1966
    %v1968 = vld [vmem:[%s1967] sm:$0xff]
    %v1969 = vld [vmem:[%s1967 + $0x8] sm:$0xff]
    %v1970 = vld [vmem:[%s1967 + $0x10] sm:$0xff]
    %1971 = vmatpush.msra.mxu0 %v485
    %1972 = vmatpush.msra.mxu0 %v482
    %1973 = vmatpush.msra.mxu0 %v479
    %1974 = vmatpush.msra.mxu0 %v476
    %1975 = vmatpush.msra.mxu0 %v473
    %1976 = vmatpush.msra.mxu0 %v470
    %1977 = vmatpush.msra.mxu0 %v467
    %1978 = vmatpush.msra.mxu0 %v464
    %1979 = vmatpush.msra.mxu0 %v461
    %1980 = vmatpush.msra.mxu0 %v458
    %1981 = vmatpush.msra.mxu0 %v455
    %1982 = vmatpush.msra.mxu0 %v452
    %1983 = vmatpush.msra.mxu0 %v449
    %1984 = vmatpush.msra.mxu0 %v446
    %1985 = vmatpush.msra.mxu0 %v443
    %1986 = vmatpush.msra.mxu0 %v440
    %1987 = vmatmul.f32.gmra.mxu0 %v1964
    %v1988 = vpop.f32.mrf.mxu0
    %v1989 = vadd.f32 %v490, %v1988
    %1990 = vdwg.mxu0
    %1991 = vmatpush.msra.mxu0 %v486
    %1992 = vmatpush.msra.mxu0 %v483
    %1993 = vmatpush.msra.mxu0 %v480
    %1994 = vmatpush.msra.mxu0 %v477
    %1995 = vmatpush.msra.mxu0 %v474
    %1996 = vmatpush.msra.mxu0 %v471
    %1997 = vmatpush.msra.mxu0 %v468
    %1998 = vmatpush.msra.mxu0 %v465
    %1999 = vmatpush.msra.mxu0 %v462
    %2000 = vmatpush.msra.mxu0 %v459
    %2001 = vmatpush.msra.mxu0 %v456
    %2002 = vmatpush.msra.mxu0 %v453
    %2003 = vmatpush.msra.mxu0 %v450
    %2004 = vmatpush.msra.mxu0 %v447
    %2005 = vmatpush.msra.mxu0 %v444
    %2006 = vmatpush.msra.mxu0 %v441
    %2007 = vmatmul.f32.gmra.mxu0 %v1964
    %v2008 = vpop.f32.mrf.mxu0
    %v2009 = vadd.f32 %v491, %v2008
    %2010 = vdwg.mxu0
    %2011 = vmatpush.msra.mxu0 %v487
    %2012 = vmatpush.msra.mxu0 %v484
    %2013 = vmatpush.msra.mxu0 %v481
    %2014 = vmatpush.msra.mxu0 %v478
    %2015 = vmatpush.msra.mxu0 %v475
    %2016 = vmatpush.msra.mxu0 %v472
    %2017 = vmatpush.msra.mxu0 %v469
    %2018 = vmatpush.msra.mxu0 %v466
    %2019 = vmatpush.msra.mxu0 %v463
    %2020 = vmatpush.msra.mxu0 %v460
    %2021 = vmatpush.msra.mxu0 %v457
    %2022 = vmatpush.msra.mxu0 %v454
    %2023 = vmatpush.msra.mxu0 %v451
    %2024 = vmatpush.msra.mxu0 %v448
    %2025 = vmatpush.msra.mxu0 %v445
    %2026 = vmatpush.msra.mxu0 %v442
    %2027 = vmatmul.f32.gmra.mxu0 %v1964
    %v2028 = vpop.f32.mrf.mxu0
    %v2029 = vadd.f32 %v492, %v2028
    %2030 = vdwg.mxu0
    %v2031 = vadd.f32 %v1968, %v1989
    %v2032 = vxor.u32 %v2031, 2147483648
    %v2033 = vmul.f32 %v2032, 1.442695
    %v2034 = vpow.pop %v2033
    %v2035 = vadd.f32 %v2034, 1.0
    %v2036 = vrcp.pop %v2035
    %v2037 = vmul.f32 %v2035, %v2036
    %v2038 = vsub.f32 1.0, %v2037
    %v2039 = vmul.f32 %v2036, %v2038
    %v2040 = vadd.f32 %v2036, %v2039
    %vm2041 = vweird.f32 %v2035
    %vm2042 = vweird.f32 %v2036
    %vm2043 = vmor %vm2041, %vm2042
    %v2044 = vsel %vm2043, %v2036, %v2040
    %v2045 = vand.u32 2147483647, %v2035
    %vm2046 = vcmp.eq.f32.partialorder %v2045, 8.507059e+37
    %v2047 = vand.u32 %v2035, 2147483648
    %v2048 = vor.u32 1.1754944e-38, %v2047
    %v2049 = vsel %vm2046, %v2048, %v2044
    %v2050 = vmul.f32 1.0, %v2049
    %v2051 = vadd.f32 %v1969, %v2009
    %v2052 = vxor.u32 %v2051, 2147483648
    %v2053 = vmul.f32 %v2052, 1.442695
    %v2054 = vpow.pop %v2053
    %v2055 = vadd.f32 %v2054, 1.0
    %v2056 = vrcp.pop %v2055
    %v2057 = vmul.f32 %v2055, %v2056
    %v2058 = vsub.f32 1.0, %v2057
    %v2059 = vmul.f32 %v2056, %v2058
    %v2060 = vadd.f32 %v2056, %v2059
    %vm2061 = vweird.f32 %v2055
    %vm2062 = vweird.f32 %v2056
    %vm2063 = vmor %vm2061, %vm2062
    %v2064 = vsel %vm2063, %v2056, %v2060
    %v2065 = vand.u32 2147483647, %v2055
    %vm2066 = vcmp.eq.f32.partialorder %v2065, 8.507059e+37
    %v2067 = vand.u32 %v2055, 2147483648
    %v2068 = vor.u32 1.1754944e-38, %v2067
    %v2069 = vsel %vm2066, %v2068, %v2064
    %v2070 = vmul.f32 1.0, %v2069
    %v2071 = vmul.f32 %v2050, %v2029
    %v2072 = vadd.f32 %v1970, %v2071
    %v2073 = vtanh.pop %v2072
    %v2074 = vsub.f32 1.0, %v2070
    %v2075 = vmul.f32 %v2074, %v2073
    %v2076 = vmul.f32 %v2070, %v1964
    %v2077 = vadd.f32 %v2075, %v2076
    %s2078 = smul.u32 14, 3
    %s2079 = smul.addr %s2078, 8
    %s2080 = scalar_lea.vmem [#allocation2], %s2079
    %v2081 = vld [vmem:[%s2080] sm:$0xff]
    %v2082 = vld [vmem:[%s2080 + $0x8] sm:$0xff]
    %v2083 = vld [vmem:[%s2080 + $0x10] sm:$0xff]
    %2084 = vmatpush.msra.mxu0 %v485
    %2085 = vmatpush.msra.mxu0 %v482
    %2086 = vmatpush.msra.mxu0 %v479
    %2087 = vmatpush.msra.mxu0 %v476
    %2088 = vmatpush.msra.mxu0 %v473
    %2089 = vmatpush.msra.mxu0 %v470
    %2090 = vmatpush.msra.mxu0 %v467
    %2091 = vmatpush.msra.mxu0 %v464
    %2092 = vmatpush.msra.mxu0 %v461
    %2093 = vmatpush.msra.mxu0 %v458
    %2094 = vmatpush.msra.mxu0 %v455
    %2095 = vmatpush.msra.mxu0 %v452
    %2096 = vmatpush.msra.mxu0 %v449
    %2097 = vmatpush.msra.mxu0 %v446
    %2098 = vmatpush.msra.mxu0 %v443
    %2099 = vmatpush.msra.mxu0 %v440
    %2100 = vmatmul.f32.gmra.mxu0 %v2077
    %v2101 = vpop.f32.mrf.mxu0
    %v2102 = vadd.f32 %v490, %v2101
    %2103 = vdwg.mxu0
    %2104 = vmatpush.msra.mxu0 %v486
    %2105 = vmatpush.msra.mxu0 %v483
    %2106 = vmatpush.msra.mxu0 %v480
    %2107 = vmatpush.msra.mxu0 %v477
    %2108 = vmatpush.msra.mxu0 %v474
    %2109 = vmatpush.msra.mxu0 %v471
    %2110 = vmatpush.msra.mxu0 %v468
    %2111 = vmatpush.msra.mxu0 %v465
    %2112 = vmatpush.msra.mxu0 %v462
    %2113 = vmatpush.msra.mxu0 %v459
    %2114 = vmatpush.msra.mxu0 %v456
    %2115 = vmatpush.msra.mxu0 %v453
    %2116 = vmatpush.msra.mxu0 %v450
    %2117 = vmatpush.msra.mxu0 %v447
    %2118 = vmatpush.msra.mxu0 %v444
    %2119 = vmatpush.msra.mxu0 %v441
    %2120 = vmatmul.f32.gmra.mxu0 %v2077
    %v2121 = vpop.f32.mrf.mxu0
    %v2122 = vadd.f32 %v491, %v2121
    %2123 = vdwg.mxu0
    %2124 = vmatpush.msra.mxu0 %v487
    %2125 = vmatpush.msra.mxu0 %v484
    %2126 = vmatpush.msra.mxu0 %v481
    %2127 = vmatpush.msra.mxu0 %v478
    %2128 = vmatpush.msra.mxu0 %v475
    %2129 = vmatpush.msra.mxu0 %v472
    %2130 = vmatpush.msra.mxu0 %v469
    %2131 = vmatpush.msra.mxu0 %v466
    %2132 = vmatpush.msra.mxu0 %v463
    %2133 = vmatpush.msra.mxu0 %v460
    %2134 = vmatpush.msra.mxu0 %v457
    %2135 = vmatpush.msra.mxu0 %v454
    %2136 = vmatpush.msra.mxu0 %v451
    %2137 = vmatpush.msra.mxu0 %v448
    %2138 = vmatpush.msra.mxu0 %v445
    %2139 = vmatpush.msra.mxu0 %v442
    %2140 = vmatmul.f32.gmra.mxu0 %v2077
    %v2141 = vpop.f32.mrf.mxu0
    %v2142 = vadd.f32 %v492, %v2141
    %2143 = vdwg.mxu0
    %v2144 = vadd.f32 %v2081, %v2102
    %v2145 = vxor.u32 %v2144, 2147483648
    %v2146 = vmul.f32 %v2145, 1.442695
    %v2147 = vpow.pop %v2146
    %v2148 = vadd.f32 %v2147, 1.0
    %v2149 = vrcp.pop %v2148
    %v2150 = vmul.f32 %v2148, %v2149
    %v2151 = vsub.f32 1.0, %v2150
    %v2152 = vmul.f32 %v2149, %v2151
    %v2153 = vadd.f32 %v2149, %v2152
    %vm2154 = vweird.f32 %v2148
    %vm2155 = vweird.f32 %v2149
    %vm2156 = vmor %vm2154, %vm2155
    %v2157 = vsel %vm2156, %v2149, %v2153
    %v2158 = vand.u32 2147483647, %v2148
    %vm2159 = vcmp.eq.f32.partialorder %v2158, 8.507059e+37
    %v2160 = vand.u32 %v2148, 2147483648
    %v2161 = vor.u32 1.1754944e-38, %v2160
    %v2162 = vsel %vm2159, %v2161, %v2157
    %v2163 = vmul.f32 1.0, %v2162
    %v2164 = vadd.f32 %v2082, %v2122
    %v2165 = vxor.u32 %v2164, 2147483648
    %v2166 = vmul.f32 %v2165, 1.442695
    %v2167 = vpow.pop %v2166
    %v2168 = vadd.f32 %v2167, 1.0
    %v2169 = vrcp.pop %v2168
    %v2170 = vmul.f32 %v2168, %v2169
    %v2171 = vsub.f32 1.0, %v2170
    %v2172 = vmul.f32 %v2169, %v2171
    %v2173 = vadd.f32 %v2169, %v2172
    %vm2174 = vweird.f32 %v2168
    %vm2175 = vweird.f32 %v2169
    %vm2176 = vmor %vm2174, %vm2175
    %v2177 = vsel %vm2176, %v2169, %v2173
    %v2178 = vand.u32 2147483647, %v2168
    %vm2179 = vcmp.eq.f32.partialorder %v2178, 8.507059e+37
    %v2180 = vand.u32 %v2168, 2147483648
    %v2181 = vor.u32 1.1754944e-38, %v2180
    %v2182 = vsel %vm2179, %v2181, %v2177
    %v2183 = vmul.f32 1.0, %v2182
    %v2184 = vmul.f32 %v2163, %v2142
    %v2185 = vadd.f32 %v2083, %v2184
    %v2186 = vtanh.pop %v2185
    %v2187 = vsub.f32 1.0, %v2183
    %v2188 = vmul.f32 %v2187, %v2186
    %v2189 = vmul.f32 %v2183, %v2077
    %v2190 = vadd.f32 %v2188, %v2189
    %s2191 = smul.u32 15, 3
    %s2192 = smul.addr %s2191, 8
    %s2193 = scalar_lea.vmem [#allocation2], %s2192
    %v2194 = vld [vmem:[%s2193] sm:$0xff]
    %v2195 = vld [vmem:[%s2193 + $0x8] sm:$0xff]
    %v2196 = vld [vmem:[%s2193 + $0x10] sm:$0xff]
    %2197 = vmatpush.msra.mxu0 %v485
    %2198 = vmatpush.msra.mxu0 %v482
    %2199 = vmatpush.msra.mxu0 %v479
    %2200 = vmatpush.msra.mxu0 %v476
    %2201 = vmatpush.msra.mxu0 %v473
    %2202 = vmatpush.msra.mxu0 %v470
    %2203 = vmatpush.msra.mxu0 %v467
    %2204 = vmatpush.msra.mxu0 %v464
    %2205 = vmatpush.msra.mxu0 %v461
    %2206 = vmatpush.msra.mxu0 %v458
    %2207 = vmatpush.msra.mxu0 %v455
    %2208 = vmatpush.msra.mxu0 %v452
    %2209 = vmatpush.msra.mxu0 %v449
    %2210 = vmatpush.msra.mxu0 %v446
    %2211 = vmatpush.msra.mxu0 %v443
    %2212 = vmatpush.msra.mxu0 %v440
    %2213 = vmatmul.f32.gmra.mxu0 %v2190
    %v2214 = vpop.f32.mrf.mxu0
    %v2215 = vadd.f32 %v490, %v2214
    %2216 = vdwg.mxu0
    %2217 = vmatpush.msra.mxu0 %v486
    %2218 = vmatpush.msra.mxu0 %v483
    %2219 = vmatpush.msra.mxu0 %v480
    %2220 = vmatpush.msra.mxu0 %v477
    %2221 = vmatpush.msra.mxu0 %v474
    %2222 = vmatpush.msra.mxu0 %v471
    %2223 = vmatpush.msra.mxu0 %v468
    %2224 = vmatpush.msra.mxu0 %v465
    %2225 = vmatpush.msra.mxu0 %v462
    %2226 = vmatpush.msra.mxu0 %v459
    %2227 = vmatpush.msra.mxu0 %v456
    %2228 = vmatpush.msra.mxu0 %v453
    %2229 = vmatpush.msra.mxu0 %v450
    %2230 = vmatpush.msra.mxu0 %v447
    %2231 = vmatpush.msra.mxu0 %v444
    %2232 = vmatpush.msra.mxu0 %v441
    %2233 = vmatmul.f32.gmra.mxu0 %v2190
    %v2234 = vpop.f32.mrf.mxu0
    %v2235 = vadd.f32 %v491, %v2234
    %2236 = vdwg.mxu0
    %2237 = vmatpush.msra.mxu0 %v487
    %2238 = vmatpush.msra.mxu0 %v484
    %2239 = vmatpush.msra.mxu0 %v481
    %2240 = vmatpush.msra.mxu0 %v478
    %2241 = vmatpush.msra.mxu0 %v475
    %2242 = vmatpush.msra.mxu0 %v472
    %2243 = vmatpush.msra.mxu0 %v469
    %2244 = vmatpush.msra.mxu0 %v466
    %2245 = vmatpush.msra.mxu0 %v463
    %2246 = vmatpush.msra.mxu0 %v460
    %2247 = vmatpush.msra.mxu0 %v457
    %2248 = vmatpush.msra.mxu0 %v454
    %2249 = vmatpush.msra.mxu0 %v451
    %2250 = vmatpush.msra.mxu0 %v448
    %2251 = vmatpush.msra.mxu0 %v445
    %2252 = vmatpush.msra.mxu0 %v442
    %2253 = vmatmul.f32.gmra.mxu0 %v2190
    %v2254 = vpop.f32.mrf.mxu0
    %v2255 = vadd.f32 %v492, %v2254
    %2256 = vdwg.mxu0
    %v2257 = vadd.f32 %v2194, %v2215
    %v2258 = vxor.u32 %v2257, 2147483648
    %v2259 = vmul.f32 %v2258, 1.442695
    %v2260 = vpow.pop %v2259
    %v2261 = vadd.f32 %v2260, 1.0
    %v2262 = vrcp.pop %v2261
    %v2263 = vmul.f32 %v2261, %v2262
    %v2264 = vsub.f32 1.0, %v2263
    %v2265 = vmul.f32 %v2262, %v2264
    %v2266 = vadd.f32 %v2262, %v2265
    %vm2267 = vweird.f32 %v2261
    %vm2268 = vweird.f32 %v2262
    %vm2269 = vmor %vm2267, %vm2268
    %v2270 = vsel %vm2269, %v2262, %v2266
    %v2271 = vand.u32 2147483647, %v2261
    %vm2272 = vcmp.eq.f32.partialorder %v2271, 8.507059e+37
    %v2273 = vand.u32 %v2261, 2147483648
    %v2274 = vor.u32 1.1754944e-38, %v2273
    %v2275 = vsel %vm2272, %v2274, %v2270
    %v2276 = vmul.f32 1.0, %v2275
    %v2277 = vadd.f32 %v2195, %v2235
    %v2278 = vxor.u32 %v2277, 2147483648
    %v2279 = vmul.f32 %v2278, 1.442695
    %v2280 = vpow.pop %v2279
    %v2281 = vadd.f32 %v2280, 1.0
    %v2282 = vrcp.pop %v2281
    %v2283 = vmul.f32 %v2281, %v2282
    %v2284 = vsub.f32 1.0, %v2283
    %v2285 = vmul.f32 %v2282, %v2284
    %v2286 = vadd.f32 %v2282, %v2285
    %vm2287 = vweird.f32 %v2281
    %vm2288 = vweird.f32 %v2282
    %vm2289 = vmor %vm2287, %vm2288
    %v2290 = vsel %vm2289, %v2282, %v2286
    %v2291 = vand.u32 2147483647, %v2281
    %vm2292 = vcmp.eq.f32.partialorder %v2291, 8.507059e+37
    %v2293 = vand.u32 %v2281, 2147483648
    %v2294 = vor.u32 1.1754944e-38, %v2293
    %v2295 = vsel %vm2292, %v2294, %v2290
    %v2296 = vmul.f32 1.0, %v2295
    %v2297 = vmul.f32 %v2276, %v2255
    %v2298 = vadd.f32 %v2196, %v2297
    %v2299 = vtanh.pop %v2298
    %v2300 = vsub.f32 1.0, %v2296
    %v2301 = vmul.f32 %v2300, %v2299
    %v2302 = vmul.f32 %v2296, %v2190
    %v2303 = vadd.f32 %v2301, %v2302
    %v2304 = vld [vmem:[#allocation11] sm:$0xff]
    %v2305 = vld [vmem:[#allocation11 + $0x8] sm:$0xff]
    %v2306 = vld [vmem:[#allocation11 + $0x10] sm:$0xff]
    %v2307 = vld [vmem:[#allocation11 + $0x18] sm:$0xff]
    %v2308 = vld [vmem:[#allocation11 + $0x20] sm:$0xff]
    %v2309 = vld [vmem:[#allocation11 + $0x28] sm:$0xff]
    %v2310 = vld [vmem:[#allocation11 + $0x30] sm:$0xff]
    %v2311 = vld [vmem:[#allocation11 + $0x38] sm:$0xff]
    %v2312 = vld [vmem:[#allocation11 + $0x40] sm:$0xff]
    %v2313 = vld [vmem:[#allocation11 + $0x48] sm:$0xff]
    %v2314 = vld [vmem:[#allocation11 + $0x50] sm:$0xff]
    %v2315 = vld [vmem:[#allocation11 + $0x58] sm:$0xff]
    %v2316 = vld [vmem:[#allocation11 + $0x60] sm:$0xff]
    %v2317 = vld [vmem:[#allocation11 + $0x68] sm:$0xff]
    %v2318 = vld [vmem:[#allocation11 + $0x70] sm:$0xff]
    %v2319 = vld [vmem:[#allocation11 + $0x78] sm:$0xff]
    %v2320 = vld [vmem:[%s6] sm:$0x1]
    %v2322 = vperm.slane %v2320, 0
    %2324 = vmatpush.msra.mxu0 %v2319
    %2325 = vmatpush.msra.mxu0 %v2318
    %2326 = vmatpush.msra.mxu0 %v2317
    %2327 = vmatpush.msra.mxu0 %v2316
    %2328 = vmatpush.msra.mxu0 %v2315
    %2329 = vmatpush.msra.mxu0 %v2314
    %2330 = vmatpush.msra.mxu0 %v2313
    %2331 = vmatpush.msra.mxu0 %v2312
    %2332 = vmatpush.msra.mxu0 %v2311
    %2333 = vmatpush.msra.mxu0 %v2310
    %2334 = vmatpush.msra.mxu0 %v2309
    %2335 = vmatpush.msra.mxu0 %v2308
    %2336 = vmatpush.msra.mxu0 %v2307
    %2337 = vmatpush.msra.mxu0 %v2306
    %2338 = vmatpush.msra.mxu0 %v2305
    %2339 = vmatpush.msra.mxu0 %v2304
    %2340 = vmatmul.f32.gmra.mxu0 %v2303
    %v2341 = vpop.f32.mrf.mxu0
    %v2342 = vadd.f32 %v2322, %v2341
    %2343 = vdwg.mxu0
    %v2344 = vmax.f32 %v2342, 0.0
    %v2345 = vld [vmem:[#allocation12] sm:$0xff]
    %v2346 = vld [vmem:[#allocation12 + $0x8] sm:$0xff]
    %v2347 = vld [vmem:[#allocation12 + $0x10] sm:$0xff]
    %v2348 = vld [vmem:[#allocation12 + $0x18] sm:$0xff]
    %v2349 = vld [vmem:[#allocation12 + $0x20] sm:$0xff]
    %v2350 = vld [vmem:[#allocation12 + $0x28] sm:$0xff]
    %v2351 = vld [vmem:[#allocation12 + $0x30] sm:$0xff]
    %v2352 = vld [vmem:[#allocation12 + $0x38] sm:$0xff]
    %v2353 = vld [vmem:[#allocation12 + $0x40] sm:$0xff]
    %v2354 = vld [vmem:[#allocation12 + $0x48] sm:$0xff]
    %v2355 = vld [vmem:[#allocation12 + $0x50] sm:$0xff]
    %v2356 = vld [vmem:[#allocation12 + $0x58] sm:$0xff]
    %v2357 = vld [vmem:[#allocation12 + $0x60] sm:$0xff]
    %v2358 = vld [vmem:[#allocation12 + $0x68] sm:$0xff]
    %v2359 = vld [vmem:[#allocation12 + $0x70] sm:$0xff]
    %v2360 = vld [vmem:[#allocation12 + $0x78] sm:$0xff]
    %v2361 = vld [vmem:[%s8] sm:$0x1]
    %v2363 = vperm.slane %v2361, 0
    %2365 = vmatpush.msra.mxu0 %v2360
    %2366 = vmatpush.msra.mxu0 %v2359
    %2367 = vmatpush.msra.mxu0 %v2358
    %2368 = vmatpush.msra.mxu0 %v2357
    %2369 = vmatpush.msra.mxu0 %v2356
    %2370 = vmatpush.msra.mxu0 %v2355
    %2371 = vmatpush.msra.mxu0 %v2354
    %2372 = vmatpush.msra.mxu0 %v2353
    %2373 = vmatpush.msra.mxu0 %v2352
    %2374 = vmatpush.msra.mxu0 %v2351
    %2375 = vmatpush.msra.mxu0 %v2350
    %2376 = vmatpush.msra.mxu0 %v2349
    %2377 = vmatpush.msra.mxu0 %v2348
    %2378 = vmatpush.msra.mxu0 %v2347
    %2379 = vmatpush.msra.mxu0 %v2346
    %2380 = vmatpush.msra.mxu0 %v2345
    %2381 = vmatmul.f32.gmra.mxu0 %v2344
    %v2382 = vpop.f32.mrf.mxu0
    %v2383 = vadd.f32 %v2363, %v2382
    %2384 = vdwg.mxu0
    %2385 = vst [vmem:[#allocation14] sm:$0xff] %v2383
    // Predicated region
    $region62: #{tpu_custom_call.1} parent=1 // pred_check
      _
    $region63: #{tpu_custom_call.1} parent=1 // pred_check_branch
      %2387 = sbr.rel (0) target = $region65
    $region64: #{tpu_custom_call.1} parent=1 // pred_region
      %2389 = vsyncadd [#allocation5], 0
      %s2391 = sshll.u32 [#allocation14], 4
      %s2392 = int_to_ptr.vmem [resolvable:$true] %s2391
      %s2393 = sshll.u32 %s9, 4
      %s2394 = int_to_ptr.hbm [resolvable:$true] %s2393
      %2396 = dma.vmem_to_hbm [thread:$0]  %s2392, 128, %s2394, [#allocation5]
    $region65: #{tpu_custom_call.1} parent=1 // pred_fallthru
      _
    // Predicated region
    $region66: #{tpu_custom_call.1} parent=1 // pred_check
      _
    $region67: #{tpu_custom_call.1} parent=1 // pred_check_branch
      %2398 = sbr.rel (0) target = $region69
    $region68: #{tpu_custom_call.1} parent=1 // pred_region
      %2400 = dma.done [#allocation5], 128
    $region69: #{tpu_custom_call.1} parent=1 // pred_fallthru
      _
    %2401 = vsyncpa [#allocation4], 1
    %2402 = vsyncpa [#allocation7], 1
    %2403 = vsyncpa [#allocation10], 1
    %2404 = vsyncpa [#allocation13], 1
    %2405 = vsyncpa [#allocation5], 1

</llo_original>
